<compile_context>
chip_gen: v7x
topology: tpu7x:2x2x1
jax: 0.10.0
libtpu: 0.0.40
codegen_flags: <defaults>
</compile_context>

<pallas_src>
import functools

import jax
import jax.numpy as jnp
from jax.experimental import pallas as pl
from jax.experimental.pallas import tpu as pltpu

_LANE = 128


def _round_up(x, m):
    return (x + m - 1) // m * m


# ----------------------------------------------------------------------------
# Fused multi-layer GRU kernel factory. The whole network (all layers, all
# timesteps) runs in a single pallas_call; everything fits comfortably in VMEM
# (<1 MiB) on v5e / v6e / v7x.
# ----------------------------------------------------------------------------
def _make_fused_gru_kernel(T, B, Hp, num_layers):
    G3 = 3 * Hp
    L = num_layers

    def kernel(*refs):
        # refs = [x (T*B, Din) f32]
        #      + [wih (din_pad,3Hp) bf16, whh (Hp,3Hp) bf16,
        #         bih (1,3Hp) f32,        bhh (1,3Hp) f32 ] * L
        #      + [y (T*B, Hp) f32, hN (L*B, Hp) f32]          (outputs)
        x_ref = refs[0]
        w_refs = [refs[1 + 4 * l: 5 + 4 * l] for l in range(L)]
        y_ref = refs[1 + 4 * L]
        hN_ref = refs[2 + 4 * L]

        # ---- Weights / biases loaded ONCE per layer (bf16 halves staging
        # traffic on the recurrent path); bias broadcasts hoisted out of the
        # recurrence.
        wih = [w_refs[l][0][...] for l in range(L)]
        whh = [w_refs[l][1][...] for l in range(L)]
        bih = [None] + [jnp.broadcast_to(w_refs[l][2][...], (B, G3))
                        for l in range(1, L)]
        bhh = [jnp.broadcast_to(w_refs[l][3][...], (B, G3)) for l in range(L)]

        # ---- Layer-0 input projection hoisted out of the recurrence:
        # ONE (T*B, Din) @ (Din, 3Hp) MXU matmul covers every timestep.
        gi0 = (jnp.dot(x_ref[...].astype(jnp.bfloat16), wih[0],
                       preferred_element_type=jnp.float32)
               + w_refs[0][2][...])

        def cell(gi_t, h, l):
            """One GRU step (PyTorch gate order r, z, n).  r|z sigmoids fused
            into a single EUP issue on the contiguous [0:2Hp] lane block;
            FMA-friendly hidden update."""
            gh = (jnp.dot(h.astype(jnp.bfloat16), whh[l],
                          preferred_element_type=jnp.float32) + bhh[l])
            rz = jax.nn.sigmoid(gi_t[:, :2 * Hp] + gh[:, :2 * Hp])
            r = rz[:, :Hp]
            z = rz[:, Hp:]
            n = jnp.tanh(gi_t[:, 2 * Hp:] + r * gh[:, 2 * Hp:])
            return n + z * (h - n)          # == (1-z)*n + z*h, one fewer VPU op

        h = [jnp.zeros((B, Hp), jnp.float32) for _ in range(L)]
        # Pure SSA values: layer outputs stay vreg-resident (no VMEM scratch,
        # no per-step masked stores).
        layer_out = [[None] * T for _ in range(L)]

        # ---- Wavefront schedule: wave w runs layer l's timestep t = w - l.
        # Layer l step t and layer l-1 step t+1 are independent, so their
        # matmuls / gate math overlap; chain length is T + L - 1 waves.
        for w in range(T + L - 1):
            for l in range(L):
                t = w - l
                if not (0 <= t < T):
                    continue
                if l == 0:
                    gi_t = gi0[t * B:(t + 1) * B, :]
                else:
                    # Small per-wave input projection, off layer l's recurrent
                    # chain (depends only on the previous layer's output).
                    gi_t = (jnp.dot(layer_out[l - 1][t].astype(jnp.bfloat16),
                                    wih[l], preferred_element_type=jnp.float32)
                            + bih[l])
                h[l] = cell(gi_t, h[l], l)
                layer_out[l][t] = h[l]

        # ---- Single lane-dense writebacks (replace T per-step 2-row masked
        # stores per layer and the inter-layer VMEM round trip).
        y_ref[...] = jnp.concatenate(layer_out[L - 1], axis=0)   # (T*B, Hp)
        hN_ref[...] = jnp.concatenate(h, axis=0)                 # (L*B, Hp)

    return kernel


# ----------------------------------------------------------------------------
# Parameter init (PyTorch layout) + one-time prep to kernel layout.
# ----------------------------------------------------------------------------
def init_encoder_params(key, input_size, hidden_size, num_layers):
    H = hidden_size * 30
    k = 1.0 / jnp.sqrt(jnp.float32(H))     # PyTorch default uniform(-k, k)
    params = []
    in_dim = input_size
    for _ in range(num_layers):
        key, k1, k2, k3, k4 = jax.random.split(key, 5)
        params.append(dict(
            w_ih=jax.random.uniform(k1, (3 * H, in_dim), jnp.float32, -k, k),
            w_hh=jax.random.uniform(k2, (3 * H, H), jnp.float32, -k, k),
            b_ih=jax.random.uniform(k3, (3 * H,), jnp.float32, -k, k),
            b_hh=jax.random.uniform(k4, (3 * H,), jnp.float32, -k, k),
        ))
        in_dim = H
    return params


def prepare_encoder_params(params, input_size):
    """One-time conversion (at init, not per forward call): transpose to
    (in, 3H) matmul layout, pad H -> multiple of 128 so every gate block is
    lane-aligned (0/128/256), and cast the weight matrices to bf16 (biases and
    all gate math stay f32).  Padded rows/cols are exactly zero, so padded
    hidden lanes stay exactly zero through the recurrence (also in bf16)."""
    H = params[0]["w_hh"].shape[1]
    Hp = _round_up(H, _LANE)
    layers = []
    for l, p in enumerate(params):
        din = input_size if l == 0 else H
        din_pad = input_size if l == 0 else Hp   # layers >0 consume padded h
        wih = jnp.zeros((din_pad, 3 * Hp), jnp.float32)
        whh = jnp.zeros((Hp, 3 * Hp), jnp.float32)
        bih = jnp.zeros((1, 3 * Hp), jnp.float32)
        bhh = jnp.zeros((1, 3 * Hp), jnp.float32)
        for g in range(3):   # PyTorch gate order: r, z, n
            wih = wih.at[:din, g * Hp:g * Hp + H].set(p["w_ih"][g * H:(g + 1) * H, :].T)
            whh = whh.at[:H, g * Hp:g * Hp + H].set(p["w_hh"][g * H:(g + 1) * H, :].T)
            bih = bih.at[0, g * Hp:g * Hp + H].set(p["b_ih"][g * H:(g + 1) * H])
            bhh = bhh.at[0, g * Hp:g * Hp + H].set(p["b_hh"][g * H:(g + 1) * H])
        layers.append((wih.astype(jnp.bfloat16), whh.astype(jnp.bfloat16),
                       bih, bhh))
    return tuple(layers), H


# ----------------------------------------------------------------------------
# Forward wrapper (EncoderRNN.forward, type='gru').
# ----------------------------------------------------------------------------
@functools.partial(jax.jit, static_argnames=("hidden_real",))
def _encoder_forward_jit(x, layers, *, hidden_real):
    B, T, Din = x.shape
    Hp = layers[0][1].shape[0]          # whh is (Hp, 3Hp)
    num_layers = len(layers)

    # batch_first -> time-major, flattened (T*B, Din) for the hoisted projection.
    x_flat = jnp.transpose(x, (1, 0, 2)).reshape(T * B, Din)
    flat_params = [w for layer in layers for w in layer]

    # Advisory cost estimate so XLA schedules around the custom call.
    flops = 2 * (T * B * Din * 3 * Hp                        # layer-0 projection
                 + num_layers * T * B * Hp * 3 * Hp           # recurrent matmuls
                 + (num_layers - 1) * T * B * Hp * 3 * Hp)    # per-wave projections
    transcendentals = num_layers * T * B * 3 * Hp
    bytes_accessed = (x_flat.size * 4
                      + sum(int(w.size) * w.dtype.itemsize for w in flat_params)
                      + (T * B * Hp + num_layers * B * Hp) * 4)

    vmem = pl.BlockSpec(memory_space=pltpu.MemorySpace.VMEM)
    y_flat, h_flat = pl.pallas_call(
        _make_fused_gru_kernel(T, B, Hp, num_layers),
        out_shape=(
            jax.ShapeDtypeStruct((T * B, Hp), jnp.float32),             # output seq
            jax.ShapeDtypeStruct((num_layers * B, Hp), jnp.float32),    # final hiddens
        ),
        in_specs=[vmem] * (1 + len(flat_params)),
        out_specs=(vmem, vmem),
        cost_estimate=pl.CostEstimate(flops=flops,
                                      transcendentals=transcendentals,
                                      bytes_accessed=bytes_accessed),
    )(x_flat, *flat_params)

    H = hidden_real
    output = jnp.transpose(y_flat.reshape(T, B, Hp)[:, :, :H], (1, 0, 2))   # (B,T,H)
    hidden = h_flat.reshape(num_layers, B, Hp)[:, :, :H]                    # (L,B,H)
    return output, hidden


def encoder_rnn_forward(x, prepped):
    layers, H = prepped
    return _encoder_forward_jit(x, layers, hidden_real=H)


# ----------------------------------------------------------------------------
# Pure-JAX f32 reference (same GRU math, PyTorch layout) for correctness check.
# ----------------------------------------------------------------------------
def _ref_forward(x, params):
    B, T, _ = x.shape
    H = params[0]["w_hh"].shape[1]
    layer_in = x
    hiddens = []
    for p in params:
        h = jnp.zeros((B, H), jnp.float32)
        ys = []
        for t in range(T):
            x_t = layer_in[:, t, :]
            gi = x_t @ p["w_ih"].T + p["b_ih"]
            gh = h @ p["w_hh"].T + p["b_hh"]
            i_r, i_z, i_n = jnp.split(gi, 3, axis=1)
            h_r, h_z, h_n = jnp.split(gh, 3, axis=1)
            r = jax.nn.sigmoid(i_r + h_r)
            z = jax.nn.sigmoid(i_z + h_z)
            n = jnp.tanh(i_n + r * h_n)
            h = (1.0 - z) * n + z * h
            ys.append(h)
        layer_in = jnp.stack(ys, axis=1)
        hiddens.append(h)
    return layer_in, jnp.stack(hiddens, axis=0)


if __name__ == "__main__":
    # Small shapes consistent with the module's forward.
    batch, seq, input_size = 2, 8, 16
    hidden_size, num_layers = 4, 2          # GRU hidden = hidden_size * 30 = 120

    key = jax.random.PRNGKey(0)
    key, kx, kp = jax.random.split(key, 3)
    x = jax.random.normal(kx, (batch, seq, input_size), jnp.float32)
    params = init_encoder_params(kp, input_size, hidden_size, num_layers)
    prepped = prepare_encoder_params(params, input_size)    # one-time weight prep

    output, hidden = encoder_rnn_forward(x, prepped)
    output, hidden = jax.block_until_ready((output, hidden))

    assert output.shape == (batch, seq, hidden_size * 30)
    assert hidden.shape == (num_layers, batch, hidden_size * 30)

    # Kernel uses bf16 weight matrices (f32 accumulation + f32 gate math), so
    # compare against the f32 reference with a correspondingly looser tolerance.
    ref_out, ref_hid = _ref_forward(x, params)
    assert jnp.allclose(output, ref_out, rtol=3e-2, atol=3e-2)
    assert jnp.allclose(hidden, ref_hid, rtol=3e-2, atol=3e-2)

    print("KERNEL_OK")
</pallas_src>

<mosaic_0001>
module attributes {stable_mosaic.version = 11 : i64} {
  func.func @kernel(%arg0: memref<16x16xf32, #tpu.memory_space<vmem>>, %arg1: memref<16x384xbf16, #tpu.memory_space<vmem>>, %arg2: memref<128x384xbf16, #tpu.memory_space<vmem>>, %arg3: memref<1x384xf32, #tpu.memory_space<vmem>>, %arg4: memref<1x384xf32, #tpu.memory_space<vmem>>, %arg5: memref<128x384xbf16, #tpu.memory_space<vmem>>, %arg6: memref<128x384xbf16, #tpu.memory_space<vmem>>, %arg7: memref<1x384xf32, #tpu.memory_space<vmem>>, %arg8: memref<1x384xf32, #tpu.memory_space<vmem>>, %arg9: memref<16x128xf32, #tpu.memory_space<vmem>>, %arg10: memref<4x128xf32, #tpu.memory_space<vmem>>) attributes {dimension_semantics = [], scalar_prefetch = 0 : i64, scratch_operands = 0 : i64, tpu.core_type = #tpu.core_type<tc>} {
    %c0 = arith.constant 0 : index
    %c0_0 = arith.constant 0 : index
    %0 = vector.load %arg1[%c0, %c0_0] : memref<16x384xbf16, #tpu.memory_space<vmem>>, vector<16x384xbf16>
    %c0_1 = arith.constant 0 : index
    %c0_2 = arith.constant 0 : index
    %1 = vector.load %arg5[%c0_1, %c0_2] : memref<128x384xbf16, #tpu.memory_space<vmem>>, vector<128x384xbf16>
    %c0_3 = arith.constant 0 : index
    %c0_4 = arith.constant 0 : index
    %2 = vector.load %arg2[%c0_3, %c0_4] : memref<128x384xbf16, #tpu.memory_space<vmem>>, vector<128x384xbf16>
    %c0_5 = arith.constant 0 : index
    %c0_6 = arith.constant 0 : index
    %3 = vector.load %arg6[%c0_5, %c0_6] : memref<128x384xbf16, #tpu.memory_space<vmem>>, vector<128x384xbf16>
    %c0_7 = arith.constant 0 : index
    %c0_8 = arith.constant 0 : index
    %4 = vector.load %arg7[%c0_7, %c0_8] : memref<1x384xf32, #tpu.memory_space<vmem>>, vector<1x384xf32>
    %5 = vector.shape_cast %4 : vector<1x384xf32> to vector<1x384xf32>
    %6 = vector.broadcast %5 : vector<1x384xf32> to vector<2x384xf32>
    %c0_9 = arith.constant 0 : index
    %c0_10 = arith.constant 0 : index
    %7 = vector.load %arg4[%c0_9, %c0_10] : memref<1x384xf32, #tpu.memory_space<vmem>>, vector<1x384xf32>
    %8 = vector.shape_cast %7 : vector<1x384xf32> to vector<1x384xf32>
    %9 = vector.broadcast %8 : vector<1x384xf32> to vector<2x384xf32>
    %c0_11 = arith.constant 0 : index
    %c0_12 = arith.constant 0 : index
    %10 = vector.load %arg8[%c0_11, %c0_12] : memref<1x384xf32, #tpu.memory_space<vmem>>, vector<1x384xf32>
    %11 = vector.shape_cast %10 : vector<1x384xf32> to vector<1x384xf32>
    %12 = vector.broadcast %11 : vector<1x384xf32> to vector<2x384xf32>
    %c0_13 = arith.constant 0 : index
    %c0_14 = arith.constant 0 : index
    %13 = vector.load %arg0[%c0_13, %c0_14] : memref<16x16xf32, #tpu.memory_space<vmem>>, vector<16x16xf32>
    %14 = arith.truncf %13 : vector<16x16xf32> to vector<16x16xbf16>
    %cst = arith.constant dense<0.000000e+00> : vector<16x384xf32>
    %15 = tpu.matmul %14, %0, %cst {dimension_numbers = #tpu.dot_dimension_numbers<[1], [0], [0], [1], [0, 0, 1, 1], [], []>} : vector<16x16xbf16>, vector<16x384xbf16>, vector<16x384xf32> -> vector<16x384xf32>
    %c0_15 = arith.constant 0 : index
    %c0_16 = arith.constant 0 : index
    %16 = vector.load %arg3[%c0_15, %c0_16] : memref<1x384xf32, #tpu.memory_space<vmem>>, vector<1x384xf32>
    %17 = vector.broadcast %16 : vector<1x384xf32> to vector<16x384xf32>
    %18 = arith.addf %15, %17 : vector<16x384xf32>
    %cst_17 = arith.constant 0.000000e+00 : f32
    %19 = vector.broadcast %cst_17 : f32 to vector<2x128xf32>
    %cst_18 = arith.constant 0.000000e+00 : f32
    %20 = vector.broadcast %cst_18 : f32 to vector<2x128xf32>
    %21 = vector.extract_strided_slice %18 {offsets = [0, 0], sizes = [2, 384], strides = [1, 1]} : vector<16x384xf32> to vector<2x384xf32>
    %22 = arith.truncf %19 : vector<2x128xf32> to vector<2x128xbf16>
    %cst_19 = arith.constant dense<0.000000e+00> : vector<2x384xf32>
    %23 = tpu.matmul %22, %2, %cst_19 {dimension_numbers = #tpu.dot_dimension_numbers<[1], [0], [0], [1], [0, 0, 1, 1], [], []>} : vector<2x128xbf16>, vector<128x384xbf16>, vector<2x384xf32> -> vector<2x384xf32>
    %24 = arith.addf %23, %9 : vector<2x384xf32>
    %25 = vector.extract_strided_slice %21 {offsets = [0, 0], sizes = [2, 256], strides = [1, 1]} : vector<2x384xf32> to vector<2x256xf32>
    %26 = vector.extract_strided_slice %24 {offsets = [0, 0], sizes = [2, 256], strides = [1, 1]} : vector<2x384xf32> to vector<2x256xf32>
    %27 = arith.addf %25, %26 : vector<2x256xf32>
    %28 = arith.negf %27 : vector<2x256xf32>
    %29 = math.exp %28 : vector<2x256xf32>
    %cst_20 = arith.constant 1.000000e+00 : f32
    %30 = vector.broadcast %cst_20 : f32 to vector<2x256xf32>
    %31 = arith.addf %30, %29 : vector<2x256xf32>
    %32 = arith.divf %30, %31 : vector<2x256xf32>
    %33 = vector.extract_strided_slice %32 {offsets = [0, 0], sizes = [2, 128], strides = [1, 1]} : vector<2x256xf32> to vector<2x128xf32>
    %34 = vector.extract_strided_slice %32 {offsets = [0, 128], sizes = [2, 128], strides = [1, 1]} : vector<2x256xf32> to vector<2x128xf32>
    %35 = vector.extract_strided_slice %21 {offsets = [0, 256], sizes = [2, 128], strides = [1, 1]} : vector<2x384xf32> to vector<2x128xf32>
    %36 = vector.extract_strided_slice %24 {offsets = [0, 256], sizes = [2, 128], strides = [1, 1]} : vector<2x384xf32> to vector<2x128xf32>
    %37 = arith.mulf %33, %36 : vector<2x128xf32>
    %38 = arith.addf %35, %37 : vector<2x128xf32>
    %39 = math.tanh %38 : vector<2x128xf32>
    %40 = arith.subf %19, %39 : vector<2x128xf32>
    %41 = arith.mulf %34, %40 : vector<2x128xf32>
    %42 = arith.addf %39, %41 : vector<2x128xf32>
    %43 = vector.extract_strided_slice %18 {offsets = [2, 0], sizes = [2, 384], strides = [1, 1]} : vector<16x384xf32> to vector<2x384xf32>
    %44 = arith.truncf %42 : vector<2x128xf32> to vector<2x128xbf16>
    %cst_21 = arith.constant dense<0.000000e+00> : vector<2x384xf32>
    %45 = tpu.matmul %44, %2, %cst_21 {dimension_numbers = #tpu.dot_dimension_numbers<[1], [0], [0], [1], [0, 0, 1, 1], [], []>} : vector<2x128xbf16>, vector<128x384xbf16>, vector<2x384xf32> -> vector<2x384xf32>
    %46 = arith.addf %45, %9 : vector<2x384xf32>
    %47 = vector.extract_strided_slice %43 {offsets = [0, 0], sizes = [2, 256], strides = [1, 1]} : vector<2x384xf32> to vector<2x256xf32>
    %48 = vector.extract_strided_slice %46 {offsets = [0, 0], sizes = [2, 256], strides = [1, 1]} : vector<2x384xf32> to vector<2x256xf32>
    %49 = arith.addf %47, %48 : vector<2x256xf32>
    %50 = arith.negf %49 : vector<2x256xf32>
    %51 = math.exp %50 : vector<2x256xf32>
    %cst_22 = arith.constant 1.000000e+00 : f32
    %52 = vector.broadcast %cst_22 : f32 to vector<2x256xf32>
    %53 = arith.addf %52, %51 : vector<2x256xf32>
    %54 = arith.divf %52, %53 : vector<2x256xf32>
    %55 = vector.extract_strided_slice %54 {offsets = [0, 0], sizes = [2, 128], strides = [1, 1]} : vector<2x256xf32> to vector<2x128xf32>
    %56 = vector.extract_strided_slice %54 {offsets = [0, 128], sizes = [2, 128], strides = [1, 1]} : vector<2x256xf32> to vector<2x128xf32>
    %57 = vector.extract_strided_slice %43 {offsets = [0, 256], sizes = [2, 128], strides = [1, 1]} : vector<2x384xf32> to vector<2x128xf32>
    %58 = vector.extract_strided_slice %46 {offsets = [0, 256], sizes = [2, 128], strides = [1, 1]} : vector<2x384xf32> to vector<2x128xf32>
    %59 = arith.mulf %55, %58 : vector<2x128xf32>
    %60 = arith.addf %57, %59 : vector<2x128xf32>
    %61 = math.tanh %60 : vector<2x128xf32>
    %62 = arith.subf %42, %61 : vector<2x128xf32>
    %63 = arith.mulf %56, %62 : vector<2x128xf32>
    %64 = arith.addf %61, %63 : vector<2x128xf32>
    %65 = arith.truncf %42 : vector<2x128xf32> to vector<2x128xbf16>
    %cst_23 = arith.constant dense<0.000000e+00> : vector<2x384xf32>
    %66 = tpu.matmul %65, %1, %cst_23 {dimension_numbers = #tpu.dot_dimension_numbers<[1], [0], [0], [1], [0, 0, 1, 1], [], []>} : vector<2x128xbf16>, vector<128x384xbf16>, vector<2x384xf32> -> vector<2x384xf32>
    %67 = arith.addf %66, %6 : vector<2x384xf32>
    %68 = arith.truncf %20 : vector<2x128xf32> to vector<2x128xbf16>
    %cst_24 = arith.constant dense<0.000000e+00> : vector<2x384xf32>
    %69 = tpu.matmul %68, %3, %cst_24 {dimension_numbers = #tpu.dot_dimension_numbers<[1], [0], [0], [1], [0, 0, 1, 1], [], []>} : vector<2x128xbf16>, vector<128x384xbf16>, vector<2x384xf32> -> vector<2x384xf32>
    %70 = arith.addf %69, %12 : vector<2x384xf32>
    %71 = vector.extract_strided_slice %67 {offsets = [0, 0], sizes = [2, 256], strides = [1, 1]} : vector<2x384xf32> to vector<2x256xf32>
    %72 = vector.extract_strided_slice %70 {offsets = [0, 0], sizes = [2, 256], strides = [1, 1]} : vector<2x384xf32> to vector<2x256xf32>
    %73 = arith.addf %71, %72 : vector<2x256xf32>
    %74 = arith.negf %73 : vector<2x256xf32>
    %75 = math.exp %74 : vector<2x256xf32>
    %cst_25 = arith.constant 1.000000e+00 : f32
    %76 = vector.broadcast %cst_25 : f32 to vector<2x256xf32>
    %77 = arith.addf %76, %75 : vector<2x256xf32>
    %78 = arith.divf %76, %77 : vector<2x256xf32>
    %79 = vector.extract_strided_slice %78 {offsets = [0, 0], sizes = [2, 128], strides = [1, 1]} : vector<2x256xf32> to vector<2x128xf32>
    %80 = vector.extract_strided_slice %78 {offsets = [0, 128], sizes = [2, 128], strides = [1, 1]} : vector<2x256xf32> to vector<2x128xf32>
    %81 = vector.extract_strided_slice %67 {offsets = [0, 256], sizes = [2, 128], strides = [1, 1]} : vector<2x384xf32> to vector<2x128xf32>
    %82 = vector.extract_strided_slice %70 {offsets = [0, 256], sizes = [2, 128], strides = [1, 1]} : vector<2x384xf32> to vector<2x128xf32>
    %83 = arith.mulf %79, %82 : vector<2x128xf32>
    %84 = arith.addf %81, %83 : vector<2x128xf32>
    %85 = math.tanh %84 : vector<2x128xf32>
    %86 = arith.subf %20, %85 : vector<2x128xf32>
    %87 = arith.mulf %80, %86 : vector<2x128xf32>
    %88 = arith.addf %85, %87 : vector<2x128xf32>
    %89 = vector.extract_strided_slice %18 {offsets = [4, 0], sizes = [2, 384], strides = [1, 1]} : vector<16x384xf32> to vector<2x384xf32>
    %90 = arith.truncf %64 : vector<2x128xf32> to vector<2x128xbf16>
    %cst_26 = arith.constant dense<0.000000e+00> : vector<2x384xf32>
    %91 = tpu.matmul %90, %2, %cst_26 {dimension_numbers = #tpu.dot_dimension_numbers<[1], [0], [0], [1], [0, 0, 1, 1], [], []>} : vector<2x128xbf16>, vector<128x384xbf16>, vector<2x384xf32> -> vector<2x384xf32>
    %92 = arith.addf %91, %9 : vector<2x384xf32>
    %93 = vector.extract_strided_slice %89 {offsets = [0, 0], sizes = [2, 256], strides = [1, 1]} : vector<2x384xf32> to vector<2x256xf32>
    %94 = vector.extract_strided_slice %92 {offsets = [0, 0], sizes = [2, 256], strides = [1, 1]} : vector<2x384xf32> to vector<2x256xf32>
    %95 = arith.addf %93, %94 : vector<2x256xf32>
    %96 = arith.negf %95 : vector<2x256xf32>
    %97 = math.exp %96 : vector<2x256xf32>
    %cst_27 = arith.constant 1.000000e+00 : f32
    %98 = vector.broadcast %cst_27 : f32 to vector<2x256xf32>
    %99 = arith.addf %98, %97 : vector<2x256xf32>
    %100 = arith.divf %98, %99 : vector<2x256xf32>
    %101 = vector.extract_strided_slice %100 {offsets = [0, 0], sizes = [2, 128], strides = [1, 1]} : vector<2x256xf32> to vector<2x128xf32>
    %102 = vector.extract_strided_slice %100 {offsets = [0, 128], sizes = [2, 128], strides = [1, 1]} : vector<2x256xf32> to vector<2x128xf32>
    %103 = vector.extract_strided_slice %89 {offsets = [0, 256], sizes = [2, 128], strides = [1, 1]} : vector<2x384xf32> to vector<2x128xf32>
    %104 = vector.extract_strided_slice %92 {offsets = [0, 256], sizes = [2, 128], strides = [1, 1]} : vector<2x384xf32> to vector<2x128xf32>
    %105 = arith.mulf %101, %104 : vector<2x128xf32>
    %106 = arith.addf %103, %105 : vector<2x128xf32>
    %107 = math.tanh %106 : vector<2x128xf32>
    %108 = arith.subf %64, %107 : vector<2x128xf32>
    %109 = arith.mulf %102, %108 : vector<2x128xf32>
    %110 = arith.addf %107, %109 : vector<2x128xf32>
    %111 = arith.truncf %64 : vector<2x128xf32> to vector<2x128xbf16>
    %cst_28 = arith.constant dense<0.000000e+00> : vector<2x384xf32>
    %112 = tpu.matmul %111, %1, %cst_28 {dimension_numbers = #tpu.dot_dimension_numbers<[1], [0], [0], [1], [0, 0, 1, 1], [], []>} : vector<2x128xbf16>, vector<128x384xbf16>, vector<2x384xf32> -> vector<2x384xf32>
    %113 = arith.addf %112, %6 : vector<2x384xf32>
    %114 = arith.truncf %88 : vector<2x128xf32> to vector<2x128xbf16>
    %cst_29 = arith.constant dense<0.000000e+00> : vector<2x384xf32>
    %115 = tpu.matmul %114, %3, %cst_29 {dimension_numbers = #tpu.dot_dimension_numbers<[1], [0], [0], [1], [0, 0, 1, 1], [], []>} : vector<2x128xbf16>, vector<128x384xbf16>, vector<2x384xf32> -> vector<2x384xf32>
    %116 = arith.addf %115, %12 : vector<2x384xf32>
    %117 = vector.extract_strided_slice %113 {offsets = [0, 0], sizes = [2, 256], strides = [1, 1]} : vector<2x384xf32> to vector<2x256xf32>
    %118 = vector.extract_strided_slice %116 {offsets = [0, 0], sizes = [2, 256], strides = [1, 1]} : vector<2x384xf32> to vector<2x256xf32>
    %119 = arith.addf %117, %118 : vector<2x256xf32>
    %120 = arith.negf %119 : vector<2x256xf32>
    %121 = math.exp %120 : vector<2x256xf32>
    %cst_30 = arith.constant 1.000000e+00 : f32
    %122 = vector.broadcast %cst_30 : f32 to vector<2x256xf32>
    %123 = arith.addf %122, %121 : vector<2x256xf32>
    %124 = arith.divf %122, %123 : vector<2x256xf32>
    %125 = vector.extract_strided_slice %124 {offsets = [0, 0], sizes = [2, 128], strides = [1, 1]} : vector<2x256xf32> to vector<2x128xf32>
    %126 = vector.extract_strided_slice %124 {offsets = [0, 128], sizes = [2, 128], strides = [1, 1]} : vector<2x256xf32> to vector<2x128xf32>
    %127 = vector.extract_strided_slice %113 {offsets = [0, 256], sizes = [2, 128], strides = [1, 1]} : vector<2x384xf32> to vector<2x128xf32>
    %128 = vector.extract_strided_slice %116 {offsets = [0, 256], sizes = [2, 128], strides = [1, 1]} : vector<2x384xf32> to vector<2x128xf32>
    %129 = arith.mulf %125, %128 : vector<2x128xf32>
    %130 = arith.addf %127, %129 : vector<2x128xf32>
    %131 = math.tanh %130 : vector<2x128xf32>
    %132 = arith.subf %88, %131 : vector<2x128xf32>
    %133 = arith.mulf %126, %132 : vector<2x128xf32>
    %134 = arith.addf %131, %133 : vector<2x128xf32>
    %135 = vector.extract_strided_slice %18 {offsets = [6, 0], sizes = [2, 384], strides = [1, 1]} : vector<16x384xf32> to vector<2x384xf32>
    %136 = arith.truncf %110 : vector<2x128xf32> to vector<2x128xbf16>
    %cst_31 = arith.constant dense<0.000000e+00> : vector<2x384xf32>
    %137 = tpu.matmul %136, %2, %cst_31 {dimension_numbers = #tpu.dot_dimension_numbers<[1], [0], [0], [1], [0, 0, 1, 1], [], []>} : vector<2x128xbf16>, vector<128x384xbf16>, vector<2x384xf32> -> vector<2x384xf32>
    %138 = arith.addf %137, %9 : vector<2x384xf32>
    %139 = vector.extract_strided_slice %135 {offsets = [0, 0], sizes = [2, 256], strides = [1, 1]} : vector<2x384xf32> to vector<2x256xf32>
    %140 = vector.extract_strided_slice %138 {offsets = [0, 0], sizes = [2, 256], strides = [1, 1]} : vector<2x384xf32> to vector<2x256xf32>
    %141 = arith.addf %139, %140 : vector<2x256xf32>
    %142 = arith.negf %141 : vector<2x256xf32>
    %143 = math.exp %142 : vector<2x256xf32>
    %cst_32 = arith.constant 1.000000e+00 : f32
    %144 = vector.broadcast %cst_32 : f32 to vector<2x256xf32>
    %145 = arith.addf %144, %143 : vector<2x256xf32>
    %146 = arith.divf %144, %145 : vector<2x256xf32>
    %147 = vector.extract_strided_slice %146 {offsets = [0, 0], sizes = [2, 128], strides = [1, 1]} : vector<2x256xf32> to vector<2x128xf32>
    %148 = vector.extract_strided_slice %146 {offsets = [0, 128], sizes = [2, 128], strides = [1, 1]} : vector<2x256xf32> to vector<2x128xf32>
    %149 = vector.extract_strided_slice %135 {offsets = [0, 256], sizes = [2, 128], strides = [1, 1]} : vector<2x384xf32> to vector<2x128xf32>
    %150 = vector.extract_strided_slice %138 {offsets = [0, 256], sizes = [2, 128], strides = [1, 1]} : vector<2x384xf32> to vector<2x128xf32>
    %151 = arith.mulf %147, %150 : vector<2x128xf32>
    %152 = arith.addf %149, %151 : vector<2x128xf32>
    %153 = math.tanh %152 : vector<2x128xf32>
    %154 = arith.subf %110, %153 : vector<2x128xf32>
    %155 = arith.mulf %148, %154 : vector<2x128xf32>
    %156 = arith.addf %153, %155 : vector<2x128xf32>
    %157 = arith.truncf %110 : vector<2x128xf32> to vector<2x128xbf16>
    %cst_33 = arith.constant dense<0.000000e+00> : vector<2x384xf32>
    %158 = tpu.matmul %157, %1, %cst_33 {dimension_numbers = #tpu.dot_dimension_numbers<[1], [0], [0], [1], [0, 0, 1, 1], [], []>} : vector<2x128xbf16>, vector<128x384xbf16>, vector<2x384xf32> -> vector<2x384xf32>
    %159 = arith.addf %158, %6 : vector<2x384xf32>
    %160 = arith.truncf %134 : vector<2x128xf32> to vector<2x128xbf16>
    %cst_34 = arith.constant dense<0.000000e+00> : vector<2x384xf32>
    %161 = tpu.matmul %160, %3, %cst_34 {dimension_numbers = #tpu.dot_dimension_numbers<[1], [0], [0], [1], [0, 0, 1, 1], [], []>} : vector<2x128xbf16>, vector<128x384xbf16>, vector<2x384xf32> -> vector<2x384xf32>
    %162 = arith.addf %161, %12 : vector<2x384xf32>
    %163 = vector.extract_strided_slice %159 {offsets = [0, 0], sizes = [2, 256], strides = [1, 1]} : vector<2x384xf32> to vector<2x256xf32>
    %164 = vector.extract_strided_slice %162 {offsets = [0, 0], sizes = [2, 256], strides = [1, 1]} : vector<2x384xf32> to vector<2x256xf32>
    %165 = arith.addf %163, %164 : vector<2x256xf32>
    %166 = arith.negf %165 : vector<2x256xf32>
    %167 = math.exp %166 : vector<2x256xf32>
    %cst_35 = arith.constant 1.000000e+00 : f32
    %168 = vector.broadcast %cst_35 : f32 to vector<2x256xf32>
    %169 = arith.addf %168, %167 : vector<2x256xf32>
    %170 = arith.divf %168, %169 : vector<2x256xf32>
    %171 = vector.extract_strided_slice %170 {offsets = [0, 0], sizes = [2, 128], strides = [1, 1]} : vector<2x256xf32> to vector<2x128xf32>
    %172 = vector.extract_strided_slice %170 {offsets = [0, 128], sizes = [2, 128], strides = [1, 1]} : vector<2x256xf32> to vector<2x128xf32>
    %173 = vector.extract_strided_slice %159 {offsets = [0, 256], sizes = [2, 128], strides = [1, 1]} : vector<2x384xf32> to vector<2x128xf32>
    %174 = vector.extract_strided_slice %162 {offsets = [0, 256], sizes = [2, 128], strides = [1, 1]} : vector<2x384xf32> to vector<2x128xf32>
    %175 = arith.mulf %171, %174 : vector<2x128xf32>
    %176 = arith.addf %173, %175 : vector<2x128xf32>
    %177 = math.tanh %176 : vector<2x128xf32>
    %178 = arith.subf %134, %177 : vector<2x128xf32>
    %179 = arith.mulf %172, %178 : vector<2x128xf32>
    %180 = arith.addf %177, %179 : vector<2x128xf32>
    %181 = vector.extract_strided_slice %18 {offsets = [8, 0], sizes = [2, 384], strides = [1, 1]} : vector<16x384xf32> to vector<2x384xf32>
    %182 = arith.truncf %156 : vector<2x128xf32> to vector<2x128xbf16>
    %cst_36 = arith.constant dense<0.000000e+00> : vector<2x384xf32>
    %183 = tpu.matmul %182, %2, %cst_36 {dimension_numbers = #tpu.dot_dimension_numbers<[1], [0], [0], [1], [0, 0, 1, 1], [], []>} : vector<2x128xbf16>, vector<128x384xbf16>, vector<2x384xf32> -> vector<2x384xf32>
    %184 = arith.addf %183, %9 : vector<2x384xf32>
    %185 = vector.extract_strided_slice %181 {offsets = [0, 0], sizes = [2, 256], strides = [1, 1]} : vector<2x384xf32> to vector<2x256xf32>
    %186 = vector.extract_strided_slice %184 {offsets = [0, 0], sizes = [2, 256], strides = [1, 1]} : vector<2x384xf32> to vector<2x256xf32>
    %187 = arith.addf %185, %186 : vector<2x256xf32>
    %188 = arith.negf %187 : vector<2x256xf32>
    %189 = math.exp %188 : vector<2x256xf32>
    %cst_37 = arith.constant 1.000000e+00 : f32
    %190 = vector.broadcast %cst_37 : f32 to vector<2x256xf32>
    %191 = arith.addf %190, %189 : vector<2x256xf32>
    %192 = arith.divf %190, %191 : vector<2x256xf32>
    %193 = vector.extract_strided_slice %192 {offsets = [0, 0], sizes = [2, 128], strides = [1, 1]} : vector<2x256xf32> to vector<2x128xf32>
    %194 = vector.extract_strided_slice %192 {offsets = [0, 128], sizes = [2, 128], strides = [1, 1]} : vector<2x256xf32> to vector<2x128xf32>
    %195 = vector.extract_strided_slice %181 {offsets = [0, 256], sizes = [2, 128], strides = [1, 1]} : vector<2x384xf32> to vector<2x128xf32>
    %196 = vector.extract_strided_slice %184 {offsets = [0, 256], sizes = [2, 128], strides = [1, 1]} : vector<2x384xf32> to vector<2x128xf32>
    %197 = arith.mulf %193, %196 : vector<2x128xf32>
    %198 = arith.addf %195, %197 : vector<2x128xf32>
    %199 = math.tanh %198 : vector<2x128xf32>
    %200 = arith.subf %156, %199 : vector<2x128xf32>
    %201 = arith.mulf %194, %200 : vector<2x128xf32>
    %202 = arith.addf %199, %201 : vector<2x128xf32>
    %203 = arith.truncf %156 : vector<2x128xf32> to vector<2x128xbf16>
    %cst_38 = arith.constant dense<0.000000e+00> : vector<2x384xf32>
    %204 = tpu.matmul %203, %1, %cst_38 {dimension_numbers = #tpu.dot_dimension_numbers<[1], [0], [0], [1], [0, 0, 1, 1], [], []>} : vector<2x128xbf16>, vector<128x384xbf16>, vector<2x384xf32> -> vector<2x384xf32>
    %205 = arith.addf %204, %6 : vector<2x384xf32>
    %206 = arith.truncf %180 : vector<2x128xf32> to vector<2x128xbf16>
    %cst_39 = arith.constant dense<0.000000e+00> : vector<2x384xf32>
    %207 = tpu.matmul %206, %3, %cst_39 {dimension_numbers = #tpu.dot_dimension_numbers<[1], [0], [0], [1], [0, 0, 1, 1], [], []>} : vector<2x128xbf16>, vector<128x384xbf16>, vector<2x384xf32> -> vector<2x384xf32>
    %208 = arith.addf %207, %12 : vector<2x384xf32>
    %209 = vector.extract_strided_slice %205 {offsets = [0, 0], sizes = [2, 256], strides = [1, 1]} : vector<2x384xf32> to vector<2x256xf32>
    %210 = vector.extract_strided_slice %208 {offsets = [0, 0], sizes = [2, 256], strides = [1, 1]} : vector<2x384xf32> to vector<2x256xf32>
    %211 = arith.addf %209, %210 : vector<2x256xf32>
    %212 = arith.negf %211 : vector<2x256xf32>
    %213 = math.exp %212 : vector<2x256xf32>
    %cst_40 = arith.constant 1.000000e+00 : f32
    %214 = vector.broadcast %cst_40 : f32 to vector<2x256xf32>
    %215 = arith.addf %214, %213 : vector<2x256xf32>
    %216 = arith.divf %214, %215 : vector<2x256xf32>
    %217 = vector.extract_strided_slice %216 {offsets = [0, 0], sizes = [2, 128], strides = [1, 1]} : vector<2x256xf32> to vector<2x128xf32>
    %218 = vector.extract_strided_slice %216 {offsets = [0, 128], sizes = [2, 128], strides = [1, 1]} : vector<2x256xf32> to vector<2x128xf32>
    %219 = vector.extract_strided_slice %205 {offsets = [0, 256], sizes = [2, 128], strides = [1, 1]} : vector<2x384xf32> to vector<2x128xf32>
    %220 = vector.extract_strided_slice %208 {offsets = [0, 256], sizes = [2, 128], strides = [1, 1]} : vector<2x384xf32> to vector<2x128xf32>
    %221 = arith.mulf %217, %220 : vector<2x128xf32>
    %222 = arith.addf %219, %221 : vector<2x128xf32>
    %223 = math.tanh %222 : vector<2x128xf32>
    %224 = arith.subf %180, %223 : vector<2x128xf32>
    %225 = arith.mulf %218, %224 : vector<2x128xf32>
    %226 = arith.addf %223, %225 : vector<2x128xf32>
    %227 = vector.extract_strided_slice %18 {offsets = [10, 0], sizes = [2, 384], strides = [1, 1]} : vector<16x384xf32> to vector<2x384xf32>
    %228 = arith.truncf %202 : vector<2x128xf32> to vector<2x128xbf16>
    %cst_41 = arith.constant dense<0.000000e+00> : vector<2x384xf32>
    %229 = tpu.matmul %228, %2, %cst_41 {dimension_numbers = #tpu.dot_dimension_numbers<[1], [0], [0], [1], [0, 0, 1, 1], [], []>} : vector<2x128xbf16>, vector<128x384xbf16>, vector<2x384xf32> -> vector<2x384xf32>
    %230 = arith.addf %229, %9 : vector<2x384xf32>
    %231 = vector.extract_strided_slice %227 {offsets = [0, 0], sizes = [2, 256], strides = [1, 1]} : vector<2x384xf32> to vector<2x256xf32>
    %232 = vector.extract_strided_slice %230 {offsets = [0, 0], sizes = [2, 256], strides = [1, 1]} : vector<2x384xf32> to vector<2x256xf32>
    %233 = arith.addf %231, %232 : vector<2x256xf32>
    %234 = arith.negf %233 : vector<2x256xf32>
    %235 = math.exp %234 : vector<2x256xf32>
    %cst_42 = arith.constant 1.000000e+00 : f32
    %236 = vector.broadcast %cst_42 : f32 to vector<2x256xf32>
    %237 = arith.addf %236, %235 : vector<2x256xf32>
    %238 = arith.divf %236, %237 : vector<2x256xf32>
    %239 = vector.extract_strided_slice %238 {offsets = [0, 0], sizes = [2, 128], strides = [1, 1]} : vector<2x256xf32> to vector<2x128xf32>
    %240 = vector.extract_strided_slice %238 {offsets = [0, 128], sizes = [2, 128], strides = [1, 1]} : vector<2x256xf32> to vector<2x128xf32>
    %241 = vector.extract_strided_slice %227 {offsets = [0, 256], sizes = [2, 128], strides = [1, 1]} : vector<2x384xf32> to vector<2x128xf32>
    %242 = vector.extract_strided_slice %230 {offsets = [0, 256], sizes = [2, 128], strides = [1, 1]} : vector<2x384xf32> to vector<2x128xf32>
    %243 = arith.mulf %239, %242 : vector<2x128xf32>
    %244 = arith.addf %241, %243 : vector<2x128xf32>
    %245 = math.tanh %244 : vector<2x128xf32>
    %246 = arith.subf %202, %245 : vector<2x128xf32>
    %247 = arith.mulf %240, %246 : vector<2x128xf32>
    %248 = arith.addf %245, %247 : vector<2x128xf32>
    %249 = arith.truncf %202 : vector<2x128xf32> to vector<2x128xbf16>
    %cst_43 = arith.constant dense<0.000000e+00> : vector<2x384xf32>
    %250 = tpu.matmul %249, %1, %cst_43 {dimension_numbers = #tpu.dot_dimension_numbers<[1], [0], [0], [1], [0, 0, 1, 1], [], []>} : vector<2x128xbf16>, vector<128x384xbf16>, vector<2x384xf32> -> vector<2x384xf32>
    %251 = arith.addf %250, %6 : vector<2x384xf32>
    %252 = arith.truncf %226 : vector<2x128xf32> to vector<2x128xbf16>
    %cst_44 = arith.constant dense<0.000000e+00> : vector<2x384xf32>
    %253 = tpu.matmul %252, %3, %cst_44 {dimension_numbers = #tpu.dot_dimension_numbers<[1], [0], [0], [1], [0, 0, 1, 1], [], []>} : vector<2x128xbf16>, vector<128x384xbf16>, vector<2x384xf32> -> vector<2x384xf32>
    %254 = arith.addf %253, %12 : vector<2x384xf32>
    %255 = vector.extract_strided_slice %251 {offsets = [0, 0], sizes = [2, 256], strides = [1, 1]} : vector<2x384xf32> to vector<2x256xf32>
    %256 = vector.extract_strided_slice %254 {offsets = [0, 0], sizes = [2, 256], strides = [1, 1]} : vector<2x384xf32> to vector<2x256xf32>
    %257 = arith.addf %255, %256 : vector<2x256xf32>
    %258 = arith.negf %257 : vector<2x256xf32>
    %259 = math.exp %258 : vector<2x256xf32>
    %cst_45 = arith.constant 1.000000e+00 : f32
    %260 = vector.broadcast %cst_45 : f32 to vector<2x256xf32>
    %261 = arith.addf %260, %259 : vector<2x256xf32>
    %262 = arith.divf %260, %261 : vector<2x256xf32>
    %263 = vector.extract_strided_slice %262 {offsets = [0, 0], sizes = [2, 128], strides = [1, 1]} : vector<2x256xf32> to vector<2x128xf32>
    %264 = vector.extract_strided_slice %262 {offsets = [0, 128], sizes = [2, 128], strides = [1, 1]} : vector<2x256xf32> to vector<2x128xf32>
    %265 = vector.extract_strided_slice %251 {offsets = [0, 256], sizes = [2, 128], strides = [1, 1]} : vector<2x384xf32> to vector<2x128xf32>
    %266 = vector.extract_strided_slice %254 {offsets = [0, 256], sizes = [2, 128], strides = [1, 1]} : vector<2x384xf32> to vector<2x128xf32>
    %267 = arith.mulf %263, %266 : vector<2x128xf32>
    %268 = arith.addf %265, %267 : vector<2x128xf32>
    %269 = math.tanh %268 : vector<2x128xf32>
    %270 = arith.subf %226, %269 : vector<2x128xf32>
    %271 = arith.mulf %264, %270 : vector<2x128xf32>
    %272 = arith.addf %269, %271 : vector<2x128xf32>
    %273 = vector.extract_strided_slice %18 {offsets = [12, 0], sizes = [2, 384], strides = [1, 1]} : vector<16x384xf32> to vector<2x384xf32>
    %274 = arith.truncf %248 : vector<2x128xf32> to vector<2x128xbf16>
    %cst_46 = arith.constant dense<0.000000e+00> : vector<2x384xf32>
    %275 = tpu.matmul %274, %2, %cst_46 {dimension_numbers = #tpu.dot_dimension_numbers<[1], [0], [0], [1], [0, 0, 1, 1], [], []>} : vector<2x128xbf16>, vector<128x384xbf16>, vector<2x384xf32> -> vector<2x384xf32>
    %276 = arith.addf %275, %9 : vector<2x384xf32>
    %277 = vector.extract_strided_slice %273 {offsets = [0, 0], sizes = [2, 256], strides = [1, 1]} : vector<2x384xf32> to vector<2x256xf32>
    %278 = vector.extract_strided_slice %276 {offsets = [0, 0], sizes = [2, 256], strides = [1, 1]} : vector<2x384xf32> to vector<2x256xf32>
    %279 = arith.addf %277, %278 : vector<2x256xf32>
    %280 = arith.negf %279 : vector<2x256xf32>
    %281 = math.exp %280 : vector<2x256xf32>
    %cst_47 = arith.constant 1.000000e+00 : f32
    %282 = vector.broadcast %cst_47 : f32 to vector<2x256xf32>
    %283 = arith.addf %282, %281 : vector<2x256xf32>
    %284 = arith.divf %282, %283 : vector<2x256xf32>
    %285 = vector.extract_strided_slice %284 {offsets = [0, 0], sizes = [2, 128], strides = [1, 1]} : vector<2x256xf32> to vector<2x128xf32>
    %286 = vector.extract_strided_slice %284 {offsets = [0, 128], sizes = [2, 128], strides = [1, 1]} : vector<2x256xf32> to vector<2x128xf32>
    %287 = vector.extract_strided_slice %273 {offsets = [0, 256], sizes = [2, 128], strides = [1, 1]} : vector<2x384xf32> to vector<2x128xf32>
    %288 = vector.extract_strided_slice %276 {offsets = [0, 256], sizes = [2, 128], strides = [1, 1]} : vector<2x384xf32> to vector<2x128xf32>
    %289 = arith.mulf %285, %288 : vector<2x128xf32>
    %290 = arith.addf %287, %289 : vector<2x128xf32>
    %291 = math.tanh %290 : vector<2x128xf32>
    %292 = arith.subf %248, %291 : vector<2x128xf32>
    %293 = arith.mulf %286, %292 : vector<2x128xf32>
    %294 = arith.addf %291, %293 : vector<2x128xf32>
    %295 = arith.truncf %248 : vector<2x128xf32> to vector<2x128xbf16>
    %cst_48 = arith.constant dense<0.000000e+00> : vector<2x384xf32>
    %296 = tpu.matmul %295, %1, %cst_48 {dimension_numbers = #tpu.dot_dimension_numbers<[1], [0], [0], [1], [0, 0, 1, 1], [], []>} : vector<2x128xbf16>, vector<128x384xbf16>, vector<2x384xf32> -> vector<2x384xf32>
    %297 = arith.addf %296, %6 : vector<2x384xf32>
    %298 = arith.truncf %272 : vector<2x128xf32> to vector<2x128xbf16>
    %cst_49 = arith.constant dense<0.000000e+00> : vector<2x384xf32>
    %299 = tpu.matmul %298, %3, %cst_49 {dimension_numbers = #tpu.dot_dimension_numbers<[1], [0], [0], [1], [0, 0, 1, 1], [], []>} : vector<2x128xbf16>, vector<128x384xbf16>, vector<2x384xf32> -> vector<2x384xf32>
    %300 = arith.addf %299, %12 : vector<2x384xf32>
    %301 = vector.extract_strided_slice %297 {offsets = [0, 0], sizes = [2, 256], strides = [1, 1]} : vector<2x384xf32> to vector<2x256xf32>
    %302 = vector.extract_strided_slice %300 {offsets = [0, 0], sizes = [2, 256], strides = [1, 1]} : vector<2x384xf32> to vector<2x256xf32>
    %303 = arith.addf %301, %302 : vector<2x256xf32>
    %304 = arith.negf %303 : vector<2x256xf32>
    %305 = math.exp %304 : vector<2x256xf32>
    %cst_50 = arith.constant 1.000000e+00 : f32
    %306 = vector.broadcast %cst_50 : f32 to vector<2x256xf32>
    %307 = arith.addf %306, %305 : vector<2x256xf32>
    %308 = arith.divf %306, %307 : vector<2x256xf32>
    %309 = vector.extract_strided_slice %308 {offsets = [0, 0], sizes = [2, 128], strides = [1, 1]} : vector<2x256xf32> to vector<2x128xf32>
    %310 = vector.extract_strided_slice %308 {offsets = [0, 128], sizes = [2, 128], strides = [1, 1]} : vector<2x256xf32> to vector<2x128xf32>
    %311 = vector.extract_strided_slice %297 {offsets = [0, 256], sizes = [2, 128], strides = [1, 1]} : vector<2x384xf32> to vector<2x128xf32>
    %312 = vector.extract_strided_slice %300 {offsets = [0, 256], sizes = [2, 128], strides = [1, 1]} : vector<2x384xf32> to vector<2x128xf32>
    %313 = arith.mulf %309, %312 : vector<2x128xf32>
    %314 = arith.addf %311, %313 : vector<2x128xf32>
    %315 = math.tanh %314 : vector<2x128xf32>
    %316 = arith.subf %272, %315 : vector<2x128xf32>
    %317 = arith.mulf %310, %316 : vector<2x128xf32>
    %318 = arith.addf %315, %317 : vector<2x128xf32>
    %319 = vector.extract_strided_slice %18 {offsets = [14, 0], sizes = [2, 384], strides = [1, 1]} : vector<16x384xf32> to vector<2x384xf32>
    %320 = arith.truncf %294 : vector<2x128xf32> to vector<2x128xbf16>
    %cst_51 = arith.constant dense<0.000000e+00> : vector<2x384xf32>
    %321 = tpu.matmul %320, %2, %cst_51 {dimension_numbers = #tpu.dot_dimension_numbers<[1], [0], [0], [1], [0, 0, 1, 1], [], []>} : vector<2x128xbf16>, vector<128x384xbf16>, vector<2x384xf32> -> vector<2x384xf32>
    %322 = arith.addf %321, %9 : vector<2x384xf32>
    %323 = vector.extract_strided_slice %319 {offsets = [0, 0], sizes = [2, 256], strides = [1, 1]} : vector<2x384xf32> to vector<2x256xf32>
    %324 = vector.extract_strided_slice %322 {offsets = [0, 0], sizes = [2, 256], strides = [1, 1]} : vector<2x384xf32> to vector<2x256xf32>
    %325 = arith.addf %323, %324 : vector<2x256xf32>
    %326 = arith.negf %325 : vector<2x256xf32>
    %327 = math.exp %326 : vector<2x256xf32>
    %cst_52 = arith.constant 1.000000e+00 : f32
    %328 = vector.broadcast %cst_52 : f32 to vector<2x256xf32>
    %329 = arith.addf %328, %327 : vector<2x256xf32>
    %330 = arith.divf %328, %329 : vector<2x256xf32>
    %331 = vector.extract_strided_slice %330 {offsets = [0, 0], sizes = [2, 128], strides = [1, 1]} : vector<2x256xf32> to vector<2x128xf32>
    %332 = vector.extract_strided_slice %330 {offsets = [0, 128], sizes = [2, 128], strides = [1, 1]} : vector<2x256xf32> to vector<2x128xf32>
    %333 = vector.extract_strided_slice %319 {offsets = [0, 256], sizes = [2, 128], strides = [1, 1]} : vector<2x384xf32> to vector<2x128xf32>
    %334 = vector.extract_strided_slice %322 {offsets = [0, 256], sizes = [2, 128], strides = [1, 1]} : vector<2x384xf32> to vector<2x128xf32>
    %335 = arith.mulf %331, %334 : vector<2x128xf32>
    %336 = arith.addf %333, %335 : vector<2x128xf32>
    %337 = math.tanh %336 : vector<2x128xf32>
    %338 = arith.subf %294, %337 : vector<2x128xf32>
    %339 = arith.mulf %332, %338 : vector<2x128xf32>
    %340 = arith.addf %337, %339 : vector<2x128xf32>
    %341 = arith.truncf %294 : vector<2x128xf32> to vector<2x128xbf16>
    %cst_53 = arith.constant dense<0.000000e+00> : vector<2x384xf32>
    %342 = tpu.matmul %341, %1, %cst_53 {dimension_numbers = #tpu.dot_dimension_numbers<[1], [0], [0], [1], [0, 0, 1, 1], [], []>} : vector<2x128xbf16>, vector<128x384xbf16>, vector<2x384xf32> -> vector<2x384xf32>
    %343 = arith.addf %342, %6 : vector<2x384xf32>
    %344 = arith.truncf %318 : vector<2x128xf32> to vector<2x128xbf16>
    %cst_54 = arith.constant dense<0.000000e+00> : vector<2x384xf32>
    %345 = tpu.matmul %344, %3, %cst_54 {dimension_numbers = #tpu.dot_dimension_numbers<[1], [0], [0], [1], [0, 0, 1, 1], [], []>} : vector<2x128xbf16>, vector<128x384xbf16>, vector<2x384xf32> -> vector<2x384xf32>
    %346 = arith.addf %345, %12 : vector<2x384xf32>
    %347 = vector.extract_strided_slice %343 {offsets = [0, 0], sizes = [2, 256], strides = [1, 1]} : vector<2x384xf32> to vector<2x256xf32>
    %348 = vector.extract_strided_slice %346 {offsets = [0, 0], sizes = [2, 256], strides = [1, 1]} : vector<2x384xf32> to vector<2x256xf32>
    %349 = arith.addf %347, %348 : vector<2x256xf32>
    %350 = arith.negf %349 : vector<2x256xf32>
    %351 = math.exp %350 : vector<2x256xf32>
    %cst_55 = arith.constant 1.000000e+00 : f32
    %352 = vector.broadcast %cst_55 : f32 to vector<2x256xf32>
    %353 = arith.addf %352, %351 : vector<2x256xf32>
    %354 = arith.divf %352, %353 : vector<2x256xf32>
    %355 = vector.extract_strided_slice %354 {offsets = [0, 0], sizes = [2, 128], strides = [1, 1]} : vector<2x256xf32> to vector<2x128xf32>
    %356 = vector.extract_strided_slice %354 {offsets = [0, 128], sizes = [2, 128], strides = [1, 1]} : vector<2x256xf32> to vector<2x128xf32>
    %357 = vector.extract_strided_slice %343 {offsets = [0, 256], sizes = [2, 128], strides = [1, 1]} : vector<2x384xf32> to vector<2x128xf32>
    %358 = vector.extract_strided_slice %346 {offsets = [0, 256], sizes = [2, 128], strides = [1, 1]} : vector<2x384xf32> to vector<2x128xf32>
    %359 = arith.mulf %355, %358 : vector<2x128xf32>
    %360 = arith.addf %357, %359 : vector<2x128xf32>
    %361 = math.tanh %360 : vector<2x128xf32>
    %362 = arith.subf %318, %361 : vector<2x128xf32>
    %363 = arith.mulf %356, %362 : vector<2x128xf32>
    %364 = arith.addf %361, %363 : vector<2x128xf32>
    %365 = arith.truncf %340 : vector<2x128xf32> to vector<2x128xbf16>
    %cst_56 = arith.constant dense<0.000000e+00> : vector<2x384xf32>
    %366 = tpu.matmul %365, %1, %cst_56 {dimension_numbers = #tpu.dot_dimension_numbers<[1], [0], [0], [1], [0, 0, 1, 1], [], []>} : vector<2x128xbf16>, vector<128x384xbf16>, vector<2x384xf32> -> vector<2x384xf32>
    %367 = arith.addf %366, %6 : vector<2x384xf32>
    %368 = arith.truncf %364 : vector<2x128xf32> to vector<2x128xbf16>
    %cst_57 = arith.constant dense<0.000000e+00> : vector<2x384xf32>
    %369 = tpu.matmul %368, %3, %cst_57 {dimension_numbers = #tpu.dot_dimension_numbers<[1], [0], [0], [1], [0, 0, 1, 1], [], []>} : vector<2x128xbf16>, vector<128x384xbf16>, vector<2x384xf32> -> vector<2x384xf32>
    %370 = arith.addf %369, %12 : vector<2x384xf32>
    %371 = vector.extract_strided_slice %367 {offsets = [0, 0], sizes = [2, 256], strides = [1, 1]} : vector<2x384xf32> to vector<2x256xf32>
    %372 = vector.extract_strided_slice %370 {offsets = [0, 0], sizes = [2, 256], strides = [1, 1]} : vector<2x384xf32> to vector<2x256xf32>
    %373 = arith.addf %371, %372 : vector<2x256xf32>
    %374 = arith.negf %373 : vector<2x256xf32>
    %375 = math.exp %374 : vector<2x256xf32>
    %cst_58 = arith.constant 1.000000e+00 : f32
    %376 = vector.broadcast %cst_58 : f32 to vector<2x256xf32>
    %377 = arith.addf %376, %375 : vector<2x256xf32>
    %378 = arith.divf %376, %377 : vector<2x256xf32>
    %379 = vector.extract_strided_slice %378 {offsets = [0, 0], sizes = [2, 128], strides = [1, 1]} : vector<2x256xf32> to vector<2x128xf32>
    %380 = vector.extract_strided_slice %378 {offsets = [0, 128], sizes = [2, 128], strides = [1, 1]} : vector<2x256xf32> to vector<2x128xf32>
    %381 = vector.extract_strided_slice %367 {offsets = [0, 256], sizes = [2, 128], strides = [1, 1]} : vector<2x384xf32> to vector<2x128xf32>
    %382 = vector.extract_strided_slice %370 {offsets = [0, 256], sizes = [2, 128], strides = [1, 1]} : vector<2x384xf32> to vector<2x128xf32>
    %383 = arith.mulf %379, %382 : vector<2x128xf32>
    %384 = arith.addf %381, %383 : vector<2x128xf32>
    %385 = math.tanh %384 : vector<2x128xf32>
    %386 = arith.subf %364, %385 : vector<2x128xf32>
    %387 = arith.mulf %380, %386 : vector<2x128xf32>
    %388 = arith.addf %385, %387 : vector<2x128xf32>
    %389 = tpu.concatenate %88, %134, %180, %226, %272, %318, %364, %388 in 0 : vector<2x128xf32>, vector<2x128xf32>, vector<2x128xf32>, vector<2x128xf32>, vector<2x128xf32>, vector<2x128xf32>, vector<2x128xf32>, vector<2x128xf32> -> vector<16x128xf32>
    %c0_59 = arith.constant 0 : index
    %c0_60 = arith.constant 0 : index
    %390 = vector.load %arg9[%c0_59, %c0_60] : memref<16x128xf32, #tpu.memory_space<vmem>>, vector<16x128xf32>
    tpu.vector_store %arg9[%c0_59, %c0_60], %389 {strides = array<i32>} : memref<16x128xf32, #tpu.memory_space<vmem>>, vector<16x128xf32>,
    %391 = tpu.concatenate %340, %388 in 0 : vector<2x128xf32>, vector<2x128xf32> -> vector<4x128xf32>
    %c0_61 = arith.constant 0 : index
    %c0_62 = arith.constant 0 : index
    %392 = vector.load %arg10[%c0_61, %c0_62] : memref<4x128xf32, #tpu.memory_space<vmem>>, vector<4x128xf32>
    tpu.vector_store %arg10[%c0_61, %c0_62], %391 {strides = array<i32>} : memref<4x128xf32, #tpu.memory_space<vmem>>, vector<4x128xf32>,
    return
  }
}

</mosaic_0001>

<llo_original>
// kernel: _encoder_forward_jit.1
$region0: #{_encoder_forward_jit.1}
  #allocation0 [shape = 'u32[]', space=smem, size = 0x4, offset = 0x4, fixed_abs, tag = 'smem constant byte address 0x4 - core index']
  #allocation1 [shape = 'u32[144,128]{1,0:T(1,128)}', space=vmem, size = 0x12000, scoped, tag = 'internal scratch']
  %s0 = inlined_call_operand.vmem [shape: f32[16,16], index: 0, kind: input, shape index: {}]
  %s1 = inlined_call_operand.vmem [shape: bf16[16,384], index: 1, kind: input, shape index: {}]
  %s2 = inlined_call_operand.hbm [shape: bf16[128,384], index: 2, kind: input, shape index: {}]
  %s3 = inlined_call_operand.vmem [shape: f32[1,384], index: 3, kind: input, shape index: {}]
  %s4 = inlined_call_operand.vmem [shape: f32[1,384], index: 4, kind: input, shape index: {}]
  %s5 = inlined_call_operand.hbm [shape: bf16[128,384], index: 5, kind: input, shape index: {}]
  %s6 = inlined_call_operand.hbm [shape: bf16[128,384], index: 6, kind: input, shape index: {}]
  %s7 = inlined_call_operand.vmem [shape: f32[1,384], index: 7, kind: input, shape index: {}]
  %s8 = inlined_call_operand.vmem [shape: f32[1,384], index: 8, kind: input, shape index: {}]
  %s9 = inlined_call_operand.vmem [shape: f32[16,128], index: 9, kind: output, shape index: {0}]
  %s10 = inlined_call_operand.hbm [shape: f32[4,128], index: 10, kind: output, shape index: {1}]
  %11 = xla_tuple %s9, %s10
  %s12 = sld [smem:[#allocation0]]
  $region66: #{_encoder_forward_jit.1} parent=0
    _
  %s14 = ssub.s32 1, %s12
  %s15 = scalar_select 0, %s14, %s12
  $region1: #{_encoder_forward_jit.1} parent=0
    #allocation2 [shape = 'u8[98304]{0}', space=vmem, size = 0x18000, scoped, tag = 'input window, operand 2, single buffered']
    #allocation3 [shape = 's32[1]{0}', space=sflag, size = 0x4, scoped, tag = 'scoped memory for _encoder_forward_jit.1']
    #allocation4 [shape = 's32[1]{0}', space=sflag, size = 0x4, scoped, tag = 'scoped memory for _encoder_forward_jit.1']
    #allocation5 [shape = 'u8[98304]{0}', space=vmem, size = 0x18000, scoped, tag = 'input window, operand 5, single buffered']
    #allocation6 [shape = 's32[1]{0}', space=sflag, size = 0x4, scoped, tag = 'scoped memory for _encoder_forward_jit.1']
    #allocation7 [shape = 'u8[98304]{0}', space=vmem, size = 0x18000, scoped, tag = 'input window, operand 6, single buffered']
    #allocation8 [shape = 'u8[2048]{0}', space=vmem, size = 0x800, scoped, tag = 'output window, operand 1, single buffered']
    %16 = vsyncpa [#allocation3], 0
    %17 = vsyncpa [#allocation6], 0
    %18 = vsyncpa [#allocation4], 0
    // Predicated region
    $region2: #{_encoder_forward_jit.1} parent=1 // pred_check
      _
    $region3: #{_encoder_forward_jit.1} parent=1 // pred_check_branch
      %20 = sbr.rel (0) target = $region5
    $region4: #{_encoder_forward_jit.1} parent=1 // pred_region
      _
    $region5: #{_encoder_forward_jit.1} parent=1 // pred_fallthru
      _
    // Predicated region
    $region6: #{_encoder_forward_jit.1} parent=1 // pred_check
      _
    $region7: #{_encoder_forward_jit.1} parent=1 // pred_check_branch
      %22 = sbr.rel (0) target = $region9
    $region8: #{_encoder_forward_jit.1} parent=1 // pred_region
      _
    $region9: #{_encoder_forward_jit.1} parent=1 // pred_fallthru
      _
    // Predicated region
    $region10: #{_encoder_forward_jit.1} parent=1 // pred_check
      _
    $region11: #{_encoder_forward_jit.1} parent=1 // pred_check_branch
      %24 = sbr.rel (0) target = $region13
    $region12: #{_encoder_forward_jit.1} parent=1 // pred_region
      %s26 = ssub.s32 3072, 3072
      %27 = vsyncadd [#allocation3], %s26
      %s28 = sshll.u32 [#allocation2], 4
      %s29 = int_to_ptr.vmem [resolvable:$true] %s28
      %34 = dma.hbm_to_vmem [thread:$0]  %s2, 3072, %s29, [#allocation3], 192, 192, 12
    $region13: #{_encoder_forward_jit.1} parent=1 // pred_fallthru
      _
    // Predicated region
    $region14: #{_encoder_forward_jit.1} parent=1 // pred_check
      _
    $region15: #{_encoder_forward_jit.1} parent=1 // pred_check_branch
      %36 = sbr.rel (0) target = $region17
    $region16: #{_encoder_forward_jit.1} parent=1 // pred_region
      _
    $region17: #{_encoder_forward_jit.1} parent=1 // pred_fallthru
      _
    // Predicated region
    $region18: #{_encoder_forward_jit.1} parent=1 // pred_check
      _
    $region19: #{_encoder_forward_jit.1} parent=1 // pred_check_branch
      %38 = sbr.rel (0) target = $region21
    $region20: #{_encoder_forward_jit.1} parent=1 // pred_region
      _
    $region21: #{_encoder_forward_jit.1} parent=1 // pred_fallthru
      _
    // Predicated region
    $region22: #{_encoder_forward_jit.1} parent=1 // pred_check
      _
    $region23: #{_encoder_forward_jit.1} parent=1 // pred_check_branch
      %40 = sbr.rel (0) target = $region25
    $region24: #{_encoder_forward_jit.1} parent=1 // pred_region
      %s42 = ssub.s32 3072, 3072
      %43 = vsyncadd [#allocation6], %s42
      %s44 = sshll.u32 [#allocation5], 4
      %s45 = int_to_ptr.vmem [resolvable:$true] %s44
      %50 = dma.hbm_to_vmem [thread:$0]  %s5, 3072, %s45, [#allocation6], 192, 192, 12
    $region25: #{_encoder_forward_jit.1} parent=1 // pred_fallthru
      _
    // Predicated region
    $region26: #{_encoder_forward_jit.1} parent=1 // pred_check
      _
    $region27: #{_encoder_forward_jit.1} parent=1 // pred_check_branch
      %52 = sbr.rel (0) target = $region29
    $region28: #{_encoder_forward_jit.1} parent=1 // pred_region
      %s54 = ssub.s32 3072, 3072
      %55 = vsyncadd [#allocation6], %s54
      %s56 = sshll.u32 [#allocation7], 4
      %s57 = int_to_ptr.vmem [resolvable:$true] %s56
      %62 = dma.hbm_to_vmem [thread:$0]  %s6, 3072, %s57, [#allocation6], 192, 192, 12
    $region29: #{_encoder_forward_jit.1} parent=1 // pred_fallthru
      _
    // Predicated region
    $region30: #{_encoder_forward_jit.1} parent=1 // pred_check
      _
    $region31: #{_encoder_forward_jit.1} parent=1 // pred_check_branch
      %64 = sbr.rel (0) target = $region33
    $region32: #{_encoder_forward_jit.1} parent=1 // pred_region
      _
    $region33: #{_encoder_forward_jit.1} parent=1 // pred_fallthru
      _
    // Predicated region
    $region34: #{_encoder_forward_jit.1} parent=1 // pred_check
      _
    $region35: #{_encoder_forward_jit.1} parent=1 // pred_check_branch
      %66 = sbr.rel (0) target = $region37
    $region36: #{_encoder_forward_jit.1} parent=1 // pred_region
      _
    $region37: #{_encoder_forward_jit.1} parent=1 // pred_fallthru
      _
    // Predicated region
    $region38: #{_encoder_forward_jit.1} parent=1 // pred_check
      _
    $region39: #{_encoder_forward_jit.1} parent=1 // pred_check_branch
      %68 = sbr.rel (0) target = $region41
    $region40: #{_encoder_forward_jit.1} parent=1 // pred_region
      %69 = dma.done [#allocation3], 3072
    $region41: #{_encoder_forward_jit.1} parent=1 // pred_fallthru
      _
    // Predicated region
    $region42: #{_encoder_forward_jit.1} parent=1 // pred_check
      _
    $region43: #{_encoder_forward_jit.1} parent=1 // pred_check_branch
      %71 = sbr.rel (0) target = $region45
    $region44: #{_encoder_forward_jit.1} parent=1 // pred_region
      %72 = dma.done [#allocation6], 3072
    $region45: #{_encoder_forward_jit.1} parent=1 // pred_fallthru
      _
    // Predicated region
    $region46: #{_encoder_forward_jit.1} parent=1 // pred_check
      _
    $region47: #{_encoder_forward_jit.1} parent=1 // pred_check_branch
      %74 = sbr.rel (0) target = $region49
    $region48: #{_encoder_forward_jit.1} parent=1 // pred_region
      %75 = dma.done [#allocation6], 3072
    $region49: #{_encoder_forward_jit.1} parent=1 // pred_fallthru
      _
    %v77 = vld [vmem:[%s1] sm:$0xff]
    %v78 = vld [vmem:[%s1 + $0x8] sm:$0xf]
    %v79 = vld [vmem:[%s1 + $0xc] sm:$0xff]
    %v80 = vld [vmem:[%s1 + $0x14] sm:$0xf]
    %v81 = vld [vmem:[#allocation5] sm:$0xff]
    %v82 = vld [vmem:[#allocation5 + $0x8] sm:$0xf]
    %v83 = vld [vmem:[#allocation5 + $0xc] sm:$0xff]
    %v84 = vld [vmem:[#allocation5 + $0x14] sm:$0xf]
    %v85 = vld [vmem:[#allocation5 + $0x18] sm:$0xff]
    %v86 = vld [vmem:[#allocation5 + $0x20] sm:$0xf]
    %v87 = vld [vmem:[#allocation5 + $0x24] sm:$0xff]
    %v88 = vld [vmem:[#allocation5 + $0x2c] sm:$0xf]
    %v89 = vld [vmem:[#allocation5 + $0x30] sm:$0xff]
    %v90 = vld [vmem:[#allocation5 + $0x38] sm:$0xf]
    %v91 = vld [vmem:[#allocation5 + $0x3c] sm:$0xff]
    %v92 = vld [vmem:[#allocation5 + $0x44] sm:$0xf]
    %v93 = vld [vmem:[#allocation5 + $0x48] sm:$0xff]
    %v94 = vld [vmem:[#allocation5 + $0x50] sm:$0xf]
    %v95 = vld [vmem:[#allocation5 + $0x54] sm:$0xff]
    %v96 = vld [vmem:[#allocation5 + $0x5c] sm:$0xf]
    %v97 = vld [vmem:[#allocation5 + $0x60] sm:$0xff]
    %v98 = vld [vmem:[#allocation5 + $0x68] sm:$0xf]
    %v99 = vld [vmem:[#allocation5 + $0x6c] sm:$0xff]
    %v100 = vld [vmem:[#allocation5 + $0x74] sm:$0xf]
    %v101 = vld [vmem:[#allocation5 + $0x78] sm:$0xff]
    %v102 = vld [vmem:[#allocation5 + $0x80] sm:$0xf]
    %v103 = vld [vmem:[#allocation5 + $0x84] sm:$0xff]
    %v104 = vld [vmem:[#allocation5 + $0x8c] sm:$0xf]
    %v105 = vld [vmem:[#allocation5 + $0x90] sm:$0xff]
    %v106 = vld [vmem:[#allocation5 + $0x98] sm:$0xf]
    %v107 = vld [vmem:[#allocation5 + $0x9c] sm:$0xff]
    %v108 = vld [vmem:[#allocation5 + $0xa4] sm:$0xf]
    %v109 = vld [vmem:[#allocation5 + $0xa8] sm:$0xff]
    %v110 = vld [vmem:[#allocation5 + $0xb0] sm:$0xf]
    %v111 = vld [vmem:[#allocation5 + $0xb4] sm:$0xff]
    %v112 = vld [vmem:[#allocation5 + $0xbc] sm:$0xf]
    %v113 = vld [vmem:[#allocation2] sm:$0xff]
    %v114 = vld [vmem:[#allocation2 + $0x8] sm:$0xf]
    %v115 = vld [vmem:[#allocation2 + $0xc] sm:$0xff]
    %v116 = vld [vmem:[#allocation2 + $0x14] sm:$0xf]
    %v117 = vld [vmem:[#allocation2 + $0x18] sm:$0xff]
    %v118 = vld [vmem:[#allocation2 + $0x20] sm:$0xf]
    %v119 = vld [vmem:[#allocation2 + $0x24] sm:$0xff]
    %v120 = vld [vmem:[#allocation2 + $0x2c] sm:$0xf]
    %v121 = vld [vmem:[#allocation2 + $0x30] sm:$0xff]
    %v122 = vld [vmem:[#allocation2 + $0x38] sm:$0xf]
    %v123 = vld [vmem:[#allocation2 + $0x3c] sm:$0xff]
    %v124 = vld [vmem:[#allocation2 + $0x44] sm:$0xf]
    %v125 = vld [vmem:[#allocation2 + $0x48] sm:$0xff]
    %v126 = vld [vmem:[#allocation2 + $0x50] sm:$0xf]
    %v127 = vld [vmem:[#allocation2 + $0x54] sm:$0xff]
    %v128 = vld [vmem:[#allocation2 + $0x5c] sm:$0xf]
    %v129 = vld [vmem:[#allocation2 + $0x60] sm:$0xff]
    %v130 = vld [vmem:[#allocation2 + $0x68] sm:$0xf]
    %v131 = vld [vmem:[#allocation2 + $0x6c] sm:$0xff]
    %v132 = vld [vmem:[#allocation2 + $0x74] sm:$0xf]
    %v133 = vld [vmem:[#allocation2 + $0x78] sm:$0xff]
    %v134 = vld [vmem:[#allocation2 + $0x80] sm:$0xf]
    %v135 = vld [vmem:[#allocation2 + $0x84] sm:$0xff]
    %v136 = vld [vmem:[#allocation2 + $0x8c] sm:$0xf]
    %v137 = vld [vmem:[#allocation2 + $0x90] sm:$0xff]
    %v138 = vld [vmem:[#allocation2 + $0x98] sm:$0xf]
    %v139 = vld [vmem:[#allocation2 + $0x9c] sm:$0xff]
    %v140 = vld [vmem:[#allocation2 + $0xa4] sm:$0xf]
    %v141 = vld [vmem:[#allocation2 + $0xa8] sm:$0xff]
    %v142 = vld [vmem:[#allocation2 + $0xb0] sm:$0xf]
    %v143 = vld [vmem:[#allocation2 + $0xb4] sm:$0xff]
    %v144 = vld [vmem:[#allocation2 + $0xbc] sm:$0xf]
    %v145 = vld [vmem:[#allocation7] sm:$0xff]
    %v146 = vld [vmem:[#allocation7 + $0x8] sm:$0xf]
    %v147 = vld [vmem:[#allocation7 + $0xc] sm:$0xff]
    %v148 = vld [vmem:[#allocation7 + $0x14] sm:$0xf]
    %v149 = vld [vmem:[#allocation7 + $0x18] sm:$0xff]
    %v150 = vld [vmem:[#allocation7 + $0x20] sm:$0xf]
    %v151 = vld [vmem:[#allocation7 + $0x24] sm:$0xff]
    %v152 = vld [vmem:[#allocation7 + $0x2c] sm:$0xf]
    %v153 = vld [vmem:[#allocation7 + $0x30] sm:$0xff]
    %v154 = vld [vmem:[#allocation7 + $0x38] sm:$0xf]
    %v155 = vld [vmem:[#allocation7 + $0x3c] sm:$0xff]
    %v156 = vld [vmem:[#allocation7 + $0x44] sm:$0xf]
    %v157 = vld [vmem:[#allocation7 + $0x48] sm:$0xff]
    %v158 = vld [vmem:[#allocation7 + $0x50] sm:$0xf]
    %v159 = vld [vmem:[#allocation7 + $0x54] sm:$0xff]
    %v160 = vld [vmem:[#allocation7 + $0x5c] sm:$0xf]
    %v161 = vld [vmem:[#allocation7 + $0x60] sm:$0xff]
    %v162 = vld [vmem:[#allocation7 + $0x68] sm:$0xf]
    %v163 = vld [vmem:[#allocation7 + $0x6c] sm:$0xff]
    %v164 = vld [vmem:[#allocation7 + $0x74] sm:$0xf]
    %v165 = vld [vmem:[#allocation7 + $0x78] sm:$0xff]
    %v166 = vld [vmem:[#allocation7 + $0x80] sm:$0xf]
    %v167 = vld [vmem:[#allocation7 + $0x84] sm:$0xff]
    %v168 = vld [vmem:[#allocation7 + $0x8c] sm:$0xf]
    %v169 = vld [vmem:[#allocation7 + $0x90] sm:$0xff]
    %v170 = vld [vmem:[#allocation7 + $0x98] sm:$0xf]
    %v171 = vld [vmem:[#allocation7 + $0x9c] sm:$0xff]
    %v172 = vld [vmem:[#allocation7 + $0xa4] sm:$0xf]
    %v173 = vld [vmem:[#allocation7 + $0xa8] sm:$0xff]
    %v174 = vld [vmem:[#allocation7 + $0xb0] sm:$0xf]
    %v175 = vld [vmem:[#allocation7 + $0xb4] sm:$0xff]
    %v176 = vld [vmem:[#allocation7 + $0xbc] sm:$0xf]
    %v177 = vld [vmem:[%s7] sm:$0x7]
    %v179 = vlaneseq
    %v180 = vshrl.u32 %v179, 7
    %v181 = vsub.s32 0, %v180
    %v182 = vrot.slane %v177, %v181
    %v183 = vlaneseq
    %v184 = vshrl.u32 %v183, 7
    %v185 = vsub.s32 1, %v184
    %v186 = vrot.slane %v177, %v185
    %v187 = vlaneseq
    %v188 = vshrl.u32 %v187, 7
    %v189 = vsub.s32 2, %v188
    %v190 = vrot.slane %v177, %v189
    %v194 = vld [vmem:[%s4] sm:$0x7]
    %v196 = vlaneseq
    %v197 = vshrl.u32 %v196, 7
    %v198 = vsub.s32 0, %v197
    %v199 = vrot.slane %v194, %v198
    %v200 = vlaneseq
    %v201 = vshrl.u32 %v200, 7
    %v202 = vsub.s32 1, %v201
    %v203 = vrot.slane %v194, %v202
    %v204 = vlaneseq
    %v205 = vshrl.u32 %v204, 7
    %v206 = vsub.s32 2, %v205
    %v207 = vrot.slane %v194, %v206
    %v211 = vld [vmem:[%s8] sm:$0x7]
    %v213 = vlaneseq
    %v214 = vshrl.u32 %v213, 7
    %v215 = vsub.s32 0, %v214
    %v216 = vrot.slane %v211, %v215
    %v217 = vlaneseq
    %v218 = vshrl.u32 %v217, 7
    %v219 = vsub.s32 1, %v218
    %v220 = vrot.slane %v211, %v219
    %v221 = vlaneseq
    %v222 = vshrl.u32 %v221, 7
    %v223 = vsub.s32 2, %v222
    %v224 = vrot.slane %v211, %v223
    %v228 = vld [vmem:[%s0] sm:$0xff]
    %v229 = vld [vmem:[%s0 + $0x8] sm:$0xff]
    %v230 = vpack.c.bf16 %v229, %v228
    %v231 = vld [vmem:[%s3] sm:$0x7]
    %v233 = vlaneseq
    %v234 = vshrl.u32 %v233, 7
    %v235 = vsub.s32 0, %v234
    %v236 = vrot.slane %v231, %v235
    %v237 = vlaneseq
    %v238 = vshrl.u32 %v237, 7
    %v239 = vsub.s32 1, %v238
    %v240 = vrot.slane %v231, %v239
    %v241 = vlaneseq
    %v242 = vshrl.u32 %v241, 7
    %v243 = vsub.s32 2, %v242
    %v244 = vrot.slane %v231, %v243
    %v252 = vunpack.c.l.b16 %v77
    %v253 = vunpack.c.h.b16 %v77
    %v254 = vunpack.c.l.b16 %v78
    %v255 = vunpack.c.l.b16 %v79
    %v256 = vunpack.c.h.b16 %v79
    %v257 = vunpack.c.l.b16 %v80
    %v258 = vpack.c.b16 %v255, %v252
    %v259 = vpack.c.b16 %v256, %v253
    %v260 = vpack.c.b16 %v257, %v254
    %vm264 = vcmask 130048
    %v266 = vsel %vm264, %v230, 0
    %268 = vmatprep.subr.bf16.mxu0 %v259
    %269 = vmatpush1.bf16.msra.mxu0 %v258
    %270 = vmatprep.subr.bf16.mxu0 0
    %271 = vmatpush1.bf16.msra.mxu0 0
    %272 = vmatprep.subr.bf16.mxu0 0
    %273 = vmatpush1.bf16.msra.mxu0 0
    %274 = vmatprep.subr.bf16.mxu0 0
    %275 = vmatpush1.bf16.msra.mxu0 0
    %276 = vmatprep.subr.bf16.mxu0 0
    %277 = vmatpush1.bf16.msra.mxu0 0
    %278 = vmatprep.subr.bf16.mxu0 0
    %279 = vmatpush1.bf16.msra.mxu0 0
    %280 = vmatprep.subr.bf16.mxu0 0
    %281 = vmatpush1.bf16.msra.mxu0 0
    %282 = vmatprep.subr.bf16.mxu0 0
    %283 = vmatpush1.bf16.msra.mxu0 0
    %284 = vmatprep.subr.bf16.mxu0 0
    %285 = vmatpush1.bf16.msra.mxu0 0
    %286 = vmatprep.subr.bf16.mxu0 0
    %287 = vmatpush1.bf16.msra.mxu0 0
    %288 = vmatprep.subr.bf16.mxu0 0
    %289 = vmatpush1.bf16.msra.mxu0 0
    %290 = vmatprep.subr.bf16.mxu0 0
    %291 = vmatpush1.bf16.msra.mxu0 0
    %292 = vmatprep.subr.bf16.mxu0 0
    %293 = vmatpush1.bf16.msra.mxu0 0
    %294 = vmatprep.subr.bf16.mxu0 0
    %295 = vmatpush1.bf16.msra.mxu0 0
    %296 = vmatprep.subr.bf16.mxu0 0
    %297 = vmatpush1.bf16.msra.mxu0 0
    %298 = vmatprep.subr.bf16.mxu0 0
    %299 = vmatpush1.bf16.msra.mxu0 0
    %300 = vmatprep.mubr.bf16.mxu0 0
    %301 = vmatmul.mubr.bf16.gmra.mrb[0].mxu0 %v266
    %v302 = vpop.f32.mrb[0].mxu0
    %v303 = vadd.f32 %v236, %v302
    %v304 = vpop.f32.mrb[0].mxu0
    %v305 = vadd.f32 %v240, %v304
    %v306 = vpop.f32.mrb[0].mxu0
    %v307 = vadd.f32 %v236, %v306
    %v308 = vpop.f32.mrb[0].mxu0
    %v309 = vadd.f32 %v240, %v308
    %310 = vdwg.mxu0
    %311 = vmatprep.subr.bf16.mxu0 0
    %312 = vmatpush1.bf16.msra.mxu0 %v260
    %313 = vmatprep.subr.bf16.mxu0 0
    %314 = vmatpush1.bf16.msra.mxu0 0
    %315 = vmatprep.subr.bf16.mxu0 0
    %316 = vmatpush1.bf16.msra.mxu0 0
    %317 = vmatprep.subr.bf16.mxu0 0
    %318 = vmatpush1.bf16.msra.mxu0 0
    %319 = vmatprep.subr.bf16.mxu0 0
    %320 = vmatpush1.bf16.msra.mxu0 0
    %321 = vmatprep.subr.bf16.mxu0 0
    %322 = vmatpush1.bf16.msra.mxu0 0
    %323 = vmatprep.subr.bf16.mxu0 0
    %324 = vmatpush1.bf16.msra.mxu0 0
    %325 = vmatprep.subr.bf16.mxu0 0
    %326 = vmatpush1.bf16.msra.mxu0 0
    %327 = vmatprep.subr.bf16.mxu0 0
    %328 = vmatpush1.bf16.msra.mxu0 0
    %329 = vmatprep.subr.bf16.mxu0 0
    %330 = vmatpush1.bf16.msra.mxu0 0
    %331 = vmatprep.subr.bf16.mxu0 0
    %332 = vmatpush1.bf16.msra.mxu0 0
    %333 = vmatprep.subr.bf16.mxu0 0
    %334 = vmatpush1.bf16.msra.mxu0 0
    %335 = vmatprep.subr.bf16.mxu0 0
    %336 = vmatpush1.bf16.msra.mxu0 0
    %337 = vmatprep.subr.bf16.mxu0 0
    %338 = vmatpush1.bf16.msra.mxu0 0
    %339 = vmatprep.subr.bf16.mxu0 0
    %340 = vmatpush1.bf16.msra.mxu0 0
    %341 = vmatprep.subr.bf16.mxu0 0
    %342 = vmatpush1.bf16.msra.mxu0 0
    %343 = vmatprep.mubr.bf16.mxu0 0
    %344 = vmatmul.mubr.bf16.gmra.mrb[0].mxu0 %v266
    %v345 = vpop.f32.mrb[0].mxu0
    %v346 = vadd.f32 %v244, %v345
    %v347 = vpop.f32.mrb[0].mxu0
    %v348 = vpop.f32.mrb[0].mxu0
    %v349 = vadd.f32 %v244, %v348
    %v350 = vpop.f32.mrb[0].mxu0
    %351 = vdwg.mxu0
    %v384 = vunpack.c.l.b16 %v113
    %v385 = vunpack.c.h.b16 %v113
    %v386 = vunpack.c.l.b16 %v114
    %v387 = vunpack.c.l.b16 %v115
    %v388 = vunpack.c.h.b16 %v115
    %v389 = vunpack.c.l.b16 %v116
    %v390 = vunpack.c.l.b16 %v117
    %v391 = vunpack.c.h.b16 %v117
    %v392 = vunpack.c.l.b16 %v118
    %v393 = vunpack.c.l.b16 %v119
    %v394 = vunpack.c.h.b16 %v119
    %v395 = vunpack.c.l.b16 %v120
    %v396 = vunpack.c.l.b16 %v121
    %v397 = vunpack.c.h.b16 %v121
    %v398 = vunpack.c.l.b16 %v122
    %v399 = vunpack.c.l.b16 %v123
    %v400 = vunpack.c.h.b16 %v123
    %v401 = vunpack.c.l.b16 %v124
    %v402 = vunpack.c.l.b16 %v125
    %v403 = vunpack.c.h.b16 %v125
    %v404 = vunpack.c.l.b16 %v126
    %v405 = vunpack.c.l.b16 %v127
    %v406 = vunpack.c.h.b16 %v127
    %v407 = vunpack.c.l.b16 %v128
    %v408 = vunpack.c.l.b16 %v129
    %v409 = vunpack.c.h.b16 %v129
    %v410 = vunpack.c.l.b16 %v130
    %v411 = vunpack.c.l.b16 %v131
    %v412 = vunpack.c.h.b16 %v131
    %v413 = vunpack.c.l.b16 %v132
    %v414 = vunpack.c.l.b16 %v133
    %v415 = vunpack.c.h.b16 %v133
    %v416 = vunpack.c.l.b16 %v134
    %v417 = vunpack.c.l.b16 %v135
    %v418 = vunpack.c.h.b16 %v135
    %v419 = vunpack.c.l.b16 %v136
    %v420 = vunpack.c.l.b16 %v137
    %v421 = vunpack.c.h.b16 %v137
    %v422 = vunpack.c.l.b16 %v138
    %v423 = vunpack.c.l.b16 %v139
    %v424 = vunpack.c.h.b16 %v139
    %v425 = vunpack.c.l.b16 %v140
    %v426 = vunpack.c.l.b16 %v141
    %v427 = vunpack.c.h.b16 %v141
    %v428 = vunpack.c.l.b16 %v142
    %v429 = vunpack.c.l.b16 %v143
    %v430 = vunpack.c.h.b16 %v143
    %v431 = vunpack.c.l.b16 %v144
    %v432 = vpack.c.b16 %v387, %v384
    %v433 = vpack.c.b16 %v388, %v385
    %v434 = vpack.c.b16 %v389, %v386
    %v435 = vpack.c.b16 %v393, %v390
    %v436 = vpack.c.b16 %v394, %v391
    %v437 = vpack.c.b16 %v395, %v392
    %v438 = vpack.c.b16 %v399, %v396
    %v439 = vpack.c.b16 %v400, %v397
    %v440 = vpack.c.b16 %v401, %v398
    %v441 = vpack.c.b16 %v405, %v402
    %v442 = vpack.c.b16 %v406, %v403
    %v443 = vpack.c.b16 %v407, %v404
    %v444 = vpack.c.b16 %v411, %v408
    %v445 = vpack.c.b16 %v412, %v409
    %v446 = vpack.c.b16 %v413, %v410
    %v447 = vpack.c.b16 %v417, %v414
    %v448 = vpack.c.b16 %v418, %v415
    %v449 = vpack.c.b16 %v419, %v416
    %v450 = vpack.c.b16 %v423, %v420
    %v451 = vpack.c.b16 %v424, %v421
    %v452 = vpack.c.b16 %v425, %v422
    %v453 = vpack.c.b16 %v429, %v426
    %v454 = vpack.c.b16 %v430, %v427
    %v455 = vpack.c.b16 %v431, %v428
    %480 = vmatprep.subr.bf16.mxu0 %v433
    %481 = vmatpush1.bf16.msra.mxu0 %v432
    %482 = vmatprep.subr.bf16.mxu0 %v436
    %483 = vmatpush1.bf16.msra.mxu0 %v435
    %484 = vmatprep.subr.bf16.mxu0 %v439
    %485 = vmatpush1.bf16.msra.mxu0 %v438
    %486 = vmatprep.subr.bf16.mxu0 %v442
    %487 = vmatpush1.bf16.msra.mxu0 %v441
    %488 = vmatprep.subr.bf16.mxu0 %v445
    %489 = vmatpush1.bf16.msra.mxu0 %v444
    %490 = vmatprep.subr.bf16.mxu0 %v448
    %491 = vmatpush1.bf16.msra.mxu0 %v447
    %492 = vmatprep.subr.bf16.mxu0 %v451
    %493 = vmatpush1.bf16.msra.mxu0 %v450
    %494 = vmatprep.subr.bf16.mxu0 %v454
    %495 = vmatpush1.bf16.msra.mxu0 %v453
    %496 = vmatprep.subr.bf16.mxu0 0
    %497 = vmatpush1.bf16.msra.mxu0 0
    %498 = vmatprep.subr.bf16.mxu0 0
    %499 = vmatpush1.bf16.msra.mxu0 0
    %500 = vmatprep.subr.bf16.mxu0 0
    %501 = vmatpush1.bf16.msra.mxu0 0
    %502 = vmatprep.subr.bf16.mxu0 0
    %503 = vmatpush1.bf16.msra.mxu0 0
    %504 = vmatprep.subr.bf16.mxu0 0
    %505 = vmatpush1.bf16.msra.mxu0 0
    %506 = vmatprep.subr.bf16.mxu0 0
    %507 = vmatpush1.bf16.msra.mxu0 0
    %508 = vmatprep.subr.bf16.mxu0 0
    %509 = vmatpush1.bf16.msra.mxu0 0
    %510 = vmatprep.subr.bf16.mxu0 0
    %511 = vmatpush1.bf16.msra.mxu0 0
    %512 = vmatprep.mubr.bf16.mxu0 0
    %513 = vmatmul.mubr.bf16.gmra.mrb[0].mxu0 0
    %v514 = vpop.f32.mrb[0].mxu0
    %v515 = vadd.f32 %v199, %v514
    %v516 = vpop.f32.mrb[0].mxu0
    %v517 = vadd.f32 %v203, %v516
    %v518 = vpop.f32.mrb[0].mxu0
    %v519 = vpop.f32.mrb[0].mxu0
    %520 = vdwg.mxu0
    %521 = vmatprep.subr.bf16.mxu0 0
    %522 = vmatpush1.bf16.msra.mxu0 %v434
    %523 = vmatprep.subr.bf16.mxu0 0
    %524 = vmatpush1.bf16.msra.mxu0 %v437
    %525 = vmatprep.subr.bf16.mxu0 0
    %526 = vmatpush1.bf16.msra.mxu0 %v440
    %527 = vmatprep.subr.bf16.mxu0 0
    %528 = vmatpush1.bf16.msra.mxu0 %v443
    %529 = vmatprep.subr.bf16.mxu0 0
    %530 = vmatpush1.bf16.msra.mxu0 %v446
    %531 = vmatprep.subr.bf16.mxu0 0
    %532 = vmatpush1.bf16.msra.mxu0 %v449
    %533 = vmatprep.subr.bf16.mxu0 0
    %534 = vmatpush1.bf16.msra.mxu0 %v452
    %535 = vmatprep.subr.bf16.mxu0 0
    %536 = vmatpush1.bf16.msra.mxu0 %v455
    %537 = vmatprep.subr.bf16.mxu0 0
    %538 = vmatpush1.bf16.msra.mxu0 0
    %539 = vmatprep.subr.bf16.mxu0 0
    %540 = vmatpush1.bf16.msra.mxu0 0
    %541 = vmatprep.subr.bf16.mxu0 0
    %542 = vmatpush1.bf16.msra.mxu0 0
    %543 = vmatprep.subr.bf16.mxu0 0
    %544 = vmatpush1.bf16.msra.mxu0 0
    %545 = vmatprep.subr.bf16.mxu0 0
    %546 = vmatpush1.bf16.msra.mxu0 0
    %547 = vmatprep.subr.bf16.mxu0 0
    %548 = vmatpush1.bf16.msra.mxu0 0
    %549 = vmatprep.subr.bf16.mxu0 0
    %550 = vmatpush1.bf16.msra.mxu0 0
    %551 = vmatprep.subr.bf16.mxu0 0
    %552 = vmatpush1.bf16.msra.mxu0 0
    %553 = vmatprep.mubr.bf16.mxu0 0
    %554 = vmatmul.mubr.bf16.gmra.mrb[0].mxu0 0
    %v555 = vpop.f32.mrb[0].mxu0
    %v556 = vadd.f32 %v207, %v555
    %v557 = vpop.f32.mrb[0].mxu0
    %v558 = vpop.f32.mrb[0].mxu0
    %v559 = vpop.f32.mrb[0].mxu0
    %560 = vdwg.mxu0
    %v561 = vadd.f32 %v303, %v515
    %v562 = vadd.f32 %v305, %v517
    %v563 = vxor.u32 %v561, 2147483648
    %v564 = vxor.u32 %v562, 2147483648
    %v565 = vmul.f32 %v563, 1.442695
    %v566 = vpow.pop %v565
    %v567 = vmul.f32 %v564, 1.442695
    %v568 = vpow.pop %v567
    %v569 = vadd.f32 %v566, 1.0
    %v570 = vadd.f32 %v568, 1.0
    %v571 = vrcp.pop %v569
    %v572 = vmul.f32 1.0, %v571
    %v573 = vrcp.pop %v570
    %v574 = vmul.f32 1.0, %v573
    %v575 = vmul.f32 %v572, %v556
    %v576 = vadd.f32 %v346, %v575
    %v577 = vtanh.pop %v576
    %v578 = vsub.f32 0.0, %v577
    %v579 = vmul.f32 %v574, %v578
    %v580 = vadd.f32 %v577, %v579
    %v581 = vpack.c.bf16 %v580, %v580
    %582 = vmatprep.subr.bf16.mxu0 %v433
    %583 = vmatpush1.bf16.msra.mxu0 %v432
    %584 = vmatprep.subr.bf16.mxu0 %v436
    %585 = vmatpush1.bf16.msra.mxu0 %v435
    %586 = vmatprep.subr.bf16.mxu0 %v439
    %587 = vmatpush1.bf16.msra.mxu0 %v438
    %588 = vmatprep.subr.bf16.mxu0 %v442
    %589 = vmatpush1.bf16.msra.mxu0 %v441
    %590 = vmatprep.subr.bf16.mxu0 %v445
    %591 = vmatpush1.bf16.msra.mxu0 %v444
    %592 = vmatprep.subr.bf16.mxu0 %v448
    %593 = vmatpush1.bf16.msra.mxu0 %v447
    %594 = vmatprep.subr.bf16.mxu0 %v451
    %595 = vmatpush1.bf16.msra.mxu0 %v450
    %596 = vmatprep.subr.bf16.mxu0 %v454
    %597 = vmatpush1.bf16.msra.mxu0 %v453
    %598 = vmatprep.subr.bf16.mxu0 0
    %599 = vmatpush1.bf16.msra.mxu0 0
    %600 = vmatprep.subr.bf16.mxu0 0
    %601 = vmatpush1.bf16.msra.mxu0 0
    %602 = vmatprep.subr.bf16.mxu0 0
    %603 = vmatpush1.bf16.msra.mxu0 0
    %604 = vmatprep.subr.bf16.mxu0 0
    %605 = vmatpush1.bf16.msra.mxu0 0
    %606 = vmatprep.subr.bf16.mxu0 0
    %607 = vmatpush1.bf16.msra.mxu0 0
    %608 = vmatprep.subr.bf16.mxu0 0
    %609 = vmatpush1.bf16.msra.mxu0 0
    %610 = vmatprep.subr.bf16.mxu0 0
    %611 = vmatpush1.bf16.msra.mxu0 0
    %612 = vmatprep.subr.bf16.mxu0 0
    %613 = vmatpush1.bf16.msra.mxu0 0
    %614 = vmatprep.mubr.bf16.mxu0 0
    %615 = vmatmul.mubr.bf16.gmra.mrb[0].mxu0 %v581
    %v616 = vpop.f32.mrb[0].mxu0
    %v617 = vadd.f32 %v199, %v616
    %v618 = vpop.f32.mrb[0].mxu0
    %v619 = vadd.f32 %v203, %v618
    %v620 = vpop.f32.mrb[0].mxu0
    %v621 = vpop.f32.mrb[0].mxu0
    %622 = vdwg.mxu0
    %623 = vmatprep.subr.bf16.mxu0 0
    %624 = vmatpush1.bf16.msra.mxu0 %v434
    %625 = vmatprep.subr.bf16.mxu0 0
    %626 = vmatpush1.bf16.msra.mxu0 %v437
    %627 = vmatprep.subr.bf16.mxu0 0
    %628 = vmatpush1.bf16.msra.mxu0 %v440
    %629 = vmatprep.subr.bf16.mxu0 0
    %630 = vmatpush1.bf16.msra.mxu0 %v443
    %631 = vmatprep.subr.bf16.mxu0 0
    %632 = vmatpush1.bf16.msra.mxu0 %v446
    %633 = vmatprep.subr.bf16.mxu0 0
    %634 = vmatpush1.bf16.msra.mxu0 %v449
    %635 = vmatprep.subr.bf16.mxu0 0
    %636 = vmatpush1.bf16.msra.mxu0 %v452
    %637 = vmatprep.subr.bf16.mxu0 0
    %638 = vmatpush1.bf16.msra.mxu0 %v455
    %639 = vmatprep.subr.bf16.mxu0 0
    %640 = vmatpush1.bf16.msra.mxu0 0
    %641 = vmatprep.subr.bf16.mxu0 0
    %642 = vmatpush1.bf16.msra.mxu0 0
    %643 = vmatprep.subr.bf16.mxu0 0
    %644 = vmatpush1.bf16.msra.mxu0 0
    %645 = vmatprep.subr.bf16.mxu0 0
    %646 = vmatpush1.bf16.msra.mxu0 0
    %647 = vmatprep.subr.bf16.mxu0 0
    %648 = vmatpush1.bf16.msra.mxu0 0
    %649 = vmatprep.subr.bf16.mxu0 0
    %650 = vmatpush1.bf16.msra.mxu0 0
    %651 = vmatprep.subr.bf16.mxu0 0
    %652 = vmatpush1.bf16.msra.mxu0 0
    %653 = vmatprep.subr.bf16.mxu0 0
    %654 = vmatpush1.bf16.msra.mxu0 0
    %655 = vmatprep.mubr.bf16.mxu0 0
    %656 = vmatmul.mubr.bf16.gmra.mrb[0].mxu0 %v581
    %v657 = vpop.f32.mrb[0].mxu0
    %v658 = vadd.f32 %v207, %v657
    %v659 = vpop.f32.mrb[0].mxu0
    %v660 = vpop.f32.mrb[0].mxu0
    %v661 = vpop.f32.mrb[0].mxu0
    %662 = vdwg.mxu0
    %v665 = vrot.slane %v617, 6
    %v666 = vrot.slane %v619, 6
    %v669 = vadd.f32 %v303, %v665
    %v670 = vadd.f32 %v305, %v666
    %v671 = vxor.u32 %v669, 2147483648
    %v672 = vxor.u32 %v670, 2147483648
    %v673 = vmul.f32 %v671, 1.442695
    %v674 = vpow.pop %v673
    %v675 = vmul.f32 %v672, 1.442695
    %v676 = vpow.pop %v675
    %v677 = vadd.f32 %v674, 1.0
    %v678 = vadd.f32 %v676, 1.0
    %v679 = vrcp.pop %v677
    %v680 = vmul.f32 1.0, %v679
    %v681 = vrcp.pop %v678
    %v682 = vmul.f32 1.0, %v681
    %v684 = vrot.slane %v658, 6
    %v686 = vmul.f32 %v680, %v684
    %v687 = vadd.f32 %v346, %v686
    %v688 = vtanh.pop %v687
    %v690 = vrot.slane %v688, 2
    %v692 = vsub.f32 %v580, %v690
    %v694 = vrot.slane %v692, 6
    %v696 = vmul.f32 %v682, %v694
    %v697 = vadd.f32 %v688, %v696
    %v730 = vunpack.c.l.b16 %v81
    %v731 = vunpack.c.h.b16 %v81
    %v732 = vunpack.c.l.b16 %v82
    %v733 = vunpack.c.l.b16 %v83
    %v734 = vunpack.c.h.b16 %v83
    %v735 = vunpack.c.l.b16 %v84
    %v736 = vunpack.c.l.b16 %v85
    %v737 = vunpack.c.h.b16 %v85
    %v738 = vunpack.c.l.b16 %v86
    %v739 = vunpack.c.l.b16 %v87
    %v740 = vunpack.c.h.b16 %v87
    %v741 = vunpack.c.l.b16 %v88
    %v742 = vunpack.c.l.b16 %v89
    %v743 = vunpack.c.h.b16 %v89
    %v744 = vunpack.c.l.b16 %v90
    %v745 = vunpack.c.l.b16 %v91
    %v746 = vunpack.c.h.b16 %v91
    %v747 = vunpack.c.l.b16 %v92
    %v748 = vunpack.c.l.b16 %v93
    %v749 = vunpack.c.h.b16 %v93
    %v750 = vunpack.c.l.b16 %v94
    %v751 = vunpack.c.l.b16 %v95
    %v752 = vunpack.c.h.b16 %v95
    %v753 = vunpack.c.l.b16 %v96
    %v754 = vunpack.c.l.b16 %v97
    %v755 = vunpack.c.h.b16 %v97
    %v756 = vunpack.c.l.b16 %v98
    %v757 = vunpack.c.l.b16 %v99
    %v758 = vunpack.c.h.b16 %v99
    %v759 = vunpack.c.l.b16 %v100
    %v760 = vunpack.c.l.b16 %v101
    %v761 = vunpack.c.h.b16 %v101
    %v762 = vunpack.c.l.b16 %v102
    %v763 = vunpack.c.l.b16 %v103
    %v764 = vunpack.c.h.b16 %v103
    %v765 = vunpack.c.l.b16 %v104
    %v766 = vunpack.c.l.b16 %v105
    %v767 = vunpack.c.h.b16 %v105
    %v768 = vunpack.c.l.b16 %v106
    %v769 = vunpack.c.l.b16 %v107
    %v770 = vunpack.c.h.b16 %v107
    %v771 = vunpack.c.l.b16 %v108
    %v772 = vunpack.c.l.b16 %v109
    %v773 = vunpack.c.h.b16 %v109
    %v774 = vunpack.c.l.b16 %v110
    %v775 = vunpack.c.l.b16 %v111
    %v776 = vunpack.c.h.b16 %v111
    %v777 = vunpack.c.l.b16 %v112
    %v778 = vpack.c.b16 %v733, %v730
    %v779 = vpack.c.b16 %v734, %v731
    %v780 = vpack.c.b16 %v735, %v732
    %v781 = vpack.c.b16 %v739, %v736
    %v782 = vpack.c.b16 %v740, %v737
    %v783 = vpack.c.b16 %v741, %v738
    %v784 = vpack.c.b16 %v745, %v742
    %v785 = vpack.c.b16 %v746, %v743
    %v786 = vpack.c.b16 %v747, %v744
    %v787 = vpack.c.b16 %v751, %v748
    %v788 = vpack.c.b16 %v752, %v749
    %v789 = vpack.c.b16 %v753, %v750
    %v790 = vpack.c.b16 %v757, %v754
    %v791 = vpack.c.b16 %v758, %v755
    %v792 = vpack.c.b16 %v759, %v756
    %v793 = vpack.c.b16 %v763, %v760
    %v794 = vpack.c.b16 %v764, %v761
    %v795 = vpack.c.b16 %v765, %v762
    %v796 = vpack.c.b16 %v769, %v766
    %v797 = vpack.c.b16 %v770, %v767
    %v798 = vpack.c.b16 %v771, %v768
    %v799 = vpack.c.b16 %v775, %v772
    %v800 = vpack.c.b16 %v776, %v773
    %v801 = vpack.c.b16 %v777, %v774
    %826 = vmatprep.subr.bf16.mxu0 %v779
    %827 = vmatpush1.bf16.msra.mxu0 %v778
    %828 = vmatprep.subr.bf16.mxu0 %v782
    %829 = vmatpush1.bf16.msra.mxu0 %v781
    %830 = vmatprep.subr.bf16.mxu0 %v785
    %831 = vmatpush1.bf16.msra.mxu0 %v784
    %832 = vmatprep.subr.bf16.mxu0 %v788
    %833 = vmatpush1.bf16.msra.mxu0 %v787
    %834 = vmatprep.subr.bf16.mxu0 %v791
    %835 = vmatpush1.bf16.msra.mxu0 %v790
    %836 = vmatprep.subr.bf16.mxu0 %v794
    %837 = vmatpush1.bf16.msra.mxu0 %v793
    %838 = vmatprep.subr.bf16.mxu0 %v797
    %839 = vmatpush1.bf16.msra.mxu0 %v796
    %840 = vmatprep.subr.bf16.mxu0 %v800
    %841 = vmatpush1.bf16.msra.mxu0 %v799
    %842 = vmatprep.subr.bf16.mxu0 0
    %843 = vmatpush1.bf16.msra.mxu0 0
    %844 = vmatprep.subr.bf16.mxu0 0
    %845 = vmatpush1.bf16.msra.mxu0 0
    %846 = vmatprep.subr.bf16.mxu0 0
    %847 = vmatpush1.bf16.msra.mxu0 0
    %848 = vmatprep.subr.bf16.mxu0 0
    %849 = vmatpush1.bf16.msra.mxu0 0
    %850 = vmatprep.subr.bf16.mxu0 0
    %851 = vmatpush1.bf16.msra.mxu0 0
    %852 = vmatprep.subr.bf16.mxu0 0
    %853 = vmatpush1.bf16.msra.mxu0 0
    %854 = vmatprep.subr.bf16.mxu0 0
    %855 = vmatpush1.bf16.msra.mxu0 0
    %856 = vmatprep.subr.bf16.mxu0 0
    %857 = vmatpush1.bf16.msra.mxu0 0
    %858 = vmatprep.mubr.bf16.mxu0 0
    %859 = vmatmul.mubr.bf16.gmra.mrb[0].mxu0 %v581
    %v860 = vpop.f32.mrb[0].mxu0
    %v861 = vadd.f32 %v182, %v860
    %v862 = vpop.f32.mrb[0].mxu0
    %v863 = vadd.f32 %v186, %v862
    %v864 = vpop.f32.mrb[0].mxu0
    %v865 = vpop.f32.mrb[0].mxu0
    %866 = vdwg.mxu0
    %867 = vmatprep.subr.bf16.mxu0 0
    %868 = vmatpush1.bf16.msra.mxu0 %v780
    %869 = vmatprep.subr.bf16.mxu0 0
    %870 = vmatpush1.bf16.msra.mxu0 %v783
    %871 = vmatprep.subr.bf16.mxu0 0
    %872 = vmatpush1.bf16.msra.mxu0 %v786
    %873 = vmatprep.subr.bf16.mxu0 0
    %874 = vmatpush1.bf16.msra.mxu0 %v789
    %875 = vmatprep.subr.bf16.mxu0 0
    %876 = vmatpush1.bf16.msra.mxu0 %v792
    %877 = vmatprep.subr.bf16.mxu0 0
    %878 = vmatpush1.bf16.msra.mxu0 %v795
    %879 = vmatprep.subr.bf16.mxu0 0
    %880 = vmatpush1.bf16.msra.mxu0 %v798
    %881 = vmatprep.subr.bf16.mxu0 0
    %882 = vmatpush1.bf16.msra.mxu0 %v801
    %883 = vmatprep.subr.bf16.mxu0 0
    %884 = vmatpush1.bf16.msra.mxu0 0
    %885 = vmatprep.subr.bf16.mxu0 0
    %886 = vmatpush1.bf16.msra.mxu0 0
    %887 = vmatprep.subr.bf16.mxu0 0
    %888 = vmatpush1.bf16.msra.mxu0 0
    %889 = vmatprep.subr.bf16.mxu0 0
    %890 = vmatpush1.bf16.msra.mxu0 0
    %891 = vmatprep.subr.bf16.mxu0 0
    %892 = vmatpush1.bf16.msra.mxu0 0
    %893 = vmatprep.subr.bf16.mxu0 0
    %894 = vmatpush1.bf16.msra.mxu0 0
    %895 = vmatprep.subr.bf16.mxu0 0
    %896 = vmatpush1.bf16.msra.mxu0 0
    %897 = vmatprep.subr.bf16.mxu0 0
    %898 = vmatpush1.bf16.msra.mxu0 0
    %899 = vmatprep.mubr.bf16.mxu0 0
    %900 = vmatmul.mubr.bf16.gmra.mrb[0].mxu0 %v581
    %v901 = vpop.f32.mrb[0].mxu0
    %v902 = vadd.f32 %v190, %v901
    %v903 = vpop.f32.mrb[0].mxu0
    %v904 = vpop.f32.mrb[0].mxu0
    %v905 = vpop.f32.mrb[0].mxu0
    %906 = vdwg.mxu0
    %v939 = vunpack.c.l.b16 %v145
    %v940 = vunpack.c.h.b16 %v145
    %v941 = vunpack.c.l.b16 %v146
    %v942 = vunpack.c.l.b16 %v147
    %v943 = vunpack.c.h.b16 %v147
    %v944 = vunpack.c.l.b16 %v148
    %v945 = vunpack.c.l.b16 %v149
    %v946 = vunpack.c.h.b16 %v149
    %v947 = vunpack.c.l.b16 %v150
    %v948 = vunpack.c.l.b16 %v151
    %v949 = vunpack.c.h.b16 %v151
    %v950 = vunpack.c.l.b16 %v152
    %v951 = vunpack.c.l.b16 %v153
    %v952 = vunpack.c.h.b16 %v153
    %v953 = vunpack.c.l.b16 %v154
    %v954 = vunpack.c.l.b16 %v155
    %v955 = vunpack.c.h.b16 %v155
    %v956 = vunpack.c.l.b16 %v156
    %v957 = vunpack.c.l.b16 %v157
    %v958 = vunpack.c.h.b16 %v157
    %v959 = vunpack.c.l.b16 %v158
    %v960 = vunpack.c.l.b16 %v159
    %v961 = vunpack.c.h.b16 %v159
    %v962 = vunpack.c.l.b16 %v160
    %v963 = vunpack.c.l.b16 %v161
    %v964 = vunpack.c.h.b16 %v161
    %v965 = vunpack.c.l.b16 %v162
    %v966 = vunpack.c.l.b16 %v163
    %v967 = vunpack.c.h.b16 %v163
    %v968 = vunpack.c.l.b16 %v164
    %v969 = vunpack.c.l.b16 %v165
    %v970 = vunpack.c.h.b16 %v165
    %v971 = vunpack.c.l.b16 %v166
    %v972 = vunpack.c.l.b16 %v167
    %v973 = vunpack.c.h.b16 %v167
    %v974 = vunpack.c.l.b16 %v168
    %v975 = vunpack.c.l.b16 %v169
    %v976 = vunpack.c.h.b16 %v169
    %v977 = vunpack.c.l.b16 %v170
    %v978 = vunpack.c.l.b16 %v171
    %v979 = vunpack.c.h.b16 %v171
    %v980 = vunpack.c.l.b16 %v172
    %v981 = vunpack.c.l.b16 %v173
    %v982 = vunpack.c.h.b16 %v173
    %v983 = vunpack.c.l.b16 %v174
    %v984 = vunpack.c.l.b16 %v175
    %v985 = vunpack.c.h.b16 %v175
    %v986 = vunpack.c.l.b16 %v176
    %v987 = vpack.c.b16 %v942, %v939
    %v988 = vpack.c.b16 %v943, %v940
    %v989 = vpack.c.b16 %v944, %v941
    %v990 = vpack.c.b16 %v948, %v945
    %v991 = vpack.c.b16 %v949, %v946
    %v992 = vpack.c.b16 %v950, %v947
    %v993 = vpack.c.b16 %v954, %v951
    %v994 = vpack.c.b16 %v955, %v952
    %v995 = vpack.c.b16 %v956, %v953
    %v996 = vpack.c.b16 %v960, %v957
    %v997 = vpack.c.b16 %v961, %v958
    %v998 = vpack.c.b16 %v962, %v959
    %v999 = vpack.c.b16 %v966, %v963
    %v1000 = vpack.c.b16 %v967, %v964
    %v1001 = vpack.c.b16 %v968, %v965
    %v1002 = vpack.c.b16 %v972, %v969
    %v1003 = vpack.c.b16 %v973, %v970
    %v1004 = vpack.c.b16 %v974, %v971
    %v1005 = vpack.c.b16 %v978, %v975
    %v1006 = vpack.c.b16 %v979, %v976
    %v1007 = vpack.c.b16 %v980, %v977
    %v1008 = vpack.c.b16 %v984, %v981
    %v1009 = vpack.c.b16 %v985, %v982
    %v1010 = vpack.c.b16 %v986, %v983
    %1035 = vmatprep.subr.bf16.mxu0 %v988
    %1036 = vmatpush1.bf16.msra.mxu0 %v987
    %1037 = vmatprep.subr.bf16.mxu0 %v991
    %1038 = vmatpush1.bf16.msra.mxu0 %v990
    %1039 = vmatprep.subr.bf16.mxu0 %v994
    %1040 = vmatpush1.bf16.msra.mxu0 %v993
    %1041 = vmatprep.subr.bf16.mxu0 %v997
    %1042 = vmatpush1.bf16.msra.mxu0 %v996
    %1043 = vmatprep.subr.bf16.mxu0 %v1000
    %1044 = vmatpush1.bf16.msra.mxu0 %v999
    %1045 = vmatprep.subr.bf16.mxu0 %v1003
    %1046 = vmatpush1.bf16.msra.mxu0 %v1002
    %1047 = vmatprep.subr.bf16.mxu0 %v1006
    %1048 = vmatpush1.bf16.msra.mxu0 %v1005
    %1049 = vmatprep.subr.bf16.mxu0 %v1009
    %1050 = vmatpush1.bf16.msra.mxu0 %v1008
    %1051 = vmatprep.subr.bf16.mxu0 0
    %1052 = vmatpush1.bf16.msra.mxu0 0
    %1053 = vmatprep.subr.bf16.mxu0 0
    %1054 = vmatpush1.bf16.msra.mxu0 0
    %1055 = vmatprep.subr.bf16.mxu0 0
    %1056 = vmatpush1.bf16.msra.mxu0 0
    %1057 = vmatprep.subr.bf16.mxu0 0
    %1058 = vmatpush1.bf16.msra.mxu0 0
    %1059 = vmatprep.subr.bf16.mxu0 0
    %1060 = vmatpush1.bf16.msra.mxu0 0
    %1061 = vmatprep.subr.bf16.mxu0 0
    %1062 = vmatpush1.bf16.msra.mxu0 0
    %1063 = vmatprep.subr.bf16.mxu0 0
    %1064 = vmatpush1.bf16.msra.mxu0 0
    %1065 = vmatprep.subr.bf16.mxu0 0
    %1066 = vmatpush1.bf16.msra.mxu0 0
    %1067 = vmatprep.mubr.bf16.mxu0 0
    %1068 = vmatmul.mubr.bf16.gmra.mrb[0].mxu0 0
    %v1069 = vpop.f32.mrb[0].mxu0
    %v1070 = vadd.f32 %v216, %v1069
    %v1071 = vpop.f32.mrb[0].mxu0
    %v1072 = vadd.f32 %v220, %v1071
    %v1073 = vpop.f32.mrb[0].mxu0
    %v1074 = vpop.f32.mrb[0].mxu0
    %1075 = vdwg.mxu0
    %1076 = vmatprep.subr.bf16.mxu0 0
    %1077 = vmatpush1.bf16.msra.mxu0 %v989
    %1078 = vmatprep.subr.bf16.mxu0 0
    %1079 = vmatpush1.bf16.msra.mxu0 %v992
    %1080 = vmatprep.subr.bf16.mxu0 0
    %1081 = vmatpush1.bf16.msra.mxu0 %v995
    %1082 = vmatprep.subr.bf16.mxu0 0
    %1083 = vmatpush1.bf16.msra.mxu0 %v998
    %1084 = vmatprep.subr.bf16.mxu0 0
    %1085 = vmatpush1.bf16.msra.mxu0 %v1001
    %1086 = vmatprep.subr.bf16.mxu0 0
    %1087 = vmatpush1.bf16.msra.mxu0 %v1004
    %1088 = vmatprep.subr.bf16.mxu0 0
    %1089 = vmatpush1.bf16.msra.mxu0 %v1007
    %1090 = vmatprep.subr.bf16.mxu0 0
    %1091 = vmatpush1.bf16.msra.mxu0 %v1010
    %1092 = vmatprep.subr.bf16.mxu0 0
    %1093 = vmatpush1.bf16.msra.mxu0 0
    %1094 = vmatprep.subr.bf16.mxu0 0
    %1095 = vmatpush1.bf16.msra.mxu0 0
    %1096 = vmatprep.subr.bf16.mxu0 0
    %1097 = vmatpush1.bf16.msra.mxu0 0
    %1098 = vmatprep.subr.bf16.mxu0 0
    %1099 = vmatpush1.bf16.msra.mxu0 0
    %1100 = vmatprep.subr.bf16.mxu0 0
    %1101 = vmatpush1.bf16.msra.mxu0 0
    %1102 = vmatprep.subr.bf16.mxu0 0
    %1103 = vmatpush1.bf16.msra.mxu0 0
    %1104 = vmatprep.subr.bf16.mxu0 0
    %1105 = vmatpush1.bf16.msra.mxu0 0
    %1106 = vmatprep.subr.bf16.mxu0 0
    %1107 = vmatpush1.bf16.msra.mxu0 0
    %1108 = vmatprep.mubr.bf16.mxu0 0
    %1109 = vmatmul.mubr.bf16.gmra.mrb[0].mxu0 0
    %v1110 = vpop.f32.mrb[0].mxu0
    %v1111 = vadd.f32 %v224, %v1110
    %v1112 = vpop.f32.mrb[0].mxu0
    %v1113 = vpop.f32.mrb[0].mxu0
    %v1114 = vpop.f32.mrb[0].mxu0
    %1115 = vdwg.mxu0
    %v1116 = vadd.f32 %v861, %v1070
    %v1117 = vadd.f32 %v863, %v1072
    %v1118 = vxor.u32 %v1116, 2147483648
    %v1119 = vxor.u32 %v1117, 2147483648
    %v1120 = vmul.f32 %v1118, 1.442695
    %v1121 = vpow.pop %v1120
    %v1122 = vmul.f32 %v1119, 1.442695
    %v1123 = vpow.pop %v1122
    %v1124 = vadd.f32 %v1121, 1.0
    %v1125 = vadd.f32 %v1123, 1.0
    %v1126 = vrcp.pop %v1124
    %v1127 = vmul.f32 1.0, %v1126
    %v1128 = vrcp.pop %v1125
    %v1129 = vmul.f32 1.0, %v1128
    %v1130 = vmul.f32 %v1127, %v1111
    %v1131 = vadd.f32 %v902, %v1130
    %v1132 = vtanh.pop %v1131
    %v1133 = vsub.f32 0.0, %v1132
    %v1134 = vmul.f32 %v1129, %v1133
    %v1135 = vadd.f32 %v1132, %v1134
    %v1136 = vpack.c.bf16 %v697, %v697
    %v1138 = vrot.slane %v1136, 1
    %1140 = vmatprep.subr.bf16.mxu0 %v433
    %1141 = vmatpush1.bf16.msra.mxu0 %v432
    %1142 = vmatprep.subr.bf16.mxu0 %v436
    %1143 = vmatpush1.bf16.msra.mxu0 %v435
    %1144 = vmatprep.subr.bf16.mxu0 %v439
    %1145 = vmatpush1.bf16.msra.mxu0 %v438
    %1146 = vmatprep.subr.bf16.mxu0 %v442
    %1147 = vmatpush1.bf16.msra.mxu0 %v441
    %1148 = vmatprep.subr.bf16.mxu0 %v445
    %1149 = vmatpush1.bf16.msra.mxu0 %v444
    %1150 = vmatprep.subr.bf16.mxu0 %v448
    %1151 = vmatpush1.bf16.msra.mxu0 %v447
    %1152 = vmatprep.subr.bf16.mxu0 %v451
    %1153 = vmatpush1.bf16.msra.mxu0 %v450
    %1154 = vmatprep.subr.bf16.mxu0 %v454
    %1155 = vmatpush1.bf16.msra.mxu0 %v453
    %1156 = vmatprep.subr.bf16.mxu0 0
    %1157 = vmatpush1.bf16.msra.mxu0 0
    %1158 = vmatprep.subr.bf16.mxu0 0
    %1159 = vmatpush1.bf16.msra.mxu0 0
    %1160 = vmatprep.subr.bf16.mxu0 0
    %1161 = vmatpush1.bf16.msra.mxu0 0
    %1162 = vmatprep.subr.bf16.mxu0 0
    %1163 = vmatpush1.bf16.msra.mxu0 0
    %1164 = vmatprep.subr.bf16.mxu0 0
    %1165 = vmatpush1.bf16.msra.mxu0 0
    %1166 = vmatprep.subr.bf16.mxu0 0
    %1167 = vmatpush1.bf16.msra.mxu0 0
    %1168 = vmatprep.subr.bf16.mxu0 0
    %1169 = vmatpush1.bf16.msra.mxu0 0
    %1170 = vmatprep.subr.bf16.mxu0 0
    %1171 = vmatpush1.bf16.msra.mxu0 0
    %1172 = vmatprep.mubr.bf16.mxu0 0
    %1173 = vmatmul.mubr.bf16.gmra.mrb[0].mxu0 %v1138
    %v1174 = vpop.f32.mrb[0].mxu0
    %v1175 = vadd.f32 %v199, %v1174
    %v1176 = vpop.f32.mrb[0].mxu0
    %v1177 = vadd.f32 %v203, %v1176
    %v1178 = vpop.f32.mrb[0].mxu0
    %v1179 = vpop.f32.mrb[0].mxu0
    %1180 = vdwg.mxu0
    %1181 = vmatprep.subr.bf16.mxu0 0
    %1182 = vmatpush1.bf16.msra.mxu0 %v434
    %1183 = vmatprep.subr.bf16.mxu0 0
    %1184 = vmatpush1.bf16.msra.mxu0 %v437
    %1185 = vmatprep.subr.bf16.mxu0 0
    %1186 = vmatpush1.bf16.msra.mxu0 %v440
    %1187 = vmatprep.subr.bf16.mxu0 0
    %1188 = vmatpush1.bf16.msra.mxu0 %v443
    %1189 = vmatprep.subr.bf16.mxu0 0
    %1190 = vmatpush1.bf16.msra.mxu0 %v446
    %1191 = vmatprep.subr.bf16.mxu0 0
    %1192 = vmatpush1.bf16.msra.mxu0 %v449
    %1193 = vmatprep.subr.bf16.mxu0 0
    %1194 = vmatpush1.bf16.msra.mxu0 %v452
    %1195 = vmatprep.subr.bf16.mxu0 0
    %1196 = vmatpush1.bf16.msra.mxu0 %v455
    %1197 = vmatprep.subr.bf16.mxu0 0
    %1198 = vmatpush1.bf16.msra.mxu0 0
    %1199 = vmatprep.subr.bf16.mxu0 0
    %1200 = vmatpush1.bf16.msra.mxu0 0
    %1201 = vmatprep.subr.bf16.mxu0 0
    %1202 = vmatpush1.bf16.msra.mxu0 0
    %1203 = vmatprep.subr.bf16.mxu0 0
    %1204 = vmatpush1.bf16.msra.mxu0 0
    %1205 = vmatprep.subr.bf16.mxu0 0
    %1206 = vmatpush1.bf16.msra.mxu0 0
    %1207 = vmatprep.subr.bf16.mxu0 0
    %1208 = vmatpush1.bf16.msra.mxu0 0
    %1209 = vmatprep.subr.bf16.mxu0 0
    %1210 = vmatpush1.bf16.msra.mxu0 0
    %1211 = vmatprep.subr.bf16.mxu0 0
    %1212 = vmatpush1.bf16.msra.mxu0 0
    %1213 = vmatprep.mubr.bf16.mxu0 0
    %1214 = vmatmul.mubr.bf16.gmra.mrb[0].mxu0 %v1138
    %v1215 = vpop.f32.mrb[0].mxu0
    %v1216 = vadd.f32 %v207, %v1215
    %v1217 = vpop.f32.mrb[0].mxu0
    %v1218 = vpop.f32.mrb[0].mxu0
    %v1219 = vpop.f32.mrb[0].mxu0
    %1220 = vdwg.mxu0
    %v1223 = vrot.slane %v1175, 4
    %v1224 = vrot.slane %v1177, 4
    %v1227 = vadd.f32 %v303, %v1223
    %v1228 = vadd.f32 %v305, %v1224
    %v1229 = vxor.u32 %v1227, 2147483648
    %v1230 = vxor.u32 %v1228, 2147483648
    %v1231 = vmul.f32 %v1229, 1.442695
    %v1232 = vpow.pop %v1231
    %v1233 = vmul.f32 %v1230, 1.442695
    %v1234 = vpow.pop %v1233
    %v1235 = vadd.f32 %v1232, 1.0
    %v1236 = vadd.f32 %v1234, 1.0
    %v1237 = vrcp.pop %v1235
    %v1238 = vmul.f32 1.0, %v1237
    %v1239 = vrcp.pop %v1236
    %v1240 = vmul.f32 1.0, %v1239
    %v1242 = vrot.slane %v1216, 4
    %v1244 = vmul.f32 %v1238, %v1242
    %v1245 = vadd.f32 %v346, %v1244
    %v1246 = vtanh.pop %v1245
    %v1248 = vrot.slane %v1246, 2
    %v1250 = vsub.f32 %v697, %v1248
    %v1252 = vrot.slane %v1250, 6
    %v1254 = vmul.f32 %v1240, %v1252
    %v1255 = vadd.f32 %v1246, %v1254
    %1256 = vmatprep.subr.bf16.mxu0 %v779
    %1257 = vmatpush1.bf16.msra.mxu0 %v778
    %1258 = vmatprep.subr.bf16.mxu0 %v782
    %1259 = vmatpush1.bf16.msra.mxu0 %v781
    %1260 = vmatprep.subr.bf16.mxu0 %v785
    %1261 = vmatpush1.bf16.msra.mxu0 %v784
    %1262 = vmatprep.subr.bf16.mxu0 %v788
    %1263 = vmatpush1.bf16.msra.mxu0 %v787
    %1264 = vmatprep.subr.bf16.mxu0 %v791
    %1265 = vmatpush1.bf16.msra.mxu0 %v790
    %1266 = vmatprep.subr.bf16.mxu0 %v794
    %1267 = vmatpush1.bf16.msra.mxu0 %v793
    %1268 = vmatprep.subr.bf16.mxu0 %v797
    %1269 = vmatpush1.bf16.msra.mxu0 %v796
    %1270 = vmatprep.subr.bf16.mxu0 %v800
    %1271 = vmatpush1.bf16.msra.mxu0 %v799
    %1272 = vmatprep.subr.bf16.mxu0 0
    %1273 = vmatpush1.bf16.msra.mxu0 0
    %1274 = vmatprep.subr.bf16.mxu0 0
    %1275 = vmatpush1.bf16.msra.mxu0 0
    %1276 = vmatprep.subr.bf16.mxu0 0
    %1277 = vmatpush1.bf16.msra.mxu0 0
    %1278 = vmatprep.subr.bf16.mxu0 0
    %1279 = vmatpush1.bf16.msra.mxu0 0
    %1280 = vmatprep.subr.bf16.mxu0 0
    %1281 = vmatpush1.bf16.msra.mxu0 0
    %1282 = vmatprep.subr.bf16.mxu0 0
    %1283 = vmatpush1.bf16.msra.mxu0 0
    %1284 = vmatprep.subr.bf16.mxu0 0
    %1285 = vmatpush1.bf16.msra.mxu0 0
    %1286 = vmatprep.subr.bf16.mxu0 0
    %1287 = vmatpush1.bf16.msra.mxu0 0
    %1288 = vmatprep.mubr.bf16.mxu0 0
    %1289 = vmatmul.mubr.bf16.gmra.mrb[0].mxu0 %v1138
    %v1290 = vpop.f32.mrb[0].mxu0
    %v1291 = vadd.f32 %v182, %v1290
    %v1292 = vpop.f32.mrb[0].mxu0
    %v1293 = vadd.f32 %v186, %v1292
    %v1294 = vpop.f32.mrb[0].mxu0
    %v1295 = vpop.f32.mrb[0].mxu0
    %1296 = vdwg.mxu0
    %1297 = vmatprep.subr.bf16.mxu0 0
    %1298 = vmatpush1.bf16.msra.mxu0 %v780
    %1299 = vmatprep.subr.bf16.mxu0 0
    %1300 = vmatpush1.bf16.msra.mxu0 %v783
    %1301 = vmatprep.subr.bf16.mxu0 0
    %1302 = vmatpush1.bf16.msra.mxu0 %v786
    %1303 = vmatprep.subr.bf16.mxu0 0
    %1304 = vmatpush1.bf16.msra.mxu0 %v789
    %1305 = vmatprep.subr.bf16.mxu0 0
    %1306 = vmatpush1.bf16.msra.mxu0 %v792
    %1307 = vmatprep.subr.bf16.mxu0 0
    %1308 = vmatpush1.bf16.msra.mxu0 %v795
    %1309 = vmatprep.subr.bf16.mxu0 0
    %1310 = vmatpush1.bf16.msra.mxu0 %v798
    %1311 = vmatprep.subr.bf16.mxu0 0
    %1312 = vmatpush1.bf16.msra.mxu0 %v801
    %1313 = vmatprep.subr.bf16.mxu0 0
    %1314 = vmatpush1.bf16.msra.mxu0 0
    %1315 = vmatprep.subr.bf16.mxu0 0
    %1316 = vmatpush1.bf16.msra.mxu0 0
    %1317 = vmatprep.subr.bf16.mxu0 0
    %1318 = vmatpush1.bf16.msra.mxu0 0
    %1319 = vmatprep.subr.bf16.mxu0 0
    %1320 = vmatpush1.bf16.msra.mxu0 0
    %1321 = vmatprep.subr.bf16.mxu0 0
    %1322 = vmatpush1.bf16.msra.mxu0 0
    %1323 = vmatprep.subr.bf16.mxu0 0
    %1324 = vmatpush1.bf16.msra.mxu0 0
    %1325 = vmatprep.subr.bf16.mxu0 0
    %1326 = vmatpush1.bf16.msra.mxu0 0
    %1327 = vmatprep.subr.bf16.mxu0 0
    %1328 = vmatpush1.bf16.msra.mxu0 0
    %1329 = vmatprep.mubr.bf16.mxu0 0
    %1330 = vmatmul.mubr.bf16.gmra.mrb[0].mxu0 %v1138
    %v1331 = vpop.f32.mrb[0].mxu0
    %v1332 = vadd.f32 %v190, %v1331
    %v1333 = vpop.f32.mrb[0].mxu0
    %v1334 = vpop.f32.mrb[0].mxu0
    %v1335 = vpop.f32.mrb[0].mxu0
    %1336 = vdwg.mxu0
    %v1337 = vpack.c.bf16 %v1135, %v1135
    %1338 = vmatprep.subr.bf16.mxu0 %v988
    %1339 = vmatpush1.bf16.msra.mxu0 %v987
    %1340 = vmatprep.subr.bf16.mxu0 %v991
    %1341 = vmatpush1.bf16.msra.mxu0 %v990
    %1342 = vmatprep.subr.bf16.mxu0 %v994
    %1343 = vmatpush1.bf16.msra.mxu0 %v993
    %1344 = vmatprep.subr.bf16.mxu0 %v997
    %1345 = vmatpush1.bf16.msra.mxu0 %v996
    %1346 = vmatprep.subr.bf16.mxu0 %v1000
    %1347 = vmatpush1.bf16.msra.mxu0 %v999
    %1348 = vmatprep.subr.bf16.mxu0 %v1003
    %1349 = vmatpush1.bf16.msra.mxu0 %v1002
    %1350 = vmatprep.subr.bf16.mxu0 %v1006
    %1351 = vmatpush1.bf16.msra.mxu0 %v1005
    %1352 = vmatprep.subr.bf16.mxu0 %v1009
    %1353 = vmatpush1.bf16.msra.mxu0 %v1008
    %1354 = vmatprep.subr.bf16.mxu0 0
    %1355 = vmatpush1.bf16.msra.mxu0 0
    %1356 = vmatprep.subr.bf16.mxu0 0
    %1357 = vmatpush1.bf16.msra.mxu0 0
    %1358 = vmatprep.subr.bf16.mxu0 0
    %1359 = vmatpush1.bf16.msra.mxu0 0
    %1360 = vmatprep.subr.bf16.mxu0 0
    %1361 = vmatpush1.bf16.msra.mxu0 0
    %1362 = vmatprep.subr.bf16.mxu0 0
    %1363 = vmatpush1.bf16.msra.mxu0 0
    %1364 = vmatprep.subr.bf16.mxu0 0
    %1365 = vmatpush1.bf16.msra.mxu0 0
    %1366 = vmatprep.subr.bf16.mxu0 0
    %1367 = vmatpush1.bf16.msra.mxu0 0
    %1368 = vmatprep.subr.bf16.mxu0 0
    %1369 = vmatpush1.bf16.msra.mxu0 0
    %1370 = vmatprep.mubr.bf16.mxu0 0
    %1371 = vmatmul.mubr.bf16.gmra.mrb[0].mxu0 %v1337
    %v1372 = vpop.f32.mrb[0].mxu0
    %v1373 = vadd.f32 %v216, %v1372
    %v1374 = vpop.f32.mrb[0].mxu0
    %v1375 = vadd.f32 %v220, %v1374
    %v1376 = vpop.f32.mrb[0].mxu0
    %v1377 = vpop.f32.mrb[0].mxu0
    %1378 = vdwg.mxu0
    %1379 = vmatprep.subr.bf16.mxu0 0
    %1380 = vmatpush1.bf16.msra.mxu0 %v989
    %1381 = vmatprep.subr.bf16.mxu0 0
    %1382 = vmatpush1.bf16.msra.mxu0 %v992
    %1383 = vmatprep.subr.bf16.mxu0 0
    %1384 = vmatpush1.bf16.msra.mxu0 %v995
    %1385 = vmatprep.subr.bf16.mxu0 0
    %1386 = vmatpush1.bf16.msra.mxu0 %v998
    %1387 = vmatprep.subr.bf16.mxu0 0
    %1388 = vmatpush1.bf16.msra.mxu0 %v1001
    %1389 = vmatprep.subr.bf16.mxu0 0
    %1390 = vmatpush1.bf16.msra.mxu0 %v1004
    %1391 = vmatprep.subr.bf16.mxu0 0
    %1392 = vmatpush1.bf16.msra.mxu0 %v1007
    %1393 = vmatprep.subr.bf16.mxu0 0
    %1394 = vmatpush1.bf16.msra.mxu0 %v1010
    %1395 = vmatprep.subr.bf16.mxu0 0
    %1396 = vmatpush1.bf16.msra.mxu0 0
    %1397 = vmatprep.subr.bf16.mxu0 0
    %1398 = vmatpush1.bf16.msra.mxu0 0
    %1399 = vmatprep.subr.bf16.mxu0 0
    %1400 = vmatpush1.bf16.msra.mxu0 0
    %1401 = vmatprep.subr.bf16.mxu0 0
    %1402 = vmatpush1.bf16.msra.mxu0 0
    %1403 = vmatprep.subr.bf16.mxu0 0
    %1404 = vmatpush1.bf16.msra.mxu0 0
    %1405 = vmatprep.subr.bf16.mxu0 0
    %1406 = vmatpush1.bf16.msra.mxu0 0
    %1407 = vmatprep.subr.bf16.mxu0 0
    %1408 = vmatpush1.bf16.msra.mxu0 0
    %1409 = vmatprep.subr.bf16.mxu0 0
    %1410 = vmatpush1.bf16.msra.mxu0 0
    %1411 = vmatprep.mubr.bf16.mxu0 0
    %1412 = vmatmul.mubr.bf16.gmra.mrb[0].mxu0 %v1337
    %v1413 = vpop.f32.mrb[0].mxu0
    %v1414 = vadd.f32 %v224, %v1413
    %v1415 = vpop.f32.mrb[0].mxu0
    %v1416 = vpop.f32.mrb[0].mxu0
    %v1417 = vpop.f32.mrb[0].mxu0
    %1418 = vdwg.mxu0
    %v1419 = vadd.f32 %v1291, %v1373
    %v1420 = vadd.f32 %v1293, %v1375
    %v1421 = vxor.u32 %v1419, 2147483648
    %v1422 = vxor.u32 %v1420, 2147483648
    %v1423 = vmul.f32 %v1421, 1.442695
    %v1424 = vpow.pop %v1423
    %v1425 = vmul.f32 %v1422, 1.442695
    %v1426 = vpow.pop %v1425
    %v1427 = vadd.f32 %v1424, 1.0
    %v1428 = vadd.f32 %v1426, 1.0
    %v1429 = vrcp.pop %v1427
    %v1430 = vmul.f32 1.0, %v1429
    %v1431 = vrcp.pop %v1428
    %v1432 = vmul.f32 1.0, %v1431
    %v1433 = vmul.f32 %v1430, %v1414
    %v1434 = vadd.f32 %v1332, %v1433
    %v1435 = vtanh.pop %v1434
    %v1436 = vsub.f32 %v1135, %v1435
    %v1437 = vmul.f32 %v1432, %v1436
    %v1438 = vadd.f32 %v1435, %v1437
    %v1439 = vpack.c.bf16 %v1255, %v1255
    %v1441 = vrot.slane %v1439, 2
    %1443 = vmatprep.subr.bf16.mxu0 %v433
    %1444 = vmatpush1.bf16.msra.mxu0 %v432
    %1445 = vmatprep.subr.bf16.mxu0 %v436
    %1446 = vmatpush1.bf16.msra.mxu0 %v435
    %1447 = vmatprep.subr.bf16.mxu0 %v439
    %1448 = vmatpush1.bf16.msra.mxu0 %v438
    %1449 = vmatprep.subr.bf16.mxu0 %v442
    %1450 = vmatpush1.bf16.msra.mxu0 %v441
    %1451 = vmatprep.subr.bf16.mxu0 %v445
    %1452 = vmatpush1.bf16.msra.mxu0 %v444
    %1453 = vmatprep.subr.bf16.mxu0 %v448
    %1454 = vmatpush1.bf16.msra.mxu0 %v447
    %1455 = vmatprep.subr.bf16.mxu0 %v451
    %1456 = vmatpush1.bf16.msra.mxu0 %v450
    %1457 = vmatprep.subr.bf16.mxu0 %v454
    %1458 = vmatpush1.bf16.msra.mxu0 %v453
    %1459 = vmatprep.subr.bf16.mxu0 0
    %1460 = vmatpush1.bf16.msra.mxu0 0
    %1461 = vmatprep.subr.bf16.mxu0 0
    %1462 = vmatpush1.bf16.msra.mxu0 0
    %1463 = vmatprep.subr.bf16.mxu0 0
    %1464 = vmatpush1.bf16.msra.mxu0 0
    %1465 = vmatprep.subr.bf16.mxu0 0
    %1466 = vmatpush1.bf16.msra.mxu0 0
    %1467 = vmatprep.subr.bf16.mxu0 0
    %1468 = vmatpush1.bf16.msra.mxu0 0
    %1469 = vmatprep.subr.bf16.mxu0 0
    %1470 = vmatpush1.bf16.msra.mxu0 0
    %1471 = vmatprep.subr.bf16.mxu0 0
    %1472 = vmatpush1.bf16.msra.mxu0 0
    %1473 = vmatprep.subr.bf16.mxu0 0
    %1474 = vmatpush1.bf16.msra.mxu0 0
    %1475 = vmatprep.mubr.bf16.mxu0 0
    %1476 = vmatmul.mubr.bf16.gmra.mrb[0].mxu0 %v1441
    %v1477 = vpop.f32.mrb[0].mxu0
    %v1478 = vadd.f32 %v199, %v1477
    %v1479 = vpop.f32.mrb[0].mxu0
    %v1480 = vadd.f32 %v203, %v1479
    %v1481 = vpop.f32.mrb[0].mxu0
    %v1482 = vpop.f32.mrb[0].mxu0
    %1483 = vdwg.mxu0
    %1484 = vmatprep.subr.bf16.mxu0 0
    %1485 = vmatpush1.bf16.msra.mxu0 %v434
    %1486 = vmatprep.subr.bf16.mxu0 0
    %1487 = vmatpush1.bf16.msra.mxu0 %v437
    %1488 = vmatprep.subr.bf16.mxu0 0
    %1489 = vmatpush1.bf16.msra.mxu0 %v440
    %1490 = vmatprep.subr.bf16.mxu0 0
    %1491 = vmatpush1.bf16.msra.mxu0 %v443
    %1492 = vmatprep.subr.bf16.mxu0 0
    %1493 = vmatpush1.bf16.msra.mxu0 %v446
    %1494 = vmatprep.subr.bf16.mxu0 0
    %1495 = vmatpush1.bf16.msra.mxu0 %v449
    %1496 = vmatprep.subr.bf16.mxu0 0
    %1497 = vmatpush1.bf16.msra.mxu0 %v452
    %1498 = vmatprep.subr.bf16.mxu0 0
    %1499 = vmatpush1.bf16.msra.mxu0 %v455
    %1500 = vmatprep.subr.bf16.mxu0 0
    %1501 = vmatpush1.bf16.msra.mxu0 0
    %1502 = vmatprep.subr.bf16.mxu0 0
    %1503 = vmatpush1.bf16.msra.mxu0 0
    %1504 = vmatprep.subr.bf16.mxu0 0
    %1505 = vmatpush1.bf16.msra.mxu0 0
    %1506 = vmatprep.subr.bf16.mxu0 0
    %1507 = vmatpush1.bf16.msra.mxu0 0
    %1508 = vmatprep.subr.bf16.mxu0 0
    %1509 = vmatpush1.bf16.msra.mxu0 0
    %1510 = vmatprep.subr.bf16.mxu0 0
    %1511 = vmatpush1.bf16.msra.mxu0 0
    %1512 = vmatprep.subr.bf16.mxu0 0
    %1513 = vmatpush1.bf16.msra.mxu0 0
    %1514 = vmatprep.subr.bf16.mxu0 0
    %1515 = vmatpush1.bf16.msra.mxu0 0
    %1516 = vmatprep.mubr.bf16.mxu0 0
    %1517 = vmatmul.mubr.bf16.gmra.mrb[0].mxu0 %v1441
    %v1518 = vpop.f32.mrb[0].mxu0
    %v1519 = vadd.f32 %v207, %v1518
    %v1520 = vpop.f32.mrb[0].mxu0
    %v1521 = vpop.f32.mrb[0].mxu0
    %v1522 = vpop.f32.mrb[0].mxu0
    %1523 = vdwg.mxu0
    %v1526 = vrot.slane %v1478, 2
    %v1527 = vrot.slane %v1480, 2
    %v1530 = vadd.f32 %v303, %v1526
    %v1531 = vadd.f32 %v305, %v1527
    %v1532 = vxor.u32 %v1530, 2147483648
    %v1533 = vxor.u32 %v1531, 2147483648
    %v1534 = vmul.f32 %v1532, 1.442695
    %v1535 = vpow.pop %v1534
    %v1536 = vmul.f32 %v1533, 1.442695
    %v1537 = vpow.pop %v1536
    %v1538 = vadd.f32 %v1535, 1.0
    %v1539 = vadd.f32 %v1537, 1.0
    %v1540 = vrcp.pop %v1538
    %v1541 = vmul.f32 1.0, %v1540
    %v1542 = vrcp.pop %v1539
    %v1543 = vmul.f32 1.0, %v1542
    %v1545 = vrot.slane %v1519, 2
    %v1547 = vmul.f32 %v1541, %v1545
    %v1548 = vadd.f32 %v346, %v1547
    %v1549 = vtanh.pop %v1548
    %v1551 = vrot.slane %v1549, 2
    %v1553 = vsub.f32 %v1255, %v1551
    %v1555 = vrot.slane %v1553, 6
    %v1557 = vmul.f32 %v1543, %v1555
    %v1558 = vadd.f32 %v1549, %v1557
    %1559 = vmatprep.subr.bf16.mxu0 %v779
    %1560 = vmatpush1.bf16.msra.mxu0 %v778
    %1561 = vmatprep.subr.bf16.mxu0 %v782
    %1562 = vmatpush1.bf16.msra.mxu0 %v781
    %1563 = vmatprep.subr.bf16.mxu0 %v785
    %1564 = vmatpush1.bf16.msra.mxu0 %v784
    %1565 = vmatprep.subr.bf16.mxu0 %v788
    %1566 = vmatpush1.bf16.msra.mxu0 %v787
    %1567 = vmatprep.subr.bf16.mxu0 %v791
    %1568 = vmatpush1.bf16.msra.mxu0 %v790
    %1569 = vmatprep.subr.bf16.mxu0 %v794
    %1570 = vmatpush1.bf16.msra.mxu0 %v793
    %1571 = vmatprep.subr.bf16.mxu0 %v797
    %1572 = vmatpush1.bf16.msra.mxu0 %v796
    %1573 = vmatprep.subr.bf16.mxu0 %v800
    %1574 = vmatpush1.bf16.msra.mxu0 %v799
    %1575 = vmatprep.subr.bf16.mxu0 0
    %1576 = vmatpush1.bf16.msra.mxu0 0
    %1577 = vmatprep.subr.bf16.mxu0 0
    %1578 = vmatpush1.bf16.msra.mxu0 0
    %1579 = vmatprep.subr.bf16.mxu0 0
    %1580 = vmatpush1.bf16.msra.mxu0 0
    %1581 = vmatprep.subr.bf16.mxu0 0
    %1582 = vmatpush1.bf16.msra.mxu0 0
    %1583 = vmatprep.subr.bf16.mxu0 0
    %1584 = vmatpush1.bf16.msra.mxu0 0
    %1585 = vmatprep.subr.bf16.mxu0 0
    %1586 = vmatpush1.bf16.msra.mxu0 0
    %1587 = vmatprep.subr.bf16.mxu0 0
    %1588 = vmatpush1.bf16.msra.mxu0 0
    %1589 = vmatprep.subr.bf16.mxu0 0
    %1590 = vmatpush1.bf16.msra.mxu0 0
    %1591 = vmatprep.mubr.bf16.mxu0 0
    %1592 = vmatmul.mubr.bf16.gmra.mrb[0].mxu0 %v1441
    %v1593 = vpop.f32.mrb[0].mxu0
    %v1594 = vadd.f32 %v182, %v1593
    %v1595 = vpop.f32.mrb[0].mxu0
    %v1596 = vadd.f32 %v186, %v1595
    %v1597 = vpop.f32.mrb[0].mxu0
    %v1598 = vpop.f32.mrb[0].mxu0
    %1599 = vdwg.mxu0
    %1600 = vmatprep.subr.bf16.mxu0 0
    %1601 = vmatpush1.bf16.msra.mxu0 %v780
    %1602 = vmatprep.subr.bf16.mxu0 0
    %1603 = vmatpush1.bf16.msra.mxu0 %v783
    %1604 = vmatprep.subr.bf16.mxu0 0
    %1605 = vmatpush1.bf16.msra.mxu0 %v786
    %1606 = vmatprep.subr.bf16.mxu0 0
    %1607 = vmatpush1.bf16.msra.mxu0 %v789
    %1608 = vmatprep.subr.bf16.mxu0 0
    %1609 = vmatpush1.bf16.msra.mxu0 %v792
    %1610 = vmatprep.subr.bf16.mxu0 0
    %1611 = vmatpush1.bf16.msra.mxu0 %v795
    %1612 = vmatprep.subr.bf16.mxu0 0
    %1613 = vmatpush1.bf16.msra.mxu0 %v798
    %1614 = vmatprep.subr.bf16.mxu0 0
    %1615 = vmatpush1.bf16.msra.mxu0 %v801
    %1616 = vmatprep.subr.bf16.mxu0 0
    %1617 = vmatpush1.bf16.msra.mxu0 0
    %1618 = vmatprep.subr.bf16.mxu0 0
    %1619 = vmatpush1.bf16.msra.mxu0 0
    %1620 = vmatprep.subr.bf16.mxu0 0
    %1621 = vmatpush1.bf16.msra.mxu0 0
    %1622 = vmatprep.subr.bf16.mxu0 0
    %1623 = vmatpush1.bf16.msra.mxu0 0
    %1624 = vmatprep.subr.bf16.mxu0 0
    %1625 = vmatpush1.bf16.msra.mxu0 0
    %1626 = vmatprep.subr.bf16.mxu0 0
    %1627 = vmatpush1.bf16.msra.mxu0 0
    %1628 = vmatprep.subr.bf16.mxu0 0
    %1629 = vmatpush1.bf16.msra.mxu0 0
    %1630 = vmatprep.subr.bf16.mxu0 0
    %1631 = vmatpush1.bf16.msra.mxu0 0
    %1632 = vmatprep.mubr.bf16.mxu0 0
    %1633 = vmatmul.mubr.bf16.gmra.mrb[0].mxu0 %v1441
    %v1634 = vpop.f32.mrb[0].mxu0
    %v1635 = vadd.f32 %v190, %v1634
    %v1636 = vpop.f32.mrb[0].mxu0
    %v1637 = vpop.f32.mrb[0].mxu0
    %v1638 = vpop.f32.mrb[0].mxu0
    %1639 = vdwg.mxu0
    %v1640 = vpack.c.bf16 %v1438, %v1438
    %1641 = vmatprep.subr.bf16.mxu0 %v988
    %1642 = vmatpush1.bf16.msra.mxu0 %v987
    %1643 = vmatprep.subr.bf16.mxu0 %v991
    %1644 = vmatpush1.bf16.msra.mxu0 %v990
    %1645 = vmatprep.subr.bf16.mxu0 %v994
    %1646 = vmatpush1.bf16.msra.mxu0 %v993
    %1647 = vmatprep.subr.bf16.mxu0 %v997
    %1648 = vmatpush1.bf16.msra.mxu0 %v996
    %1649 = vmatprep.subr.bf16.mxu0 %v1000
    %1650 = vmatpush1.bf16.msra.mxu0 %v999
    %1651 = vmatprep.subr.bf16.mxu0 %v1003
    %1652 = vmatpush1.bf16.msra.mxu0 %v1002
    %1653 = vmatprep.subr.bf16.mxu0 %v1006
    %1654 = vmatpush1.bf16.msra.mxu0 %v1005
    %1655 = vmatprep.subr.bf16.mxu0 %v1009
    %1656 = vmatpush1.bf16.msra.mxu0 %v1008
    %1657 = vmatprep.subr.bf16.mxu0 0
    %1658 = vmatpush1.bf16.msra.mxu0 0
    %1659 = vmatprep.subr.bf16.mxu0 0
    %1660 = vmatpush1.bf16.msra.mxu0 0
    %1661 = vmatprep.subr.bf16.mxu0 0
    %1662 = vmatpush1.bf16.msra.mxu0 0
    %1663 = vmatprep.subr.bf16.mxu0 0
    %1664 = vmatpush1.bf16.msra.mxu0 0
    %1665 = vmatprep.subr.bf16.mxu0 0
    %1666 = vmatpush1.bf16.msra.mxu0 0
    %1667 = vmatprep.subr.bf16.mxu0 0
    %1668 = vmatpush1.bf16.msra.mxu0 0
    %1669 = vmatprep.subr.bf16.mxu0 0
    %1670 = vmatpush1.bf16.msra.mxu0 0
    %1671 = vmatprep.subr.bf16.mxu0 0
    %1672 = vmatpush1.bf16.msra.mxu0 0
    %1673 = vmatprep.mubr.bf16.mxu0 0
    %1674 = vmatmul.mubr.bf16.gmra.mrb[0].mxu0 %v1640
    %v1675 = vpop.f32.mrb[0].mxu0
    %v1676 = vadd.f32 %v216, %v1675
    %v1677 = vpop.f32.mrb[0].mxu0
    %v1678 = vadd.f32 %v220, %v1677
    %v1679 = vpop.f32.mrb[0].mxu0
    %v1680 = vpop.f32.mrb[0].mxu0
    %1681 = vdwg.mxu0
    %1682 = vmatprep.subr.bf16.mxu0 0
    %1683 = vmatpush1.bf16.msra.mxu0 %v989
    %1684 = vmatprep.subr.bf16.mxu0 0
    %1685 = vmatpush1.bf16.msra.mxu0 %v992
    %1686 = vmatprep.subr.bf16.mxu0 0
    %1687 = vmatpush1.bf16.msra.mxu0 %v995
    %1688 = vmatprep.subr.bf16.mxu0 0
    %1689 = vmatpush1.bf16.msra.mxu0 %v998
    %1690 = vmatprep.subr.bf16.mxu0 0
    %1691 = vmatpush1.bf16.msra.mxu0 %v1001
    %1692 = vmatprep.subr.bf16.mxu0 0
    %1693 = vmatpush1.bf16.msra.mxu0 %v1004
    %1694 = vmatprep.subr.bf16.mxu0 0
    %1695 = vmatpush1.bf16.msra.mxu0 %v1007
    %1696 = vmatprep.subr.bf16.mxu0 0
    %1697 = vmatpush1.bf16.msra.mxu0 %v1010
    %1698 = vmatprep.subr.bf16.mxu0 0
    %1699 = vmatpush1.bf16.msra.mxu0 0
    %1700 = vmatprep.subr.bf16.mxu0 0
    %1701 = vmatpush1.bf16.msra.mxu0 0
    %1702 = vmatprep.subr.bf16.mxu0 0
    %1703 = vmatpush1.bf16.msra.mxu0 0
    %1704 = vmatprep.subr.bf16.mxu0 0
    %1705 = vmatpush1.bf16.msra.mxu0 0
    %1706 = vmatprep.subr.bf16.mxu0 0
    %1707 = vmatpush1.bf16.msra.mxu0 0
    %1708 = vmatprep.subr.bf16.mxu0 0
    %1709 = vmatpush1.bf16.msra.mxu0 0
    %1710 = vmatprep.subr.bf16.mxu0 0
    %1711 = vmatpush1.bf16.msra.mxu0 0
    %1712 = vmatprep.subr.bf16.mxu0 0
    %1713 = vmatpush1.bf16.msra.mxu0 0
    %1714 = vmatprep.mubr.bf16.mxu0 0
    %1715 = vmatmul.mubr.bf16.gmra.mrb[0].mxu0 %v1640
    %v1716 = vpop.f32.mrb[0].mxu0
    %v1717 = vadd.f32 %v224, %v1716
    %v1718 = vpop.f32.mrb[0].mxu0
    %v1719 = vpop.f32.mrb[0].mxu0
    %v1720 = vpop.f32.mrb[0].mxu0
    %1721 = vdwg.mxu0
    %v1722 = vadd.f32 %v1594, %v1676
    %v1723 = vadd.f32 %v1596, %v1678
    %v1724 = vxor.u32 %v1722, 2147483648
    %v1725 = vxor.u32 %v1723, 2147483648
    %v1726 = vmul.f32 %v1724, 1.442695
    %v1727 = vpow.pop %v1726
    %v1728 = vmul.f32 %v1725, 1.442695
    %v1729 = vpow.pop %v1728
    %v1730 = vadd.f32 %v1727, 1.0
    %v1731 = vadd.f32 %v1729, 1.0
    %v1732 = vrcp.pop %v1730
    %v1733 = vmul.f32 1.0, %v1732
    %v1734 = vrcp.pop %v1731
    %v1735 = vmul.f32 1.0, %v1734
    %v1736 = vmul.f32 %v1733, %v1717
    %v1737 = vadd.f32 %v1635, %v1736
    %v1738 = vtanh.pop %v1737
    %v1739 = vsub.f32 %v1438, %v1738
    %v1740 = vmul.f32 %v1735, %v1739
    %v1741 = vadd.f32 %v1738, %v1740
    %v1742 = vpack.c.bf16 %v1558, %v1558
    %v1744 = vrot.slane %v1742, 3
    %1746 = vmatprep.subr.bf16.mxu0 %v433
    %1747 = vmatpush1.bf16.msra.mxu0 %v432
    %1748 = vmatprep.subr.bf16.mxu0 %v436
    %1749 = vmatpush1.bf16.msra.mxu0 %v435
    %1750 = vmatprep.subr.bf16.mxu0 %v439
    %1751 = vmatpush1.bf16.msra.mxu0 %v438
    %1752 = vmatprep.subr.bf16.mxu0 %v442
    %1753 = vmatpush1.bf16.msra.mxu0 %v441
    %1754 = vmatprep.subr.bf16.mxu0 %v445
    %1755 = vmatpush1.bf16.msra.mxu0 %v444
    %1756 = vmatprep.subr.bf16.mxu0 %v448
    %1757 = vmatpush1.bf16.msra.mxu0 %v447
    %1758 = vmatprep.subr.bf16.mxu0 %v451
    %1759 = vmatpush1.bf16.msra.mxu0 %v450
    %1760 = vmatprep.subr.bf16.mxu0 %v454
    %1761 = vmatpush1.bf16.msra.mxu0 %v453
    %1762 = vmatprep.subr.bf16.mxu0 0
    %1763 = vmatpush1.bf16.msra.mxu0 0
    %1764 = vmatprep.subr.bf16.mxu0 0
    %1765 = vmatpush1.bf16.msra.mxu0 0
    %1766 = vmatprep.subr.bf16.mxu0 0
    %1767 = vmatpush1.bf16.msra.mxu0 0
    %1768 = vmatprep.subr.bf16.mxu0 0
    %1769 = vmatpush1.bf16.msra.mxu0 0
    %1770 = vmatprep.subr.bf16.mxu0 0
    %1771 = vmatpush1.bf16.msra.mxu0 0
    %1772 = vmatprep.subr.bf16.mxu0 0
    %1773 = vmatpush1.bf16.msra.mxu0 0
    %1774 = vmatprep.subr.bf16.mxu0 0
    %1775 = vmatpush1.bf16.msra.mxu0 0
    %1776 = vmatprep.subr.bf16.mxu0 0
    %1777 = vmatpush1.bf16.msra.mxu0 0
    %1778 = vmatprep.mubr.bf16.mxu0 0
    %1779 = vmatmul.mubr.bf16.gmra.mrb[0].mxu0 %v1744
    %v1780 = vpop.f32.mrb[0].mxu0
    %v1781 = vadd.f32 %v199, %v1780
    %v1782 = vpop.f32.mrb[0].mxu0
    %v1783 = vadd.f32 %v203, %v1782
    %v1784 = vpop.f32.mrb[0].mxu0
    %v1785 = vpop.f32.mrb[0].mxu0
    %1786 = vdwg.mxu0
    %1787 = vmatprep.subr.bf16.mxu0 0
    %1788 = vmatpush1.bf16.msra.mxu0 %v434
    %1789 = vmatprep.subr.bf16.mxu0 0
    %1790 = vmatpush1.bf16.msra.mxu0 %v437
    %1791 = vmatprep.subr.bf16.mxu0 0
    %1792 = vmatpush1.bf16.msra.mxu0 %v440
    %1793 = vmatprep.subr.bf16.mxu0 0
    %1794 = vmatpush1.bf16.msra.mxu0 %v443
    %1795 = vmatprep.subr.bf16.mxu0 0
    %1796 = vmatpush1.bf16.msra.mxu0 %v446
    %1797 = vmatprep.subr.bf16.mxu0 0
    %1798 = vmatpush1.bf16.msra.mxu0 %v449
    %1799 = vmatprep.subr.bf16.mxu0 0
    %1800 = vmatpush1.bf16.msra.mxu0 %v452
    %1801 = vmatprep.subr.bf16.mxu0 0
    %1802 = vmatpush1.bf16.msra.mxu0 %v455
    %1803 = vmatprep.subr.bf16.mxu0 0
    %1804 = vmatpush1.bf16.msra.mxu0 0
    %1805 = vmatprep.subr.bf16.mxu0 0
    %1806 = vmatpush1.bf16.msra.mxu0 0
    %1807 = vmatprep.subr.bf16.mxu0 0
    %1808 = vmatpush1.bf16.msra.mxu0 0
    %1809 = vmatprep.subr.bf16.mxu0 0
    %1810 = vmatpush1.bf16.msra.mxu0 0
    %1811 = vmatprep.subr.bf16.mxu0 0
    %1812 = vmatpush1.bf16.msra.mxu0 0
    %1813 = vmatprep.subr.bf16.mxu0 0
    %1814 = vmatpush1.bf16.msra.mxu0 0
    %1815 = vmatprep.subr.bf16.mxu0 0
    %1816 = vmatpush1.bf16.msra.mxu0 0
    %1817 = vmatprep.subr.bf16.mxu0 0
    %1818 = vmatpush1.bf16.msra.mxu0 0
    %1819 = vmatprep.mubr.bf16.mxu0 0
    %1820 = vmatmul.mubr.bf16.gmra.mrb[0].mxu0 %v1744
    %v1821 = vpop.f32.mrb[0].mxu0
    %v1822 = vadd.f32 %v207, %v1821
    %v1823 = vpop.f32.mrb[0].mxu0
    %v1824 = vpop.f32.mrb[0].mxu0
    %v1825 = vpop.f32.mrb[0].mxu0
    %1826 = vdwg.mxu0
    %v1827 = vadd.f32 %v307, %v1781
    %v1828 = vadd.f32 %v309, %v1783
    %v1829 = vxor.u32 %v1827, 2147483648
    %v1830 = vxor.u32 %v1828, 2147483648
    %v1831 = vmul.f32 %v1829, 1.442695
    %v1832 = vpow.pop %v1831
    %v1833 = vmul.f32 %v1830, 1.442695
    %v1834 = vpow.pop %v1833
    %v1835 = vadd.f32 %v1832, 1.0
    %v1836 = vadd.f32 %v1834, 1.0
    %v1837 = vrcp.pop %v1835
    %v1838 = vmul.f32 1.0, %v1837
    %v1839 = vrcp.pop %v1836
    %v1840 = vmul.f32 1.0, %v1839
    %v1841 = vmul.f32 %v1838, %v1822
    %v1842 = vadd.f32 %v349, %v1841
    %v1843 = vtanh.pop %v1842
    %v1845 = vrot.slane %v1843, 2
    %v1847 = vsub.f32 %v1558, %v1845
    %v1849 = vrot.slane %v1847, 6
    %v1851 = vmul.f32 %v1840, %v1849
    %v1852 = vadd.f32 %v1843, %v1851
    %1853 = vmatprep.subr.bf16.mxu0 %v779
    %1854 = vmatpush1.bf16.msra.mxu0 %v778
    %1855 = vmatprep.subr.bf16.mxu0 %v782
    %1856 = vmatpush1.bf16.msra.mxu0 %v781
    %1857 = vmatprep.subr.bf16.mxu0 %v785
    %1858 = vmatpush1.bf16.msra.mxu0 %v784
    %1859 = vmatprep.subr.bf16.mxu0 %v788
    %1860 = vmatpush1.bf16.msra.mxu0 %v787
    %1861 = vmatprep.subr.bf16.mxu0 %v791
    %1862 = vmatpush1.bf16.msra.mxu0 %v790
    %1863 = vmatprep.subr.bf16.mxu0 %v794
    %1864 = vmatpush1.bf16.msra.mxu0 %v793
    %1865 = vmatprep.subr.bf16.mxu0 %v797
    %1866 = vmatpush1.bf16.msra.mxu0 %v796
    %1867 = vmatprep.subr.bf16.mxu0 %v800
    %1868 = vmatpush1.bf16.msra.mxu0 %v799
    %1869 = vmatprep.subr.bf16.mxu0 0
    %1870 = vmatpush1.bf16.msra.mxu0 0
    %1871 = vmatprep.subr.bf16.mxu0 0
    %1872 = vmatpush1.bf16.msra.mxu0 0
    %1873 = vmatprep.subr.bf16.mxu0 0
    %1874 = vmatpush1.bf16.msra.mxu0 0
    %1875 = vmatprep.subr.bf16.mxu0 0
    %1876 = vmatpush1.bf16.msra.mxu0 0
    %1877 = vmatprep.subr.bf16.mxu0 0
    %1878 = vmatpush1.bf16.msra.mxu0 0
    %1879 = vmatprep.subr.bf16.mxu0 0
    %1880 = vmatpush1.bf16.msra.mxu0 0
    %1881 = vmatprep.subr.bf16.mxu0 0
    %1882 = vmatpush1.bf16.msra.mxu0 0
    %1883 = vmatprep.subr.bf16.mxu0 0
    %1884 = vmatpush1.bf16.msra.mxu0 0
    %1885 = vmatprep.mubr.bf16.mxu0 0
    %1886 = vmatmul.mubr.bf16.gmra.mrb[0].mxu0 %v1744
    %v1887 = vpop.f32.mrb[0].mxu0
    %v1888 = vadd.f32 %v182, %v1887
    %v1889 = vpop.f32.mrb[0].mxu0
    %v1890 = vadd.f32 %v186, %v1889
    %v1891 = vpop.f32.mrb[0].mxu0
    %v1892 = vpop.f32.mrb[0].mxu0
    %1893 = vdwg.mxu0
    %1894 = vmatprep.subr.bf16.mxu0 0
    %1895 = vmatpush1.bf16.msra.mxu0 %v780
    %1896 = vmatprep.subr.bf16.mxu0 0
    %1897 = vmatpush1.bf16.msra.mxu0 %v783
    %1898 = vmatprep.subr.bf16.mxu0 0
    %1899 = vmatpush1.bf16.msra.mxu0 %v786
    %1900 = vmatprep.subr.bf16.mxu0 0
    %1901 = vmatpush1.bf16.msra.mxu0 %v789
    %1902 = vmatprep.subr.bf16.mxu0 0
    %1903 = vmatpush1.bf16.msra.mxu0 %v792
    %1904 = vmatprep.subr.bf16.mxu0 0
    %1905 = vmatpush1.bf16.msra.mxu0 %v795
    %1906 = vmatprep.subr.bf16.mxu0 0
    %1907 = vmatpush1.bf16.msra.mxu0 %v798
    %1908 = vmatprep.subr.bf16.mxu0 0
    %1909 = vmatpush1.bf16.msra.mxu0 %v801
    %1910 = vmatprep.subr.bf16.mxu0 0
    %1911 = vmatpush1.bf16.msra.mxu0 0
    %1912 = vmatprep.subr.bf16.mxu0 0
    %1913 = vmatpush1.bf16.msra.mxu0 0
    %1914 = vmatprep.subr.bf16.mxu0 0
    %1915 = vmatpush1.bf16.msra.mxu0 0
    %1916 = vmatprep.subr.bf16.mxu0 0
    %1917 = vmatpush1.bf16.msra.mxu0 0
    %1918 = vmatprep.subr.bf16.mxu0 0
    %1919 = vmatpush1.bf16.msra.mxu0 0
    %1920 = vmatprep.subr.bf16.mxu0 0
    %1921 = vmatpush1.bf16.msra.mxu0 0
    %1922 = vmatprep.subr.bf16.mxu0 0
    %1923 = vmatpush1.bf16.msra.mxu0 0
    %1924 = vmatprep.subr.bf16.mxu0 0
    %1925 = vmatpush1.bf16.msra.mxu0 0
    %1926 = vmatprep.mubr.bf16.mxu0 0
    %1927 = vmatmul.mubr.bf16.gmra.mrb[0].mxu0 %v1744
    %v1928 = vpop.f32.mrb[0].mxu0
    %v1929 = vadd.f32 %v190, %v1928
    %v1930 = vpop.f32.mrb[0].mxu0
    %v1931 = vpop.f32.mrb[0].mxu0
    %v1932 = vpop.f32.mrb[0].mxu0
    %1933 = vdwg.mxu0
    %v1934 = vpack.c.bf16 %v1741, %v1741
    %1935 = vmatprep.subr.bf16.mxu0 %v988
    %1936 = vmatpush1.bf16.msra.mxu0 %v987
    %1937 = vmatprep.subr.bf16.mxu0 %v991
    %1938 = vmatpush1.bf16.msra.mxu0 %v990
    %1939 = vmatprep.subr.bf16.mxu0 %v994
    %1940 = vmatpush1.bf16.msra.mxu0 %v993
    %1941 = vmatprep.subr.bf16.mxu0 %v997
    %1942 = vmatpush1.bf16.msra.mxu0 %v996
    %1943 = vmatprep.subr.bf16.mxu0 %v1000
    %1944 = vmatpush1.bf16.msra.mxu0 %v999
    %1945 = vmatprep.subr.bf16.mxu0 %v1003
    %1946 = vmatpush1.bf16.msra.mxu0 %v1002
    %1947 = vmatprep.subr.bf16.mxu0 %v1006
    %1948 = vmatpush1.bf16.msra.mxu0 %v1005
    %1949 = vmatprep.subr.bf16.mxu0 %v1009
    %1950 = vmatpush1.bf16.msra.mxu0 %v1008
    %1951 = vmatprep.subr.bf16.mxu0 0
    %1952 = vmatpush1.bf16.msra.mxu0 0
    %1953 = vmatprep.subr.bf16.mxu0 0
    %1954 = vmatpush1.bf16.msra.mxu0 0
    %1955 = vmatprep.subr.bf16.mxu0 0
    %1956 = vmatpush1.bf16.msra.mxu0 0
    %1957 = vmatprep.subr.bf16.mxu0 0
    %1958 = vmatpush1.bf16.msra.mxu0 0
    %1959 = vmatprep.subr.bf16.mxu0 0
    %1960 = vmatpush1.bf16.msra.mxu0 0
    %1961 = vmatprep.subr.bf16.mxu0 0
    %1962 = vmatpush1.bf16.msra.mxu0 0
    %1963 = vmatprep.subr.bf16.mxu0 0
    %1964 = vmatpush1.bf16.msra.mxu0 0
    %1965 = vmatprep.subr.bf16.mxu0 0
    %1966 = vmatpush1.bf16.msra.mxu0 0
    %1967 = vmatprep.mubr.bf16.mxu0 0
    %1968 = vmatmul.mubr.bf16.gmra.mrb[0].mxu0 %v1934
    %v1969 = vpop.f32.mrb[0].mxu0
    %v1970 = vadd.f32 %v216, %v1969
    %v1971 = vpop.f32.mrb[0].mxu0
    %v1972 = vadd.f32 %v220, %v1971
    %v1973 = vpop.f32.mrb[0].mxu0
    %v1974 = vpop.f32.mrb[0].mxu0
    %1975 = vdwg.mxu0
    %1976 = vmatprep.subr.bf16.mxu0 0
    %1977 = vmatpush1.bf16.msra.mxu0 %v989
    %1978 = vmatprep.subr.bf16.mxu0 0
    %1979 = vmatpush1.bf16.msra.mxu0 %v992
    %1980 = vmatprep.subr.bf16.mxu0 0
    %1981 = vmatpush1.bf16.msra.mxu0 %v995
    %1982 = vmatprep.subr.bf16.mxu0 0
    %1983 = vmatpush1.bf16.msra.mxu0 %v998
    %1984 = vmatprep.subr.bf16.mxu0 0
    %1985 = vmatpush1.bf16.msra.mxu0 %v1001
    %1986 = vmatprep.subr.bf16.mxu0 0
    %1987 = vmatpush1.bf16.msra.mxu0 %v1004
    %1988 = vmatprep.subr.bf16.mxu0 0
    %1989 = vmatpush1.bf16.msra.mxu0 %v1007
    %1990 = vmatprep.subr.bf16.mxu0 0
    %1991 = vmatpush1.bf16.msra.mxu0 %v1010
    %1992 = vmatprep.subr.bf16.mxu0 0
    %1993 = vmatpush1.bf16.msra.mxu0 0
    %1994 = vmatprep.subr.bf16.mxu0 0
    %1995 = vmatpush1.bf16.msra.mxu0 0
    %1996 = vmatprep.subr.bf16.mxu0 0
    %1997 = vmatpush1.bf16.msra.mxu0 0
    %1998 = vmatprep.subr.bf16.mxu0 0
    %1999 = vmatpush1.bf16.msra.mxu0 0
    %2000 = vmatprep.subr.bf16.mxu0 0
    %2001 = vmatpush1.bf16.msra.mxu0 0
    %2002 = vmatprep.subr.bf16.mxu0 0
    %2003 = vmatpush1.bf16.msra.mxu0 0
    %2004 = vmatprep.subr.bf16.mxu0 0
    %2005 = vmatpush1.bf16.msra.mxu0 0
    %2006 = vmatprep.subr.bf16.mxu0 0
    %2007 = vmatpush1.bf16.msra.mxu0 0
    %2008 = vmatprep.mubr.bf16.mxu0 0
    %2009 = vmatmul.mubr.bf16.gmra.mrb[0].mxu0 %v1934
    %v2010 = vpop.f32.mrb[0].mxu0
    %v2011 = vadd.f32 %v224, %v2010
    %v2012 = vpop.f32.mrb[0].mxu0
    %v2013 = vpop.f32.mrb[0].mxu0
    %v2014 = vpop.f32.mrb[0].mxu0
    %2015 = vdwg.mxu0
    %v2016 = vadd.f32 %v1888, %v1970
    %v2017 = vadd.f32 %v1890, %v1972
    %v2018 = vxor.u32 %v2016, 2147483648
    %v2019 = vxor.u32 %v2017, 2147483648
    %v2020 = vmul.f32 %v2018, 1.442695
    %v2021 = vpow.pop %v2020
    %v2022 = vmul.f32 %v2019, 1.442695
    %v2023 = vpow.pop %v2022
    %v2024 = vadd.f32 %v2021, 1.0
    %v2025 = vadd.f32 %v2023, 1.0
    %v2026 = vrcp.pop %v2024
    %v2027 = vmul.f32 1.0, %v2026
    %v2028 = vrcp.pop %v2025
    %v2029 = vmul.f32 1.0, %v2028
    %v2030 = vmul.f32 %v2027, %v2011
    %v2031 = vadd.f32 %v1929, %v2030
    %v2032 = vtanh.pop %v2031
    %v2033 = vsub.f32 %v1741, %v2032
    %v2034 = vmul.f32 %v2029, %v2033
    %v2035 = vadd.f32 %v2032, %v2034
    %v2036 = vpack.c.bf16 %v1852, %v1852
    %2037 = vmatprep.subr.bf16.mxu0 %v433
    %2038 = vmatpush1.bf16.msra.mxu0 %v432
    %2039 = vmatprep.subr.bf16.mxu0 %v436
    %2040 = vmatpush1.bf16.msra.mxu0 %v435
    %2041 = vmatprep.subr.bf16.mxu0 %v439
    %2042 = vmatpush1.bf16.msra.mxu0 %v438
    %2043 = vmatprep.subr.bf16.mxu0 %v442
    %2044 = vmatpush1.bf16.msra.mxu0 %v441
    %2045 = vmatprep.subr.bf16.mxu0 %v445
    %2046 = vmatpush1.bf16.msra.mxu0 %v444
    %2047 = vmatprep.subr.bf16.mxu0 %v448
    %2048 = vmatpush1.bf16.msra.mxu0 %v447
    %2049 = vmatprep.subr.bf16.mxu0 %v451
    %2050 = vmatpush1.bf16.msra.mxu0 %v450
    %2051 = vmatprep.subr.bf16.mxu0 %v454
    %2052 = vmatpush1.bf16.msra.mxu0 %v453
    %2053 = vmatprep.subr.bf16.mxu0 0
    %2054 = vmatpush1.bf16.msra.mxu0 0
    %2055 = vmatprep.subr.bf16.mxu0 0
    %2056 = vmatpush1.bf16.msra.mxu0 0
    %2057 = vmatprep.subr.bf16.mxu0 0
    %2058 = vmatpush1.bf16.msra.mxu0 0
    %2059 = vmatprep.subr.bf16.mxu0 0
    %2060 = vmatpush1.bf16.msra.mxu0 0
    %2061 = vmatprep.subr.bf16.mxu0 0
    %2062 = vmatpush1.bf16.msra.mxu0 0
    %2063 = vmatprep.subr.bf16.mxu0 0
    %2064 = vmatpush1.bf16.msra.mxu0 0
    %2065 = vmatprep.subr.bf16.mxu0 0
    %2066 = vmatpush1.bf16.msra.mxu0 0
    %2067 = vmatprep.subr.bf16.mxu0 0
    %2068 = vmatpush1.bf16.msra.mxu0 0
    %2069 = vmatprep.mubr.bf16.mxu0 0
    %2070 = vmatmul.mubr.bf16.gmra.mrb[0].mxu0 %v2036
    %v2071 = vpop.f32.mrb[0].mxu0
    %v2072 = vadd.f32 %v199, %v2071
    %v2073 = vpop.f32.mrb[0].mxu0
    %v2074 = vadd.f32 %v203, %v2073
    %v2075 = vpop.f32.mrb[0].mxu0
    %v2076 = vpop.f32.mrb[0].mxu0
    %2077 = vdwg.mxu0
    %2078 = vmatprep.subr.bf16.mxu0 0
    %2079 = vmatpush1.bf16.msra.mxu0 %v434
    %2080 = vmatprep.subr.bf16.mxu0 0
    %2081 = vmatpush1.bf16.msra.mxu0 %v437
    %2082 = vmatprep.subr.bf16.mxu0 0
    %2083 = vmatpush1.bf16.msra.mxu0 %v440
    %2084 = vmatprep.subr.bf16.mxu0 0
    %2085 = vmatpush1.bf16.msra.mxu0 %v443
    %2086 = vmatprep.subr.bf16.mxu0 0
    %2087 = vmatpush1.bf16.msra.mxu0 %v446
    %2088 = vmatprep.subr.bf16.mxu0 0
    %2089 = vmatpush1.bf16.msra.mxu0 %v449
    %2090 = vmatprep.subr.bf16.mxu0 0
    %2091 = vmatpush1.bf16.msra.mxu0 %v452
    %2092 = vmatprep.subr.bf16.mxu0 0
    %2093 = vmatpush1.bf16.msra.mxu0 %v455
    %2094 = vmatprep.subr.bf16.mxu0 0
    %2095 = vmatpush1.bf16.msra.mxu0 0
    %2096 = vmatprep.subr.bf16.mxu0 0
    %2097 = vmatpush1.bf16.msra.mxu0 0
    %2098 = vmatprep.subr.bf16.mxu0 0
    %2099 = vmatpush1.bf16.msra.mxu0 0
    %2100 = vmatprep.subr.bf16.mxu0 0
    %2101 = vmatpush1.bf16.msra.mxu0 0
    %2102 = vmatprep.subr.bf16.mxu0 0
    %2103 = vmatpush1.bf16.msra.mxu0 0
    %2104 = vmatprep.subr.bf16.mxu0 0
    %2105 = vmatpush1.bf16.msra.mxu0 0
    %2106 = vmatprep.subr.bf16.mxu0 0
    %2107 = vmatpush1.bf16.msra.mxu0 0
    %2108 = vmatprep.subr.bf16.mxu0 0
    %2109 = vmatpush1.bf16.msra.mxu0 0
    %2110 = vmatprep.mubr.bf16.mxu0 0
    %2111 = vmatmul.mubr.bf16.gmra.mrb[0].mxu0 %v2036
    %v2112 = vpop.f32.mrb[0].mxu0
    %v2113 = vadd.f32 %v207, %v2112
    %v2114 = vpop.f32.mrb[0].mxu0
    %v2115 = vpop.f32.mrb[0].mxu0
    %v2116 = vpop.f32.mrb[0].mxu0
    %2117 = vdwg.mxu0
    %v2120 = vrot.slane %v2072, 6
    %v2121 = vrot.slane %v2074, 6
    %v2124 = vadd.f32 %v307, %v2120
    %v2125 = vadd.f32 %v309, %v2121
    %v2126 = vxor.u32 %v2124, 2147483648
    %v2127 = vxor.u32 %v2125, 2147483648
    %v2128 = vmul.f32 %v2126, 1.442695
    %v2129 = vpow.pop %v2128
    %v2130 = vmul.f32 %v2127, 1.442695
    %v2131 = vpow.pop %v2130
    %v2132 = vadd.f32 %v2129, 1.0
    %v2133 = vadd.f32 %v2131, 1.0
    %v2134 = vrcp.pop %v2132
    %v2135 = vmul.f32 1.0, %v2134
    %v2136 = vrcp.pop %v2133
    %v2137 = vmul.f32 1.0, %v2136
    %v2139 = vrot.slane %v2113, 6
    %v2141 = vmul.f32 %v2135, %v2139
    %v2142 = vadd.f32 %v349, %v2141
    %v2143 = vtanh.pop %v2142
    %v2145 = vrot.slane %v2143, 2
    %v2147 = vsub.f32 %v1852, %v2145
    %v2149 = vrot.slane %v2147, 6
    %v2151 = vmul.f32 %v2137, %v2149
    %v2152 = vadd.f32 %v2143, %v2151
    %2153 = vmatprep.subr.bf16.mxu0 %v779
    %2154 = vmatpush1.bf16.msra.mxu0 %v778
    %2155 = vmatprep.subr.bf16.mxu0 %v782
    %2156 = vmatpush1.bf16.msra.mxu0 %v781
    %2157 = vmatprep.subr.bf16.mxu0 %v785
    %2158 = vmatpush1.bf16.msra.mxu0 %v784
    %2159 = vmatprep.subr.bf16.mxu0 %v788
    %2160 = vmatpush1.bf16.msra.mxu0 %v787
    %2161 = vmatprep.subr.bf16.mxu0 %v791
    %2162 = vmatpush1.bf16.msra.mxu0 %v790
    %2163 = vmatprep.subr.bf16.mxu0 %v794
    %2164 = vmatpush1.bf16.msra.mxu0 %v793
    %2165 = vmatprep.subr.bf16.mxu0 %v797
    %2166 = vmatpush1.bf16.msra.mxu0 %v796
    %2167 = vmatprep.subr.bf16.mxu0 %v800
    %2168 = vmatpush1.bf16.msra.mxu0 %v799
    %2169 = vmatprep.subr.bf16.mxu0 0
    %2170 = vmatpush1.bf16.msra.mxu0 0
    %2171 = vmatprep.subr.bf16.mxu0 0
    %2172 = vmatpush1.bf16.msra.mxu0 0
    %2173 = vmatprep.subr.bf16.mxu0 0
    %2174 = vmatpush1.bf16.msra.mxu0 0
    %2175 = vmatprep.subr.bf16.mxu0 0
    %2176 = vmatpush1.bf16.msra.mxu0 0
    %2177 = vmatprep.subr.bf16.mxu0 0
    %2178 = vmatpush1.bf16.msra.mxu0 0
    %2179 = vmatprep.subr.bf16.mxu0 0
    %2180 = vmatpush1.bf16.msra.mxu0 0
    %2181 = vmatprep.subr.bf16.mxu0 0
    %2182 = vmatpush1.bf16.msra.mxu0 0
    %2183 = vmatprep.subr.bf16.mxu0 0
    %2184 = vmatpush1.bf16.msra.mxu0 0
    %2185 = vmatprep.mubr.bf16.mxu0 0
    %2186 = vmatmul.mubr.bf16.gmra.mrb[0].mxu0 %v2036
    %v2187 = vpop.f32.mrb[0].mxu0
    %v2188 = vadd.f32 %v182, %v2187
    %v2189 = vpop.f32.mrb[0].mxu0
    %v2190 = vadd.f32 %v186, %v2189
    %v2191 = vpop.f32.mrb[0].mxu0
    %v2192 = vpop.f32.mrb[0].mxu0
    %2193 = vdwg.mxu0
    %2194 = vmatprep.subr.bf16.mxu0 0
    %2195 = vmatpush1.bf16.msra.mxu0 %v780
    %2196 = vmatprep.subr.bf16.mxu0 0
    %2197 = vmatpush1.bf16.msra.mxu0 %v783
    %2198 = vmatprep.subr.bf16.mxu0 0
    %2199 = vmatpush1.bf16.msra.mxu0 %v786
    %2200 = vmatprep.subr.bf16.mxu0 0
    %2201 = vmatpush1.bf16.msra.mxu0 %v789
    %2202 = vmatprep.subr.bf16.mxu0 0
    %2203 = vmatpush1.bf16.msra.mxu0 %v792
    %2204 = vmatprep.subr.bf16.mxu0 0
    %2205 = vmatpush1.bf16.msra.mxu0 %v795
    %2206 = vmatprep.subr.bf16.mxu0 0
    %2207 = vmatpush1.bf16.msra.mxu0 %v798
    %2208 = vmatprep.subr.bf16.mxu0 0
    %2209 = vmatpush1.bf16.msra.mxu0 %v801
    %2210 = vmatprep.subr.bf16.mxu0 0
    %2211 = vmatpush1.bf16.msra.mxu0 0
    %2212 = vmatprep.subr.bf16.mxu0 0
    %2213 = vmatpush1.bf16.msra.mxu0 0
    %2214 = vmatprep.subr.bf16.mxu0 0
    %2215 = vmatpush1.bf16.msra.mxu0 0
    %2216 = vmatprep.subr.bf16.mxu0 0
    %2217 = vmatpush1.bf16.msra.mxu0 0
    %2218 = vmatprep.subr.bf16.mxu0 0
    %2219 = vmatpush1.bf16.msra.mxu0 0
    %2220 = vmatprep.subr.bf16.mxu0 0
    %2221 = vmatpush1.bf16.msra.mxu0 0
    %2222 = vmatprep.subr.bf16.mxu0 0
    %2223 = vmatpush1.bf16.msra.mxu0 0
    %2224 = vmatprep.subr.bf16.mxu0 0
    %2225 = vmatpush1.bf16.msra.mxu0 0
    %2226 = vmatprep.mubr.bf16.mxu0 0
    %2227 = vmatmul.mubr.bf16.gmra.mrb[0].mxu0 %v2036
    %v2228 = vpop.f32.mrb[0].mxu0
    %v2229 = vadd.f32 %v190, %v2228
    %v2230 = vpop.f32.mrb[0].mxu0
    %v2231 = vpop.f32.mrb[0].mxu0
    %v2232 = vpop.f32.mrb[0].mxu0
    %2233 = vdwg.mxu0
    %v2234 = vpack.c.bf16 %v2035, %v2035
    %2235 = vmatprep.subr.bf16.mxu0 %v988
    %2236 = vmatpush1.bf16.msra.mxu0 %v987
    %2237 = vmatprep.subr.bf16.mxu0 %v991
    %2238 = vmatpush1.bf16.msra.mxu0 %v990
    %2239 = vmatprep.subr.bf16.mxu0 %v994
    %2240 = vmatpush1.bf16.msra.mxu0 %v993
    %2241 = vmatprep.subr.bf16.mxu0 %v997
    %2242 = vmatpush1.bf16.msra.mxu0 %v996
    %2243 = vmatprep.subr.bf16.mxu0 %v1000
    %2244 = vmatpush1.bf16.msra.mxu0 %v999
    %2245 = vmatprep.subr.bf16.mxu0 %v1003
    %2246 = vmatpush1.bf16.msra.mxu0 %v1002
    %2247 = vmatprep.subr.bf16.mxu0 %v1006
    %2248 = vmatpush1.bf16.msra.mxu0 %v1005
    %2249 = vmatprep.subr.bf16.mxu0 %v1009
    %2250 = vmatpush1.bf16.msra.mxu0 %v1008
    %2251 = vmatprep.subr.bf16.mxu0 0
    %2252 = vmatpush1.bf16.msra.mxu0 0
    %2253 = vmatprep.subr.bf16.mxu0 0
    %2254 = vmatpush1.bf16.msra.mxu0 0
    %2255 = vmatprep.subr.bf16.mxu0 0
    %2256 = vmatpush1.bf16.msra.mxu0 0
    %2257 = vmatprep.subr.bf16.mxu0 0
    %2258 = vmatpush1.bf16.msra.mxu0 0
    %2259 = vmatprep.subr.bf16.mxu0 0
    %2260 = vmatpush1.bf16.msra.mxu0 0
    %2261 = vmatprep.subr.bf16.mxu0 0
    %2262 = vmatpush1.bf16.msra.mxu0 0
    %2263 = vmatprep.subr.bf16.mxu0 0
    %2264 = vmatpush1.bf16.msra.mxu0 0
    %2265 = vmatprep.subr.bf16.mxu0 0
    %2266 = vmatpush1.bf16.msra.mxu0 0
    %2267 = vmatprep.mubr.bf16.mxu0 0
    %2268 = vmatmul.mubr.bf16.gmra.mrb[0].mxu0 %v2234
    %v2269 = vpop.f32.mrb[0].mxu0
    %v2270 = vadd.f32 %v216, %v2269
    %v2271 = vpop.f32.mrb[0].mxu0
    %v2272 = vadd.f32 %v220, %v2271
    %v2273 = vpop.f32.mrb[0].mxu0
    %v2274 = vpop.f32.mrb[0].mxu0
    %2275 = vdwg.mxu0
    %2276 = vmatprep.subr.bf16.mxu0 0
    %2277 = vmatpush1.bf16.msra.mxu0 %v989
    %2278 = vmatprep.subr.bf16.mxu0 0
    %2279 = vmatpush1.bf16.msra.mxu0 %v992
    %2280 = vmatprep.subr.bf16.mxu0 0
    %2281 = vmatpush1.bf16.msra.mxu0 %v995
    %2282 = vmatprep.subr.bf16.mxu0 0
    %2283 = vmatpush1.bf16.msra.mxu0 %v998
    %2284 = vmatprep.subr.bf16.mxu0 0
    %2285 = vmatpush1.bf16.msra.mxu0 %v1001
    %2286 = vmatprep.subr.bf16.mxu0 0
    %2287 = vmatpush1.bf16.msra.mxu0 %v1004
    %2288 = vmatprep.subr.bf16.mxu0 0
    %2289 = vmatpush1.bf16.msra.mxu0 %v1007
    %2290 = vmatprep.subr.bf16.mxu0 0
    %2291 = vmatpush1.bf16.msra.mxu0 %v1010
    %2292 = vmatprep.subr.bf16.mxu0 0
    %2293 = vmatpush1.bf16.msra.mxu0 0
    %2294 = vmatprep.subr.bf16.mxu0 0
    %2295 = vmatpush1.bf16.msra.mxu0 0
    %2296 = vmatprep.subr.bf16.mxu0 0
    %2297 = vmatpush1.bf16.msra.mxu0 0
    %2298 = vmatprep.subr.bf16.mxu0 0
    %2299 = vmatpush1.bf16.msra.mxu0 0
    %2300 = vmatprep.subr.bf16.mxu0 0
    %2301 = vmatpush1.bf16.msra.mxu0 0
    %2302 = vmatprep.subr.bf16.mxu0 0
    %2303 = vmatpush1.bf16.msra.mxu0 0
    %2304 = vmatprep.subr.bf16.mxu0 0
    %2305 = vmatpush1.bf16.msra.mxu0 0
    %2306 = vmatprep.subr.bf16.mxu0 0
    %2307 = vmatpush1.bf16.msra.mxu0 0
    %2308 = vmatprep.mubr.bf16.mxu0 0
    %2309 = vmatmul.mubr.bf16.gmra.mrb[0].mxu0 %v2234
    %v2310 = vpop.f32.mrb[0].mxu0
    %v2311 = vadd.f32 %v224, %v2310
    %v2312 = vpop.f32.mrb[0].mxu0
    %v2313 = vpop.f32.mrb[0].mxu0
    %v2314 = vpop.f32.mrb[0].mxu0
    %2315 = vdwg.mxu0
    %v2316 = vadd.f32 %v2188, %v2270
    %v2317 = vadd.f32 %v2190, %v2272
    %v2318 = vxor.u32 %v2316, 2147483648
    %v2319 = vxor.u32 %v2317, 2147483648
    %v2320 = vmul.f32 %v2318, 1.442695
    %v2321 = vpow.pop %v2320
    %v2322 = vmul.f32 %v2319, 1.442695
    %v2323 = vpow.pop %v2322
    %v2324 = vadd.f32 %v2321, 1.0
    %v2325 = vadd.f32 %v2323, 1.0
    %v2326 = vrcp.pop %v2324
    %v2327 = vmul.f32 1.0, %v2326
    %v2328 = vrcp.pop %v2325
    %v2329 = vmul.f32 1.0, %v2328
    %v2330 = vmul.f32 %v2327, %v2311
    %v2331 = vadd.f32 %v2229, %v2330
    %v2332 = vtanh.pop %v2331
    %v2333 = vsub.f32 %v2035, %v2332
    %v2334 = vmul.f32 %v2329, %v2333
    %v2335 = vadd.f32 %v2332, %v2334
    %v2336 = vpack.c.bf16 %v2152, %v2152
    %v2338 = vrot.slane %v2336, 1
    %2340 = vmatprep.subr.bf16.mxu0 %v433
    %2341 = vmatpush1.bf16.msra.mxu0 %v432
    %2342 = vmatprep.subr.bf16.mxu0 %v436
    %2343 = vmatpush1.bf16.msra.mxu0 %v435
    %2344 = vmatprep.subr.bf16.mxu0 %v439
    %2345 = vmatpush1.bf16.msra.mxu0 %v438
    %2346 = vmatprep.subr.bf16.mxu0 %v442
    %2347 = vmatpush1.bf16.msra.mxu0 %v441
    %2348 = vmatprep.subr.bf16.mxu0 %v445
    %2349 = vmatpush1.bf16.msra.mxu0 %v444
    %2350 = vmatprep.subr.bf16.mxu0 %v448
    %2351 = vmatpush1.bf16.msra.mxu0 %v447
    %2352 = vmatprep.subr.bf16.mxu0 %v451
    %2353 = vmatpush1.bf16.msra.mxu0 %v450
    %2354 = vmatprep.subr.bf16.mxu0 %v454
    %2355 = vmatpush1.bf16.msra.mxu0 %v453
    %2356 = vmatprep.subr.bf16.mxu0 0
    %2357 = vmatpush1.bf16.msra.mxu0 0
    %2358 = vmatprep.subr.bf16.mxu0 0
    %2359 = vmatpush1.bf16.msra.mxu0 0
    %2360 = vmatprep.subr.bf16.mxu0 0
    %2361 = vmatpush1.bf16.msra.mxu0 0
    %2362 = vmatprep.subr.bf16.mxu0 0
    %2363 = vmatpush1.bf16.msra.mxu0 0
    %2364 = vmatprep.subr.bf16.mxu0 0
    %2365 = vmatpush1.bf16.msra.mxu0 0
    %2366 = vmatprep.subr.bf16.mxu0 0
    %2367 = vmatpush1.bf16.msra.mxu0 0
    %2368 = vmatprep.subr.bf16.mxu0 0
    %2369 = vmatpush1.bf16.msra.mxu0 0
    %2370 = vmatprep.subr.bf16.mxu0 0
    %2371 = vmatpush1.bf16.msra.mxu0 0
    %2372 = vmatprep.mubr.bf16.mxu0 0
    %2373 = vmatmul.mubr.bf16.gmra.mrb[0].mxu0 %v2338
    %v2374 = vpop.f32.mrb[0].mxu0
    %v2375 = vadd.f32 %v199, %v2374
    %v2376 = vpop.f32.mrb[0].mxu0
    %v2377 = vadd.f32 %v203, %v2376
    %v2378 = vpop.f32.mrb[0].mxu0
    %v2379 = vpop.f32.mrb[0].mxu0
    %2380 = vdwg.mxu0
    %2381 = vmatprep.subr.bf16.mxu0 0
    %2382 = vmatpush1.bf16.msra.mxu0 %v434
    %2383 = vmatprep.subr.bf16.mxu0 0
    %2384 = vmatpush1.bf16.msra.mxu0 %v437
    %2385 = vmatprep.subr.bf16.mxu0 0
    %2386 = vmatpush1.bf16.msra.mxu0 %v440
    %2387 = vmatprep.subr.bf16.mxu0 0
    %2388 = vmatpush1.bf16.msra.mxu0 %v443
    %2389 = vmatprep.subr.bf16.mxu0 0
    %2390 = vmatpush1.bf16.msra.mxu0 %v446
    %2391 = vmatprep.subr.bf16.mxu0 0
    %2392 = vmatpush1.bf16.msra.mxu0 %v449
    %2393 = vmatprep.subr.bf16.mxu0 0
    %2394 = vmatpush1.bf16.msra.mxu0 %v452
    %2395 = vmatprep.subr.bf16.mxu0 0
    %2396 = vmatpush1.bf16.msra.mxu0 %v455
    %2397 = vmatprep.subr.bf16.mxu0 0
    %2398 = vmatpush1.bf16.msra.mxu0 0
    %2399 = vmatprep.subr.bf16.mxu0 0
    %2400 = vmatpush1.bf16.msra.mxu0 0
    %2401 = vmatprep.subr.bf16.mxu0 0
    %2402 = vmatpush1.bf16.msra.mxu0 0
    %2403 = vmatprep.subr.bf16.mxu0 0
    %2404 = vmatpush1.bf16.msra.mxu0 0
    %2405 = vmatprep.subr.bf16.mxu0 0
    %2406 = vmatpush1.bf16.msra.mxu0 0
    %2407 = vmatprep.subr.bf16.mxu0 0
    %2408 = vmatpush1.bf16.msra.mxu0 0
    %2409 = vmatprep.subr.bf16.mxu0 0
    %2410 = vmatpush1.bf16.msra.mxu0 0
    %2411 = vmatprep.subr.bf16.mxu0 0
    %2412 = vmatpush1.bf16.msra.mxu0 0
    %2413 = vmatprep.mubr.bf16.mxu0 0
    %2414 = vmatmul.mubr.bf16.gmra.mrb[0].mxu0 %v2338
    %v2415 = vpop.f32.mrb[0].mxu0
    %v2416 = vadd.f32 %v207, %v2415
    %v2417 = vpop.f32.mrb[0].mxu0
    %v2418 = vpop.f32.mrb[0].mxu0
    %v2419 = vpop.f32.mrb[0].mxu0
    %2420 = vdwg.mxu0
    %v2423 = vrot.slane %v2375, 4
    %v2424 = vrot.slane %v2377, 4
    %v2427 = vadd.f32 %v307, %v2423
    %v2428 = vadd.f32 %v309, %v2424
    %v2429 = vxor.u32 %v2427, 2147483648
    %v2430 = vxor.u32 %v2428, 2147483648
    %v2431 = vmul.f32 %v2429, 1.442695
    %v2432 = vpow.pop %v2431
    %v2433 = vmul.f32 %v2430, 1.442695
    %v2434 = vpow.pop %v2433
    %v2435 = vadd.f32 %v2432, 1.0
    %v2436 = vadd.f32 %v2434, 1.0
    %v2437 = vrcp.pop %v2435
    %v2438 = vmul.f32 1.0, %v2437
    %v2439 = vrcp.pop %v2436
    %v2440 = vmul.f32 1.0, %v2439
    %v2442 = vrot.slane %v2416, 4
    %v2444 = vmul.f32 %v2438, %v2442
    %v2445 = vadd.f32 %v349, %v2444
    %v2446 = vtanh.pop %v2445
    %v2448 = vrot.slane %v2446, 2
    %v2450 = vsub.f32 %v2152, %v2448
    %v2452 = vrot.slane %v2450, 6
    %v2454 = vmul.f32 %v2440, %v2452
    %v2455 = vadd.f32 %v2446, %v2454
    %2456 = vmatprep.subr.bf16.mxu0 %v779
    %2457 = vmatpush1.bf16.msra.mxu0 %v778
    %2458 = vmatprep.subr.bf16.mxu0 %v782
    %2459 = vmatpush1.bf16.msra.mxu0 %v781
    %2460 = vmatprep.subr.bf16.mxu0 %v785
    %2461 = vmatpush1.bf16.msra.mxu0 %v784
    %2462 = vmatprep.subr.bf16.mxu0 %v788
    %2463 = vmatpush1.bf16.msra.mxu0 %v787
    %2464 = vmatprep.subr.bf16.mxu0 %v791
    %2465 = vmatpush1.bf16.msra.mxu0 %v790
    %2466 = vmatprep.subr.bf16.mxu0 %v794
    %2467 = vmatpush1.bf16.msra.mxu0 %v793
    %2468 = vmatprep.subr.bf16.mxu0 %v797
    %2469 = vmatpush1.bf16.msra.mxu0 %v796
    %2470 = vmatprep.subr.bf16.mxu0 %v800
    %2471 = vmatpush1.bf16.msra.mxu0 %v799
    %2472 = vmatprep.subr.bf16.mxu0 0
    %2473 = vmatpush1.bf16.msra.mxu0 0
    %2474 = vmatprep.subr.bf16.mxu0 0
    %2475 = vmatpush1.bf16.msra.mxu0 0
    %2476 = vmatprep.subr.bf16.mxu0 0
    %2477 = vmatpush1.bf16.msra.mxu0 0
    %2478 = vmatprep.subr.bf16.mxu0 0
    %2479 = vmatpush1.bf16.msra.mxu0 0
    %2480 = vmatprep.subr.bf16.mxu0 0
    %2481 = vmatpush1.bf16.msra.mxu0 0
    %2482 = vmatprep.subr.bf16.mxu0 0
    %2483 = vmatpush1.bf16.msra.mxu0 0
    %2484 = vmatprep.subr.bf16.mxu0 0
    %2485 = vmatpush1.bf16.msra.mxu0 0
    %2486 = vmatprep.subr.bf16.mxu0 0
    %2487 = vmatpush1.bf16.msra.mxu0 0
    %2488 = vmatprep.mubr.bf16.mxu0 0
    %2489 = vmatmul.mubr.bf16.gmra.mrb[0].mxu0 %v2338
    %v2490 = vpop.f32.mrb[0].mxu0
    %v2491 = vadd.f32 %v182, %v2490
    %v2492 = vpop.f32.mrb[0].mxu0
    %v2493 = vadd.f32 %v186, %v2492
    %v2494 = vpop.f32.mrb[0].mxu0
    %v2495 = vpop.f32.mrb[0].mxu0
    %2496 = vdwg.mxu0
    %2497 = vmatprep.subr.bf16.mxu0 0
    %2498 = vmatpush1.bf16.msra.mxu0 %v780
    %2499 = vmatprep.subr.bf16.mxu0 0
    %2500 = vmatpush1.bf16.msra.mxu0 %v783
    %2501 = vmatprep.subr.bf16.mxu0 0
    %2502 = vmatpush1.bf16.msra.mxu0 %v786
    %2503 = vmatprep.subr.bf16.mxu0 0
    %2504 = vmatpush1.bf16.msra.mxu0 %v789
    %2505 = vmatprep.subr.bf16.mxu0 0
    %2506 = vmatpush1.bf16.msra.mxu0 %v792
    %2507 = vmatprep.subr.bf16.mxu0 0
    %2508 = vmatpush1.bf16.msra.mxu0 %v795
    %2509 = vmatprep.subr.bf16.mxu0 0
    %2510 = vmatpush1.bf16.msra.mxu0 %v798
    %2511 = vmatprep.subr.bf16.mxu0 0
    %2512 = vmatpush1.bf16.msra.mxu0 %v801
    %2513 = vmatprep.subr.bf16.mxu0 0
    %2514 = vmatpush1.bf16.msra.mxu0 0
    %2515 = vmatprep.subr.bf16.mxu0 0
    %2516 = vmatpush1.bf16.msra.mxu0 0
    %2517 = vmatprep.subr.bf16.mxu0 0
    %2518 = vmatpush1.bf16.msra.mxu0 0
    %2519 = vmatprep.subr.bf16.mxu0 0
    %2520 = vmatpush1.bf16.msra.mxu0 0
    %2521 = vmatprep.subr.bf16.mxu0 0
    %2522 = vmatpush1.bf16.msra.mxu0 0
    %2523 = vmatprep.subr.bf16.mxu0 0
    %2524 = vmatpush1.bf16.msra.mxu0 0
    %2525 = vmatprep.subr.bf16.mxu0 0
    %2526 = vmatpush1.bf16.msra.mxu0 0
    %2527 = vmatprep.subr.bf16.mxu0 0
    %2528 = vmatpush1.bf16.msra.mxu0 0
    %2529 = vmatprep.mubr.bf16.mxu0 0
    %2530 = vmatmul.mubr.bf16.gmra.mrb[0].mxu0 %v2338
    %v2531 = vpop.f32.mrb[0].mxu0
    %v2532 = vadd.f32 %v190, %v2531
    %v2533 = vpop.f32.mrb[0].mxu0
    %v2534 = vpop.f32.mrb[0].mxu0
    %v2535 = vpop.f32.mrb[0].mxu0
    %2536 = vdwg.mxu0
    %v2537 = vpack.c.bf16 %v2335, %v2335
    %2538 = vmatprep.subr.bf16.mxu0 %v988
    %2539 = vmatpush1.bf16.msra.mxu0 %v987
    %2540 = vmatprep.subr.bf16.mxu0 %v991
    %2541 = vmatpush1.bf16.msra.mxu0 %v990
    %2542 = vmatprep.subr.bf16.mxu0 %v994
    %2543 = vmatpush1.bf16.msra.mxu0 %v993
    %2544 = vmatprep.subr.bf16.mxu0 %v997
    %2545 = vmatpush1.bf16.msra.mxu0 %v996
    %2546 = vmatprep.subr.bf16.mxu0 %v1000
    %2547 = vmatpush1.bf16.msra.mxu0 %v999
    %2548 = vmatprep.subr.bf16.mxu0 %v1003
    %2549 = vmatpush1.bf16.msra.mxu0 %v1002
    %2550 = vmatprep.subr.bf16.mxu0 %v1006
    %2551 = vmatpush1.bf16.msra.mxu0 %v1005
    %2552 = vmatprep.subr.bf16.mxu0 %v1009
    %2553 = vmatpush1.bf16.msra.mxu0 %v1008
    %2554 = vmatprep.subr.bf16.mxu0 0
    %2555 = vmatpush1.bf16.msra.mxu0 0
    %2556 = vmatprep.subr.bf16.mxu0 0
    %2557 = vmatpush1.bf16.msra.mxu0 0
    %2558 = vmatprep.subr.bf16.mxu0 0
    %2559 = vmatpush1.bf16.msra.mxu0 0
    %2560 = vmatprep.subr.bf16.mxu0 0
    %2561 = vmatpush1.bf16.msra.mxu0 0
    %2562 = vmatprep.subr.bf16.mxu0 0
    %2563 = vmatpush1.bf16.msra.mxu0 0
    %2564 = vmatprep.subr.bf16.mxu0 0
    %2565 = vmatpush1.bf16.msra.mxu0 0
    %2566 = vmatprep.subr.bf16.mxu0 0
    %2567 = vmatpush1.bf16.msra.mxu0 0
    %2568 = vmatprep.subr.bf16.mxu0 0
    %2569 = vmatpush1.bf16.msra.mxu0 0
    %2570 = vmatprep.mubr.bf16.mxu0 0
    %2571 = vmatmul.mubr.bf16.gmra.mrb[0].mxu0 %v2537
    %v2572 = vpop.f32.mrb[0].mxu0
    %v2573 = vadd.f32 %v216, %v2572
    %v2574 = vpop.f32.mrb[0].mxu0
    %v2575 = vadd.f32 %v220, %v2574
    %v2576 = vpop.f32.mrb[0].mxu0
    %v2577 = vpop.f32.mrb[0].mxu0
    %2578 = vdwg.mxu0
    %2579 = vmatprep.subr.bf16.mxu0 0
    %2580 = vmatpush1.bf16.msra.mxu0 %v989
    %2581 = vmatprep.subr.bf16.mxu0 0
    %2582 = vmatpush1.bf16.msra.mxu0 %v992
    %2583 = vmatprep.subr.bf16.mxu0 0
    %2584 = vmatpush1.bf16.msra.mxu0 %v995
    %2585 = vmatprep.subr.bf16.mxu0 0
    %2586 = vmatpush1.bf16.msra.mxu0 %v998
    %2587 = vmatprep.subr.bf16.mxu0 0
    %2588 = vmatpush1.bf16.msra.mxu0 %v1001
    %2589 = vmatprep.subr.bf16.mxu0 0
    %2590 = vmatpush1.bf16.msra.mxu0 %v1004
    %2591 = vmatprep.subr.bf16.mxu0 0
    %2592 = vmatpush1.bf16.msra.mxu0 %v1007
    %2593 = vmatprep.subr.bf16.mxu0 0
    %2594 = vmatpush1.bf16.msra.mxu0 %v1010
    %2595 = vmatprep.subr.bf16.mxu0 0
    %2596 = vmatpush1.bf16.msra.mxu0 0
    %2597 = vmatprep.subr.bf16.mxu0 0
    %2598 = vmatpush1.bf16.msra.mxu0 0
    %2599 = vmatprep.subr.bf16.mxu0 0
    %2600 = vmatpush1.bf16.msra.mxu0 0
    %2601 = vmatprep.subr.bf16.mxu0 0
    %2602 = vmatpush1.bf16.msra.mxu0 0
    %2603 = vmatprep.subr.bf16.mxu0 0
    %2604 = vmatpush1.bf16.msra.mxu0 0
    %2605 = vmatprep.subr.bf16.mxu0 0
    %2606 = vmatpush1.bf16.msra.mxu0 0
    %2607 = vmatprep.subr.bf16.mxu0 0
    %2608 = vmatpush1.bf16.msra.mxu0 0
    %2609 = vmatprep.subr.bf16.mxu0 0
    %2610 = vmatpush1.bf16.msra.mxu0 0
    %2611 = vmatprep.mubr.bf16.mxu0 0
    %2612 = vmatmul.mubr.bf16.gmra.mrb[0].mxu0 %v2537
    %v2613 = vpop.f32.mrb[0].mxu0
    %v2614 = vadd.f32 %v224, %v2613
    %v2615 = vpop.f32.mrb[0].mxu0
    %v2616 = vpop.f32.mrb[0].mxu0
    %v2617 = vpop.f32.mrb[0].mxu0
    %2618 = vdwg.mxu0
    %v2619 = vadd.f32 %v2491, %v2573
    %v2620 = vadd.f32 %v2493, %v2575
    %v2621 = vxor.u32 %v2619, 2147483648
    %v2622 = vxor.u32 %v2620, 2147483648
    %v2623 = vmul.f32 %v2621, 1.442695
    %v2624 = vpow.pop %v2623
    %v2625 = vmul.f32 %v2622, 1.442695
    %v2626 = vpow.pop %v2625
    %v2627 = vadd.f32 %v2624, 1.0
    %v2628 = vadd.f32 %v2626, 1.0
    %v2629 = vrcp.pop %v2627
    %v2630 = vmul.f32 1.0, %v2629
    %v2631 = vrcp.pop %v2628
    %v2632 = vmul.f32 1.0, %v2631
    %v2633 = vmul.f32 %v2630, %v2614
    %v2634 = vadd.f32 %v2532, %v2633
    %v2635 = vtanh.pop %v2634
    %v2636 = vsub.f32 %v2335, %v2635
    %v2637 = vmul.f32 %v2632, %v2636
    %v2638 = vadd.f32 %v2635, %v2637
    %v2639 = vpack.c.bf16 %v2455, %v2455
    %v2641 = vrot.slane %v2639, 2
    %2643 = vmatprep.subr.bf16.mxu0 %v433
    %2644 = vmatpush1.bf16.msra.mxu0 %v432
    %2645 = vmatprep.subr.bf16.mxu0 %v436
    %2646 = vmatpush1.bf16.msra.mxu0 %v435
    %2647 = vmatprep.subr.bf16.mxu0 %v439
    %2648 = vmatpush1.bf16.msra.mxu0 %v438
    %2649 = vmatprep.subr.bf16.mxu0 %v442
    %2650 = vmatpush1.bf16.msra.mxu0 %v441
    %2651 = vmatprep.subr.bf16.mxu0 %v445
    %2652 = vmatpush1.bf16.msra.mxu0 %v444
    %2653 = vmatprep.subr.bf16.mxu0 %v448
    %2654 = vmatpush1.bf16.msra.mxu0 %v447
    %2655 = vmatprep.subr.bf16.mxu0 %v451
    %2656 = vmatpush1.bf16.msra.mxu0 %v450
    %2657 = vmatprep.subr.bf16.mxu0 %v454
    %2658 = vmatpush1.bf16.msra.mxu0 %v453
    %2659 = vmatprep.subr.bf16.mxu0 0
    %2660 = vmatpush1.bf16.msra.mxu0 0
    %2661 = vmatprep.subr.bf16.mxu0 0
    %2662 = vmatpush1.bf16.msra.mxu0 0
    %2663 = vmatprep.subr.bf16.mxu0 0
    %2664 = vmatpush1.bf16.msra.mxu0 0
    %2665 = vmatprep.subr.bf16.mxu0 0
    %2666 = vmatpush1.bf16.msra.mxu0 0
    %2667 = vmatprep.subr.bf16.mxu0 0
    %2668 = vmatpush1.bf16.msra.mxu0 0
    %2669 = vmatprep.subr.bf16.mxu0 0
    %2670 = vmatpush1.bf16.msra.mxu0 0
    %2671 = vmatprep.subr.bf16.mxu0 0
    %2672 = vmatpush1.bf16.msra.mxu0 0
    %2673 = vmatprep.subr.bf16.mxu0 0
    %2674 = vmatpush1.bf16.msra.mxu0 0
    %2675 = vmatprep.mubr.bf16.mxu0 0
    %2676 = vmatmul.mubr.bf16.gmra.mrb[0].mxu0 %v2641
    %v2677 = vpop.f32.mrb[0].mxu0
    %v2678 = vadd.f32 %v199, %v2677
    %v2679 = vpop.f32.mrb[0].mxu0
    %v2680 = vadd.f32 %v203, %v2679
    %v2681 = vpop.f32.mrb[0].mxu0
    %v2682 = vpop.f32.mrb[0].mxu0
    %2683 = vdwg.mxu0
    %2684 = vmatprep.subr.bf16.mxu0 0
    %2685 = vmatpush1.bf16.msra.mxu0 %v434
    %2686 = vmatprep.subr.bf16.mxu0 0
    %2687 = vmatpush1.bf16.msra.mxu0 %v437
    %2688 = vmatprep.subr.bf16.mxu0 0
    %2689 = vmatpush1.bf16.msra.mxu0 %v440
    %2690 = vmatprep.subr.bf16.mxu0 0
    %2691 = vmatpush1.bf16.msra.mxu0 %v443
    %2692 = vmatprep.subr.bf16.mxu0 0
    %2693 = vmatpush1.bf16.msra.mxu0 %v446
    %2694 = vmatprep.subr.bf16.mxu0 0
    %2695 = vmatpush1.bf16.msra.mxu0 %v449
    %2696 = vmatprep.subr.bf16.mxu0 0
    %2697 = vmatpush1.bf16.msra.mxu0 %v452
    %2698 = vmatprep.subr.bf16.mxu0 0
    %2699 = vmatpush1.bf16.msra.mxu0 %v455
    %2700 = vmatprep.subr.bf16.mxu0 0
    %2701 = vmatpush1.bf16.msra.mxu0 0
    %2702 = vmatprep.subr.bf16.mxu0 0
    %2703 = vmatpush1.bf16.msra.mxu0 0
    %2704 = vmatprep.subr.bf16.mxu0 0
    %2705 = vmatpush1.bf16.msra.mxu0 0
    %2706 = vmatprep.subr.bf16.mxu0 0
    %2707 = vmatpush1.bf16.msra.mxu0 0
    %2708 = vmatprep.subr.bf16.mxu0 0
    %2709 = vmatpush1.bf16.msra.mxu0 0
    %2710 = vmatprep.subr.bf16.mxu0 0
    %2711 = vmatpush1.bf16.msra.mxu0 0
    %2712 = vmatprep.subr.bf16.mxu0 0
    %2713 = vmatpush1.bf16.msra.mxu0 0
    %2714 = vmatprep.subr.bf16.mxu0 0
    %2715 = vmatpush1.bf16.msra.mxu0 0
    %2716 = vmatprep.mubr.bf16.mxu0 0
    %2717 = vmatmul.mubr.bf16.gmra.mrb[0].mxu0 %v2641
    %v2718 = vpop.f32.mrb[0].mxu0
    %v2719 = vadd.f32 %v207, %v2718
    %v2720 = vpop.f32.mrb[0].mxu0
    %v2721 = vpop.f32.mrb[0].mxu0
    %v2722 = vpop.f32.mrb[0].mxu0
    %2723 = vdwg.mxu0
    %v2726 = vrot.slane %v2678, 2
    %v2727 = vrot.slane %v2680, 2
    %v2730 = vadd.f32 %v307, %v2726
    %v2731 = vadd.f32 %v309, %v2727
    %v2732 = vxor.u32 %v2730, 2147483648
    %v2733 = vxor.u32 %v2731, 2147483648
    %v2734 = vmul.f32 %v2732, 1.442695
    %v2735 = vpow.pop %v2734
    %v2736 = vmul.f32 %v2733, 1.442695
    %v2737 = vpow.pop %v2736
    %v2738 = vadd.f32 %v2735, 1.0
    %v2739 = vadd.f32 %v2737, 1.0
    %v2740 = vrcp.pop %v2738
    %v2741 = vmul.f32 1.0, %v2740
    %v2742 = vrcp.pop %v2739
    %v2743 = vmul.f32 1.0, %v2742
    %v2745 = vrot.slane %v2719, 2
    %v2747 = vmul.f32 %v2741, %v2745
    %v2748 = vadd.f32 %v349, %v2747
    %v2749 = vtanh.pop %v2748
    %v2751 = vrot.slane %v2749, 2
    %v2753 = vsub.f32 %v2455, %v2751
    %v2755 = vrot.slane %v2753, 6
    %v2757 = vmul.f32 %v2743, %v2755
    %v2758 = vadd.f32 %v2749, %v2757
    %2759 = vmatprep.subr.bf16.mxu0 %v779
    %2760 = vmatpush1.bf16.msra.mxu0 %v778
    %2761 = vmatprep.subr.bf16.mxu0 %v782
    %2762 = vmatpush1.bf16.msra.mxu0 %v781
    %2763 = vmatprep.subr.bf16.mxu0 %v785
    %2764 = vmatpush1.bf16.msra.mxu0 %v784
    %2765 = vmatprep.subr.bf16.mxu0 %v788
    %2766 = vmatpush1.bf16.msra.mxu0 %v787
    %2767 = vmatprep.subr.bf16.mxu0 %v791
    %2768 = vmatpush1.bf16.msra.mxu0 %v790
    %2769 = vmatprep.subr.bf16.mxu0 %v794
    %2770 = vmatpush1.bf16.msra.mxu0 %v793
    %2771 = vmatprep.subr.bf16.mxu0 %v797
    %2772 = vmatpush1.bf16.msra.mxu0 %v796
    %2773 = vmatprep.subr.bf16.mxu0 %v800
    %2774 = vmatpush1.bf16.msra.mxu0 %v799
    %2775 = vmatprep.subr.bf16.mxu0 0
    %2776 = vmatpush1.bf16.msra.mxu0 0
    %2777 = vmatprep.subr.bf16.mxu0 0
    %2778 = vmatpush1.bf16.msra.mxu0 0
    %2779 = vmatprep.subr.bf16.mxu0 0
    %2780 = vmatpush1.bf16.msra.mxu0 0
    %2781 = vmatprep.subr.bf16.mxu0 0
    %2782 = vmatpush1.bf16.msra.mxu0 0
    %2783 = vmatprep.subr.bf16.mxu0 0
    %2784 = vmatpush1.bf16.msra.mxu0 0
    %2785 = vmatprep.subr.bf16.mxu0 0
    %2786 = vmatpush1.bf16.msra.mxu0 0
    %2787 = vmatprep.subr.bf16.mxu0 0
    %2788 = vmatpush1.bf16.msra.mxu0 0
    %2789 = vmatprep.subr.bf16.mxu0 0
    %2790 = vmatpush1.bf16.msra.mxu0 0
    %2791 = vmatprep.mubr.bf16.mxu0 0
    %2792 = vmatmul.mubr.bf16.gmra.mrb[0].mxu0 %v2641
    %v2793 = vpop.f32.mrb[0].mxu0
    %v2794 = vadd.f32 %v182, %v2793
    %v2795 = vpop.f32.mrb[0].mxu0
    %v2796 = vadd.f32 %v186, %v2795
    %v2797 = vpop.f32.mrb[0].mxu0
    %v2798 = vpop.f32.mrb[0].mxu0
    %2799 = vdwg.mxu0
    %2800 = vmatprep.subr.bf16.mxu0 0
    %2801 = vmatpush1.bf16.msra.mxu0 %v780
    %2802 = vmatprep.subr.bf16.mxu0 0
    %2803 = vmatpush1.bf16.msra.mxu0 %v783
    %2804 = vmatprep.subr.bf16.mxu0 0
    %2805 = vmatpush1.bf16.msra.mxu0 %v786
    %2806 = vmatprep.subr.bf16.mxu0 0
    %2807 = vmatpush1.bf16.msra.mxu0 %v789
    %2808 = vmatprep.subr.bf16.mxu0 0
    %2809 = vmatpush1.bf16.msra.mxu0 %v792
    %2810 = vmatprep.subr.bf16.mxu0 0
    %2811 = vmatpush1.bf16.msra.mxu0 %v795
    %2812 = vmatprep.subr.bf16.mxu0 0
    %2813 = vmatpush1.bf16.msra.mxu0 %v798
    %2814 = vmatprep.subr.bf16.mxu0 0
    %2815 = vmatpush1.bf16.msra.mxu0 %v801
    %2816 = vmatprep.subr.bf16.mxu0 0
    %2817 = vmatpush1.bf16.msra.mxu0 0
    %2818 = vmatprep.subr.bf16.mxu0 0
    %2819 = vmatpush1.bf16.msra.mxu0 0
    %2820 = vmatprep.subr.bf16.mxu0 0
    %2821 = vmatpush1.bf16.msra.mxu0 0
    %2822 = vmatprep.subr.bf16.mxu0 0
    %2823 = vmatpush1.bf16.msra.mxu0 0
    %2824 = vmatprep.subr.bf16.mxu0 0
    %2825 = vmatpush1.bf16.msra.mxu0 0
    %2826 = vmatprep.subr.bf16.mxu0 0
    %2827 = vmatpush1.bf16.msra.mxu0 0
    %2828 = vmatprep.subr.bf16.mxu0 0
    %2829 = vmatpush1.bf16.msra.mxu0 0
    %2830 = vmatprep.subr.bf16.mxu0 0
    %2831 = vmatpush1.bf16.msra.mxu0 0
    %2832 = vmatprep.mubr.bf16.mxu0 0
    %2833 = vmatmul.mubr.bf16.gmra.mrb[0].mxu0 %v2641
    %v2834 = vpop.f32.mrb[0].mxu0
    %v2835 = vadd.f32 %v190, %v2834
    %v2836 = vpop.f32.mrb[0].mxu0
    %v2837 = vpop.f32.mrb[0].mxu0
    %v2838 = vpop.f32.mrb[0].mxu0
    %2839 = vdwg.mxu0
    %v2840 = vpack.c.bf16 %v2638, %v2638
    %2841 = vmatprep.subr.bf16.mxu0 %v988
    %2842 = vmatpush1.bf16.msra.mxu0 %v987
    %2843 = vmatprep.subr.bf16.mxu0 %v991
    %2844 = vmatpush1.bf16.msra.mxu0 %v990
    %2845 = vmatprep.subr.bf16.mxu0 %v994
    %2846 = vmatpush1.bf16.msra.mxu0 %v993
    %2847 = vmatprep.subr.bf16.mxu0 %v997
    %2848 = vmatpush1.bf16.msra.mxu0 %v996
    %2849 = vmatprep.subr.bf16.mxu0 %v1000
    %2850 = vmatpush1.bf16.msra.mxu0 %v999
    %2851 = vmatprep.subr.bf16.mxu0 %v1003
    %2852 = vmatpush1.bf16.msra.mxu0 %v1002
    %2853 = vmatprep.subr.bf16.mxu0 %v1006
    %2854 = vmatpush1.bf16.msra.mxu0 %v1005
    %2855 = vmatprep.subr.bf16.mxu0 %v1009
    %2856 = vmatpush1.bf16.msra.mxu0 %v1008
    %2857 = vmatprep.subr.bf16.mxu0 0
    %2858 = vmatpush1.bf16.msra.mxu0 0
    %2859 = vmatprep.subr.bf16.mxu0 0
    %2860 = vmatpush1.bf16.msra.mxu0 0
    %2861 = vmatprep.subr.bf16.mxu0 0
    %2862 = vmatpush1.bf16.msra.mxu0 0
    %2863 = vmatprep.subr.bf16.mxu0 0
    %2864 = vmatpush1.bf16.msra.mxu0 0
    %2865 = vmatprep.subr.bf16.mxu0 0
    %2866 = vmatpush1.bf16.msra.mxu0 0
    %2867 = vmatprep.subr.bf16.mxu0 0
    %2868 = vmatpush1.bf16.msra.mxu0 0
    %2869 = vmatprep.subr.bf16.mxu0 0
    %2870 = vmatpush1.bf16.msra.mxu0 0
    %2871 = vmatprep.subr.bf16.mxu0 0
    %2872 = vmatpush1.bf16.msra.mxu0 0
    %2873 = vmatprep.mubr.bf16.mxu0 0
    %2874 = vmatmul.mubr.bf16.gmra.mrb[0].mxu0 %v2840
    %v2875 = vpop.f32.mrb[0].mxu0
    %v2876 = vadd.f32 %v216, %v2875
    %v2877 = vpop.f32.mrb[0].mxu0
    %v2878 = vadd.f32 %v220, %v2877
    %v2879 = vpop.f32.mrb[0].mxu0
    %v2880 = vpop.f32.mrb[0].mxu0
    %2881 = vdwg.mxu0
    %2882 = vmatprep.subr.bf16.mxu0 0
    %2883 = vmatpush1.bf16.msra.mxu0 %v989
    %2884 = vmatprep.subr.bf16.mxu0 0
    %2885 = vmatpush1.bf16.msra.mxu0 %v992
    %2886 = vmatprep.subr.bf16.mxu0 0
    %2887 = vmatpush1.bf16.msra.mxu0 %v995
    %2888 = vmatprep.subr.bf16.mxu0 0
    %2889 = vmatpush1.bf16.msra.mxu0 %v998
    %2890 = vmatprep.subr.bf16.mxu0 0
    %2891 = vmatpush1.bf16.msra.mxu0 %v1001
    %2892 = vmatprep.subr.bf16.mxu0 0
    %2893 = vmatpush1.bf16.msra.mxu0 %v1004
    %2894 = vmatprep.subr.bf16.mxu0 0
    %2895 = vmatpush1.bf16.msra.mxu0 %v1007
    %2896 = vmatprep.subr.bf16.mxu0 0
    %2897 = vmatpush1.bf16.msra.mxu0 %v1010
    %2898 = vmatprep.subr.bf16.mxu0 0
    %2899 = vmatpush1.bf16.msra.mxu0 0
    %2900 = vmatprep.subr.bf16.mxu0 0
    %2901 = vmatpush1.bf16.msra.mxu0 0
    %2902 = vmatprep.subr.bf16.mxu0 0
    %2903 = vmatpush1.bf16.msra.mxu0 0
    %2904 = vmatprep.subr.bf16.mxu0 0
    %2905 = vmatpush1.bf16.msra.mxu0 0
    %2906 = vmatprep.subr.bf16.mxu0 0
    %2907 = vmatpush1.bf16.msra.mxu0 0
    %2908 = vmatprep.subr.bf16.mxu0 0
    %2909 = vmatpush1.bf16.msra.mxu0 0
    %2910 = vmatprep.subr.bf16.mxu0 0
    %2911 = vmatpush1.bf16.msra.mxu0 0
    %2912 = vmatprep.subr.bf16.mxu0 0
    %2913 = vmatpush1.bf16.msra.mxu0 0
    %2914 = vmatprep.mubr.bf16.mxu0 0
    %2915 = vmatmul.mubr.bf16.gmra.mrb[0].mxu0 %v2840
    %v2916 = vpop.f32.mrb[0].mxu0
    %v2917 = vadd.f32 %v224, %v2916
    %v2918 = vpop.f32.mrb[0].mxu0
    %v2919 = vpop.f32.mrb[0].mxu0
    %v2920 = vpop.f32.mrb[0].mxu0
    %2921 = vdwg.mxu0
    %v2922 = vadd.f32 %v2794, %v2876
    %v2923 = vadd.f32 %v2796, %v2878
    %v2924 = vxor.u32 %v2922, 2147483648
    %v2925 = vxor.u32 %v2923, 2147483648
    %v2926 = vmul.f32 %v2924, 1.442695
    %v2927 = vpow.pop %v2926
    %v2928 = vmul.f32 %v2925, 1.442695
    %v2929 = vpow.pop %v2928
    %v2930 = vadd.f32 %v2927, 1.0
    %v2931 = vadd.f32 %v2929, 1.0
    %v2932 = vrcp.pop %v2930
    %v2933 = vmul.f32 1.0, %v2932
    %v2934 = vrcp.pop %v2931
    %v2935 = vmul.f32 1.0, %v2934
    %v2936 = vmul.f32 %v2933, %v2917
    %v2937 = vadd.f32 %v2835, %v2936
    %v2938 = vtanh.pop %v2937
    %v2939 = vsub.f32 %v2638, %v2938
    %v2940 = vmul.f32 %v2935, %v2939
    %v2941 = vadd.f32 %v2938, %v2940
    %v2942 = vpack.c.bf16 %v2758, %v2758
    %v2944 = vrot.slane %v2942, 3
    %2946 = vmatprep.subr.bf16.mxu0 %v779
    %2947 = vmatpush1.bf16.msra.mxu0 %v778
    %2948 = vmatprep.subr.bf16.mxu0 %v782
    %2949 = vmatpush1.bf16.msra.mxu0 %v781
    %2950 = vmatprep.subr.bf16.mxu0 %v785
    %2951 = vmatpush1.bf16.msra.mxu0 %v784
    %2952 = vmatprep.subr.bf16.mxu0 %v788
    %2953 = vmatpush1.bf16.msra.mxu0 %v787
    %2954 = vmatprep.subr.bf16.mxu0 %v791
    %2955 = vmatpush1.bf16.msra.mxu0 %v790
    %2956 = vmatprep.subr.bf16.mxu0 %v794
    %2957 = vmatpush1.bf16.msra.mxu0 %v793
    %2958 = vmatprep.subr.bf16.mxu0 %v797
    %2959 = vmatpush1.bf16.msra.mxu0 %v796
    %2960 = vmatprep.subr.bf16.mxu0 %v800
    %2961 = vmatpush1.bf16.msra.mxu0 %v799
    %2962 = vmatprep.subr.bf16.mxu0 0
    %2963 = vmatpush1.bf16.msra.mxu0 0
    %2964 = vmatprep.subr.bf16.mxu0 0
    %2965 = vmatpush1.bf16.msra.mxu0 0
    %2966 = vmatprep.subr.bf16.mxu0 0
    %2967 = vmatpush1.bf16.msra.mxu0 0
    %2968 = vmatprep.subr.bf16.mxu0 0
    %2969 = vmatpush1.bf16.msra.mxu0 0
    %2970 = vmatprep.subr.bf16.mxu0 0
    %2971 = vmatpush1.bf16.msra.mxu0 0
    %2972 = vmatprep.subr.bf16.mxu0 0
    %2973 = vmatpush1.bf16.msra.mxu0 0
    %2974 = vmatprep.subr.bf16.mxu0 0
    %2975 = vmatpush1.bf16.msra.mxu0 0
    %2976 = vmatprep.subr.bf16.mxu0 0
    %2977 = vmatpush1.bf16.msra.mxu0 0
    %2978 = vmatprep.mubr.bf16.mxu0 0
    %2979 = vmatmul.mubr.bf16.gmra.mrb[0].mxu0 %v2944
    %v2980 = vpop.f32.mrb[0].mxu0
    %v2981 = vadd.f32 %v182, %v2980
    %v2982 = vpop.f32.mrb[0].mxu0
    %v2983 = vadd.f32 %v186, %v2982
    %v2984 = vpop.f32.mrb[0].mxu0
    %v2985 = vpop.f32.mrb[0].mxu0
    %2986 = vdwg.mxu0
    %2987 = vmatprep.subr.bf16.mxu0 0
    %2988 = vmatpush1.bf16.msra.mxu0 %v780
    %2989 = vmatprep.subr.bf16.mxu0 0
    %2990 = vmatpush1.bf16.msra.mxu0 %v783
    %2991 = vmatprep.subr.bf16.mxu0 0
    %2992 = vmatpush1.bf16.msra.mxu0 %v786
    %2993 = vmatprep.subr.bf16.mxu0 0
    %2994 = vmatpush1.bf16.msra.mxu0 %v789
    %2995 = vmatprep.subr.bf16.mxu0 0
    %2996 = vmatpush1.bf16.msra.mxu0 %v792
    %2997 = vmatprep.subr.bf16.mxu0 0
    %2998 = vmatpush1.bf16.msra.mxu0 %v795
    %2999 = vmatprep.subr.bf16.mxu0 0
    %3000 = vmatpush1.bf16.msra.mxu0 %v798
    %3001 = vmatprep.subr.bf16.mxu0 0
    %3002 = vmatpush1.bf16.msra.mxu0 %v801
    %3003 = vmatprep.subr.bf16.mxu0 0
    %3004 = vmatpush1.bf16.msra.mxu0 0
    %3005 = vmatprep.subr.bf16.mxu0 0
    %3006 = vmatpush1.bf16.msra.mxu0 0
    %3007 = vmatprep.subr.bf16.mxu0 0
    %3008 = vmatpush1.bf16.msra.mxu0 0
    %3009 = vmatprep.subr.bf16.mxu0 0
    %3010 = vmatpush1.bf16.msra.mxu0 0
    %3011 = vmatprep.subr.bf16.mxu0 0
    %3012 = vmatpush1.bf16.msra.mxu0 0
    %3013 = vmatprep.subr.bf16.mxu0 0
    %3014 = vmatpush1.bf16.msra.mxu0 0
    %3015 = vmatprep.subr.bf16.mxu0 0
    %3016 = vmatpush1.bf16.msra.mxu0 0
    %3017 = vmatprep.subr.bf16.mxu0 0
    %3018 = vmatpush1.bf16.msra.mxu0 0
    %3019 = vmatprep.mubr.bf16.mxu0 0
    %3020 = vmatmul.mubr.bf16.gmra.mrb[0].mxu0 %v2944
    %v3021 = vpop.f32.mrb[0].mxu0
    %v3022 = vadd.f32 %v190, %v3021
    %v3023 = vpop.f32.mrb[0].mxu0
    %v3024 = vpop.f32.mrb[0].mxu0
    %v3025 = vpop.f32.mrb[0].mxu0
    %3026 = vdwg.mxu0
    %v3027 = vpack.c.bf16 %v2941, %v2941
    %3028 = vmatprep.subr.bf16.mxu0 %v988
    %3029 = vmatpush1.bf16.msra.mxu0 %v987
    %3030 = vmatprep.subr.bf16.mxu0 %v991
    %3031 = vmatpush1.bf16.msra.mxu0 %v990
    %3032 = vmatprep.subr.bf16.mxu0 %v994
    %3033 = vmatpush1.bf16.msra.mxu0 %v993
    %3034 = vmatprep.subr.bf16.mxu0 %v997
    %3035 = vmatpush1.bf16.msra.mxu0 %v996
    %3036 = vmatprep.subr.bf16.mxu0 %v1000
    %3037 = vmatpush1.bf16.msra.mxu0 %v999
    %3038 = vmatprep.subr.bf16.mxu0 %v1003
    %3039 = vmatpush1.bf16.msra.mxu0 %v1002
    %3040 = vmatprep.subr.bf16.mxu0 %v1006
    %3041 = vmatpush1.bf16.msra.mxu0 %v1005
    %3042 = vmatprep.subr.bf16.mxu0 %v1009
    %3043 = vmatpush1.bf16.msra.mxu0 %v1008
    %3044 = vmatprep.subr.bf16.mxu0 0
    %3045 = vmatpush1.bf16.msra.mxu0 0
    %3046 = vmatprep.subr.bf16.mxu0 0
    %3047 = vmatpush1.bf16.msra.mxu0 0
    %3048 = vmatprep.subr.bf16.mxu0 0
    %3049 = vmatpush1.bf16.msra.mxu0 0
    %3050 = vmatprep.subr.bf16.mxu0 0
    %3051 = vmatpush1.bf16.msra.mxu0 0
    %3052 = vmatprep.subr.bf16.mxu0 0
    %3053 = vmatpush1.bf16.msra.mxu0 0
    %3054 = vmatprep.subr.bf16.mxu0 0
    %3055 = vmatpush1.bf16.msra.mxu0 0
    %3056 = vmatprep.subr.bf16.mxu0 0
    %3057 = vmatpush1.bf16.msra.mxu0 0
    %3058 = vmatprep.subr.bf16.mxu0 0
    %3059 = vmatpush1.bf16.msra.mxu0 0
    %3060 = vmatprep.mubr.bf16.mxu0 0
    %3061 = vmatmul.mubr.bf16.gmra.mrb[0].mxu0 %v3027
    %v3062 = vpop.f32.mrb[0].mxu0
    %v3063 = vadd.f32 %v216, %v3062
    %v3064 = vpop.f32.mrb[0].mxu0
    %v3065 = vadd.f32 %v220, %v3064
    %v3066 = vpop.f32.mrb[0].mxu0
    %v3067 = vpop.f32.mrb[0].mxu0
    %3068 = vdwg.mxu0
    %3069 = vmatprep.subr.bf16.mxu0 0
    %3070 = vmatpush1.bf16.msra.mxu0 %v989
    %3071 = vmatprep.subr.bf16.mxu0 0
    %3072 = vmatpush1.bf16.msra.mxu0 %v992
    %3073 = vmatprep.subr.bf16.mxu0 0
    %3074 = vmatpush1.bf16.msra.mxu0 %v995
    %3075 = vmatprep.subr.bf16.mxu0 0
    %3076 = vmatpush1.bf16.msra.mxu0 %v998
    %3077 = vmatprep.subr.bf16.mxu0 0
    %3078 = vmatpush1.bf16.msra.mxu0 %v1001
    %3079 = vmatprep.subr.bf16.mxu0 0
    %3080 = vmatpush1.bf16.msra.mxu0 %v1004
    %3081 = vmatprep.subr.bf16.mxu0 0
    %3082 = vmatpush1.bf16.msra.mxu0 %v1007
    %3083 = vmatprep.subr.bf16.mxu0 0
    %3084 = vmatpush1.bf16.msra.mxu0 %v1010
    %3085 = vmatprep.subr.bf16.mxu0 0
    %3086 = vmatpush1.bf16.msra.mxu0 0
    %3087 = vmatprep.subr.bf16.mxu0 0
    %3088 = vmatpush1.bf16.msra.mxu0 0
    %3089 = vmatprep.subr.bf16.mxu0 0
    %3090 = vmatpush1.bf16.msra.mxu0 0
    %3091 = vmatprep.subr.bf16.mxu0 0
    %3092 = vmatpush1.bf16.msra.mxu0 0
    %3093 = vmatprep.subr.bf16.mxu0 0
    %3094 = vmatpush1.bf16.msra.mxu0 0
    %3095 = vmatprep.subr.bf16.mxu0 0
    %3096 = vmatpush1.bf16.msra.mxu0 0
    %3097 = vmatprep.subr.bf16.mxu0 0
    %3098 = vmatpush1.bf16.msra.mxu0 0
    %3099 = vmatprep.subr.bf16.mxu0 0
    %3100 = vmatpush1.bf16.msra.mxu0 0
    %3101 = vmatprep.mubr.bf16.mxu0 0
    %3102 = vmatmul.mubr.bf16.gmra.mrb[0].mxu0 %v3027
    %v3103 = vpop.f32.mrb[0].mxu0
    %v3104 = vadd.f32 %v224, %v3103
    %v3105 = vpop.f32.mrb[0].mxu0
    %v3106 = vpop.f32.mrb[0].mxu0
    %v3107 = vpop.f32.mrb[0].mxu0
    %3108 = vdwg.mxu0
    %v3109 = vadd.f32 %v2981, %v3063
    %v3110 = vadd.f32 %v2983, %v3065
    %v3111 = vxor.u32 %v3109, 2147483648
    %v3112 = vxor.u32 %v3110, 2147483648
    %v3113 = vmul.f32 %v3111, 1.442695
    %v3114 = vpow.pop %v3113
    %v3115 = vmul.f32 %v3112, 1.442695
    %v3116 = vpow.pop %v3115
    %v3117 = vadd.f32 %v3114, 1.0
    %v3118 = vadd.f32 %v3116, 1.0
    %v3119 = vrcp.pop %v3117
    %v3120 = vmul.f32 1.0, %v3119
    %v3121 = vrcp.pop %v3118
    %v3122 = vmul.f32 1.0, %v3121
    %v3123 = vmul.f32 %v3120, %v3104
    %v3124 = vadd.f32 %v3022, %v3123
    %v3125 = vtanh.pop %v3124
    %v3126 = vsub.f32 %v2941, %v3125
    %v3127 = vmul.f32 %v3122, %v3126
    %v3128 = vadd.f32 %v3125, %v3127
    %v3130 = vrot.slane %v1438, 6
    %v3133 = vrot.slane %v1741, 4
    %v3136 = vrot.slane %v2035, 2
    %v3139 = vrot.slane %v2638, 6
    %v3142 = vrot.slane %v2941, 4
    %v3145 = vrot.slane %v3128, 2
    %vm3147 = vcmask 1041408
    %v3148 = vsel %vm3147, %v1135, %v3130
    %vm3149 = vcmask 1043456
    %v3150 = vsel %vm3149, %v3148, %v3133
    %vm3151 = vcmask 1045504
    %v3152 = vsel %vm3151, %v3150, %v3136
    %v3153 = vsel %vm3147, %v2335, %v3139
    %v3154 = vsel %vm3149, %v3153, %v3142
    %v3155 = vsel %vm3151, %v3154, %v3145
    %3156 = vst [vmem:[%s9] sm:$0xff] %v3152
    %3157 = vst [vmem:[%s9 + $0x8] sm:$0xff] %v3155
    %v3159 = vrot.slane %v2758, 6
    %v3161 = vrot.slane %v3128, 6
    %v3163 = vsel %vm3147, %v3159, %v3161
    %3164 = vst [vmem:[#allocation8] sm:$0xf] %v3163
    // Predicated region
    $region50: #{_encoder_forward_jit.1} parent=1 // pred_check
      _
    $region51: #{_encoder_forward_jit.1} parent=1 // pred_check_branch
      %3166 = sbr.rel (0) target = $region53
    $region52: #{_encoder_forward_jit.1} parent=1 // pred_region
      _
    $region53: #{_encoder_forward_jit.1} parent=1 // pred_fallthru
      _
    // Predicated region
    $region54: #{_encoder_forward_jit.1} parent=1 // pred_check
      _
    $region55: #{_encoder_forward_jit.1} parent=1 // pred_check_branch
      %3168 = sbr.rel (0) target = $region57
    $region56: #{_encoder_forward_jit.1} parent=1 // pred_region
      %s3170 = ssub.s32 64, 64
      %3171 = vsyncadd [#allocation4], %s3170
      %s3173 = sshll.u32 [#allocation8], 4
      %s3174 = int_to_ptr.vmem [resolvable:$true] %s3173
      %3176 = dma.vmem_to_hbm [thread:$0]  %s3174, 64, %s10, [#allocation4]
    $region57: #{_encoder_forward_jit.1} parent=1 // pred_fallthru
      _
    // Predicated region
    $region58: #{_encoder_forward_jit.1} parent=1 // pred_check
      _
    $region59: #{_encoder_forward_jit.1} parent=1 // pred_check_branch
      %3178 = sbr.rel (0) target = $region61
    $region60: #{_encoder_forward_jit.1} parent=1 // pred_region
      _
    $region61: #{_encoder_forward_jit.1} parent=1 // pred_fallthru
      _
    // Predicated region
    $region62: #{_encoder_forward_jit.1} parent=1 // pred_check
      _
    $region63: #{_encoder_forward_jit.1} parent=1 // pred_check_branch
      %3180 = sbr.rel (0) target = $region65
    $region64: #{_encoder_forward_jit.1} parent=1 // pred_region
      %3181 = dma.done [#allocation4], 64
    $region65: #{_encoder_forward_jit.1} parent=1 // pred_fallthru
      _
    %3182 = vsyncpa [#allocation3], 1
    %3183 = vsyncpa [#allocation6], 1
    %3184 = vsyncpa [#allocation4], 1

</llo_original>
